<compile_context>
chip_gen: v5e
topology: v5e:2x2
jax: 0.10.0
libtpu: 0.0.40
codegen_flags: <defaults>
</compile_context>

<pallas_src>
import math

import numpy as np
import jax
import jax.numpy as jnp
from jax.experimental import pallas as pl
from jax.experimental.pallas import tpu as pltpu

# ---------------- hyper-parameters (small, consistent with __init__) ----------
VOCAB_LEN = 16
MAX_SEQ_LENGTH = 16
D_MODEL = 32
D_FF = 64
N_LAYERS = 2
HEADS = 4
D_HEAD = D_MODEL // HEADS
EPS = 1e-6
NEG_INF = -1e9


# ---------------- fused decoder kernel ----------------------------------------
def _decoder_kernel(thresh_ref,
                    x_ref, enc_ref, sbias_ref,
                    ln1g_ref, ln1b_ref, ln2g_ref, ln2b_ref, ln3g_ref, ln3b_ref,
                    sa_wqkv_ref, sa_bqkv_ref, sa_wo_ref, sa_bo_ref,
                    ca_wq_ref, ca_bq_ref, ca_wkv_ref, ca_bkv_ref,
                    ca_wo_ref, ca_bo_ref,
                    cw1_ref, cb1_ref, cw2_ref, cb2_ref,
                    ng_ref, nb_ref,
                    o_ref):
    S, D = x_ref.shape
    H = HEADS
    b = pl.program_id(0)

    # ---- hoisted loads: every parameter / activation read exactly once ------
    x = x_ref[...]                                    # (S, D)   decoder stream
    enc = enc_ref[...]                                # (Se, D)  encoder outputs

    ln1_g, ln1_b = ln1g_ref[...], ln1b_ref[...]
    ln2_g, ln2_b = ln2g_ref[...], ln2b_ref[...]
    ln3_g, ln3_b = ln3g_ref[...], ln3b_ref[...]
    w_qkv_h, b_qkv_h = sa_wqkv_ref[...], sa_bqkv_ref[...]   # (3H,D,dk),(3H,1,dk)
    w_so_h, b_so = sa_wo_ref[...], sa_bo_ref[...]           # (H,dk,D),(1,D)
    w_cq_h, b_cq_h = ca_wq_ref[...], ca_bq_ref[...]         # (H,D,dk),(H,1,dk)
    w_ckv_h, b_ckv_h = ca_wkv_ref[...], ca_bkv_ref[...]     # (2H,D,dk),(2H,1,dk)
    w_co_h, b_co = ca_wo_ref[...], ca_bo_ref[...]
    cw1_m1, cw1_c, cw1_p1 = cw1_ref[0], cw1_ref[1], cw1_ref[2]   # (D, Dff) each
    cw2_m1, cw2_c, cw2_p1 = cw2_ref[0], cw2_ref[1], cw2_ref[2]   # (Dff, D) each
    cb1, cb2 = cb1_ref[...], cb2_ref[...]
    n_g, n_b = ng_ref[...], nb_ref[...]

    # ---- masks generated in-kernel (no (B,S,S)/(B,S,Se) HBM mask arrays) ----
    thr = thresh_ref[b]                               # per-batch zero-row thresh
    qi = jax.lax.broadcasted_iota(jnp.int32, (S, S), 0)
    ki = jax.lax.broadcasted_iota(jnp.int32, (S, S), 1)
    t_bias = jnp.where((ki <= qi) & (qi < thr), 0.0, NEG_INF)[None]   # (1,S,S)
    s_bias = sbias_ref[...][None]                                     # (1,1,Se)

    # boundary-row multipliers for the k=3 "same" convolutions
    row = jax.lax.broadcasted_iota(jnp.int32, (S, 1), 0)
    not_first = (row > 0).astype(jnp.float32)         # zero row 0   (x[i-1] tap)
    not_last = (row < S - 1).astype(jnp.float32)      # zero row S-1 (x[i+1] tap)

    # TODO(synk): Norm(d_model) internals not provided; standard LayerNorm used.
    def norm(v, g, beta):
        mean = jnp.mean(v, axis=-1, keepdims=True)
        var = jnp.mean((v - mean) ** 2, axis=-1, keepdims=True)
        return (v - mean) * jax.lax.rsqrt(var + EPS) * g + beta

    def heads_proj(inp, w_h, b_h):
        # inp: (Sn, D); w_h: (G, D, dk) -> (G, Sn, dk) with heads on the
        # LEADING axis (one batched contraction; no lane slicing/reshapes).
        g = w_h.shape[0]
        ib = jnp.broadcast_to(inp[None], (g,) + inp.shape)
        return jnp.einsum("gsd,gdf->gsf", ib, w_h,
                          preferred_element_type=jnp.float32) + b_h

    def attention(q, k, v, bias, wo_h, bo):
        # q: (H,Sq,dk); k, v: (H,Sk,dk); bias broadcastable to (H,Sq,Sk).
        # 1/sqrt(dk) is folded into the Q weights; mask is an additive bias.
        s = jnp.einsum("hqf,hkf->hqk", q, k,
                       preferred_element_type=jnp.float32) + bias
        s = s - jnp.max(s, axis=-1, keepdims=True)
        p = jnp.exp(s)
        p = p * pl.reciprocal(jnp.sum(p, axis=-1, keepdims=True), approx=True)
        o = jnp.einsum("hqk,hkf->hqf", p, v, preferred_element_type=jnp.float32)
        # head concat folded into the output projection: sum_h o_h @ Wo_h
        o = jnp.einsum("hqf,hfd->hqd", o, wo_h,
                       preferred_element_type=jnp.float32)
        return jnp.sum(o, axis=0) + bo                # (Sq, D)

    def conv3(v, w_m1, w_c, w_p1, beta):
        # k=3 "same" conv = three matmuls over rolled copies (XLU sublane roll);
        # no im2col scratch, no zero-fill, no masked partial stores.
        v_m1 = pltpu.roll(v, shift=1, axis=0) * not_first       # v[i-1]
        v_p1 = pltpu.roll(v, shift=S - 1, axis=0) * not_last    # v[i+1]
        return (jnp.dot(v_m1, w_m1, preferred_element_type=jnp.float32)
                + jnp.dot(v, w_c, preferred_element_type=jnp.float32)
                + jnp.dot(v_p1, w_p1, preferred_element_type=jnp.float32)
                + beta)

    # Cross-attention K/V depend only on the encoder outputs and the (shared)
    # weights, so they are computed once and reused by every layer.
    kv_c = heads_proj(enc, w_ckv_h, b_ckv_h)          # (2H, Se, dk)
    ck, cv = kv_c[0:H], kv_c[H:2 * H]

    # get_clones deep-copies one layer => identical params; reuse for all layers.
    for _ in range(N_LAYERS):
        # ---- self-attention (pre-norm, fused head-batched QKV projection) ---
        x2 = norm(x, ln1_g, ln1_b)
        qkv = heads_proj(x2, w_qkv_h, b_qkv_h)        # (3H, S, dk)
        x = x + attention(qkv[0:H], qkv[H:2 * H], qkv[2 * H:3 * H],
                          t_bias, w_so_h, b_so)

        # ---- cross-attention over encoder outputs ---------------------------
        x2 = norm(x, ln2_g, ln2_b)
        q = heads_proj(x2, w_cq_h, b_cq_h)            # (H, S, dk)
        x = x + attention(q, ck, cv, s_bias, w_co_h, b_co)

        # ---- conv feed-forward: k=3 conv -> ReLU -> k=3 conv ----------------
        x2 = norm(x, ln3_g, ln3_b)
        h1 = jnp.maximum(conv3(x2, cw1_m1, cw1_c, cw1_p1, cb1), 0.0)
        x = x + conv3(h1, cw2_m1, cw2_c, cw2_p1, cb2)

    o_ref[...] = norm(x, n_g, n_b)


# ---------------- pallas_call wrapper ------------------------------------------
def fused_decoder(x, e_outputs, src_bias, thresh, params):
    B, S, D = x.shape
    lp = params["layer"]
    sa, ca = lp["self_attn"], lp["cross_attn"]

    tensor_inputs = [
        x, e_outputs, src_bias,
        lp["ln1_g"], lp["ln1_b"], lp["ln2_g"], lp["ln2_b"],
        lp["ln3_g"], lp["ln3_b"],
        sa["wqkv_h"], sa["bqkv_h"], sa["wo_h"], sa["bo"],
        ca["wq_h"], ca["bq_h"], ca["wkv_h"], ca["bkv_h"], ca["wo_h"], ca["bo"],
        lp["cw1"], lp["cb1"], lp["cw2"], lp["cb2"],
        params["norm_g"], params["norm_b"],
    ]

    def per_batch_spec(arr):
        nd = arr.ndim
        return pl.BlockSpec((pl.Squeezed(),) + tuple(arr.shape[1:]),
                            lambda b, thr, _nd=nd: (b,) + (0,) * (_nd - 1))

    def shared_spec(arr):
        nd = arr.ndim
        return pl.BlockSpec(tuple(arr.shape),
                            lambda b, thr, _nd=nd: (0,) * _nd)

    in_specs = ([per_batch_spec(x), per_batch_spec(e_outputs),
                 per_batch_spec(src_bias)]
                + [shared_spec(a) for a in tensor_inputs[3:]])

    return pl.pallas_call(
        _decoder_kernel,
        out_shape=jax.ShapeDtypeStruct((B, S, D), jnp.float32),
        grid_spec=pltpu.PrefetchScalarGridSpec(
            num_scalar_prefetch=1,          # thresh (B,) int32 -> SMEM
            grid=(B,),                      # one batch element per grid step
            in_specs=in_specs,
            out_specs=pl.BlockSpec((pl.Squeezed(), S, D),
                                   lambda b, thr: (b, 0, 0)),
        ),
        compiler_params=pltpu.CompilerParams(
            dimension_semantics=("parallel",)),   # v7x: one batch per TensorCore
    )(thresh, *tensor_inputs)


# ---------------- on-device mask threshold (replica of the PyTorch loops) ------
def compute_zero_row_threshold(trg):
    # Faithful jnp replica of create_combined_mask's quirk: rows >= thresh[b]
    # of batch b's lookahead mask are zeroed, where thresh is the running min
    # of padding starts over batches j <= b, considering only j <= B-2 and only
    # batches whose first padding position is > 0.  Fully traceable.
    B, S = trg.shape
    is_pad = (trg == 0)
    first_pad = jnp.argmax(is_pad.astype(jnp.int32), axis=1)
    pad_start = jnp.where(jnp.any(is_pad, axis=1), first_pad, 0)
    big = jnp.int32(S + 1)                              # "never zero" sentinel
    eff = jnp.where(pad_start > 0, pad_start, big)
    eff = jnp.where(jnp.arange(B) < B - 1, eff, big)    # loop runs j in [0, B-2]
    return jax.lax.cummin(eff).astype(jnp.int32)


# ---------------- parameter init (deterministic, synthetic) -------------------
def init_params(key):
    ks = jax.random.split(key, 8)

    def w(k, shape, scale=0.05):
        return jax.random.normal(k, shape, jnp.float32) * scale

    D, H, dk = D_MODEL, HEADS, D_HEAD

    emb = w(ks[0], (VOCAB_LEN, D), 0.1)
    emb = emb.at[0].set(0.0)                     # nn.Embedding padding_idx=0 row

    pe = np.zeros((MAX_SEQ_LENGTH - 1, D), np.float32)
    pos = np.arange(MAX_SEQ_LENGTH - 1, dtype=np.float32)[:, None]
    div = np.exp(np.arange(0, D, 2, dtype=np.float32) * (-math.log(10000.0) / D))
    pe[:, 0::2] = np.sin(pos * div)
    pe[:, 1::2] = np.cos(pos * div)

    ones_row = jnp.ones((1, D), jnp.float32)
    zeros_row = jnp.zeros((1, D), jnp.float32)
    att_scale = 1.0 / math.sqrt(dk)              # folded into the Q weights

    def to_heads(m):                             # (D, D) -> (H, D, dk)
        return jnp.transpose(m.reshape(D, H, dk), (1, 0, 2))

    def self_attn_params(k):
        kk = jax.random.split(k, 4)
        wq, wk_, wv, wo = (w(kk[i], (D, D)) for i in range(4))
        return {
            "wqkv_h": jnp.concatenate(
                [to_heads(wq) * att_scale, to_heads(wk_), to_heads(wv)], axis=0),
            "bqkv_h": jnp.zeros((3 * H, 1, dk), jnp.float32),
            "wo_h": wo.reshape(H, dk, D),        # Wo rows h*dk:(h+1)*dk per head
            "bo": zeros_row,
        }

    def cross_attn_params(k):
        kk = jax.random.split(k, 4)
        return {
            "wq_h": to_heads(w(kk[0], (D, D))) * att_scale,
            "bq_h": jnp.zeros((H, 1, dk), jnp.float32),
            "wkv_h": jnp.concatenate(
                [to_heads(w(kk[1], (D, D))), to_heads(w(kk[2], (D, D)))], axis=0),
            "bkv_h": jnp.zeros((2 * H, 1, dk), jnp.float32),
            "wo_h": w(kk[3], (D, D)).reshape(H, dk, D),
            "bo": zeros_row,
        }

    # get_clones deep-copies one layer instance => all N layers share identical
    # initial parameters; a single shared dict is reused for every layer.
    layer = {
        "ln1_g": ones_row, "ln1_b": zeros_row,
        "ln2_g": ones_row, "ln2_b": zeros_row,
        "ln3_g": ones_row, "ln3_b": zeros_row,
        "self_attn": self_attn_params(ks[1]),
        "cross_attn": cross_attn_params(ks[2]),
        # k=3 conv weights stored as (tap, in_ch, out_ch), taps [i-1, i, i+1].
        # NOTE: PyTorch Conv1d stores (out, in, k); transpose when importing
        # real checkpoint weights.
        "cw1": w(ks[3], (3, D, D_FF)),
        "cb1": jnp.zeros((1, D_FF), jnp.float32),
        "cw2": w(ks[4], (3, D_FF, D)),
        "cb2": zeros_row,
    }
    return {"embedding": emb,
            "pe_table": jnp.asarray(pe),
            "pe_alpha": jnp.float32(1.0),
            "y": w(ks[5], (MAX_SEQ_LENGTH - 1, D), 1.0),   # aux stream (unused)
            "layer": layer,
            "norm_g": ones_row, "norm_b": zeros_row}


# ---------------- forward pass (jitted) ----------------------------------------
@jax.jit
def decoder_forward(trg, e_outputs, src_mask, params):
    B, S = trg.shape
    # embedding gather + scaled positional encoding — plain JAX glue.
    x = jnp.take(params["embedding"], trg.astype(jnp.int32), axis=0)   # (B,S,D)
    # TODO(synk): ScaledPositionalEncoding source not provided; standard
    # x + alpha * sinusoid PE is used and the 'd' mode flag is ignored.
    x = x + params["pe_alpha"] * params["pe_table"][None, :S, :]
    thresh = compute_zero_row_threshold(trg)                           # (B,) i32
    Se = e_outputs.shape[1]
    # source mask -> tiny (B,1,Se) additive bias (target mask built in-kernel).
    src_bias = jnp.where(src_mask.reshape(B, 1, Se) != 0,
                         0.0, NEG_INF).astype(jnp.float32)
    # TODO(synk): AlternatingDecoderLayerConv source not provided; a pre-norm
    # (self-attn, cross-attn, k=3 conv FFN) layer is used and the auxiliary
    # `y = self.y.expand(B, -1, -1)` stream is kept as a parameter but unused.
    return fused_decoder(x, e_outputs, src_bias, thresh, params)


# ---------------- main ----------------------------------------------------------
if __name__ == "__main__":
    key = jax.random.PRNGKey(0)
    k_p, k_e = jax.random.split(key)
    params = init_params(k_p)

    B, S, S_ENC = 2, 8, 8
    # target tokens (0 is padding) — batch 1 has trailing padding
    trg = jnp.array([[3, 5, 7, 2, 9, 4, 6, 8],
                     [2, 4, 6, 0, 0, 0, 0, 0]], dtype=jnp.int32)
    e_outputs = jax.random.normal(k_e, (B, S_ENC, D_MODEL), jnp.float32)
    src_mask = jnp.ones((B, 1, 1, S_ENC), jnp.float32).at[1, 0, 0, -1].set(0.0)

    out = decoder_forward(trg, e_outputs, src_mask, params)
    jax.block_until_ready(out)
    assert out.shape == (B, S, D_MODEL)
    print("KERNEL_OK")
</pallas_src>

<mosaic_0001>
module attributes {stable_mosaic.version = 11 : i64} {
  func.func @_decoder_kernel(%arg0: i32, %arg1: memref<2xi32, #tpu.memory_space<smem>>, %arg2: memref<1x8x32xf32, #tpu.memory_space<vmem>>, %arg3: memref<1x8x32xf32, #tpu.memory_space<vmem>>, %arg4: memref<1x1x8xf32, #tpu.memory_space<vmem>>, %arg5: memref<1x32xf32, #tpu.memory_space<vmem>>, %arg6: memref<1x32xf32, #tpu.memory_space<vmem>>, %arg7: memref<1x32xf32, #tpu.memory_space<vmem>>, %arg8: memref<1x32xf32, #tpu.memory_space<vmem>>, %arg9: memref<1x32xf32, #tpu.memory_space<vmem>>, %arg10: memref<1x32xf32, #tpu.memory_space<vmem>>, %arg11: memref<12x32x8xf32, #tpu.memory_space<vmem>>, %arg12: memref<12x1x8xf32, #tpu.memory_space<vmem>>, %arg13: memref<4x8x32xf32, #tpu.memory_space<vmem>>, %arg14: memref<1x32xf32, #tpu.memory_space<vmem>>, %arg15: memref<4x32x8xf32, #tpu.memory_space<vmem>>, %arg16: memref<4x1x8xf32, #tpu.memory_space<vmem>>, %arg17: memref<8x32x8xf32, #tpu.memory_space<vmem>>, %arg18: memref<8x1x8xf32, #tpu.memory_space<vmem>>, %arg19: memref<4x8x32xf32, #tpu.memory_space<vmem>>, %arg20: memref<1x32xf32, #tpu.memory_space<vmem>>, %arg21: memref<3x32x64xf32, #tpu.memory_space<vmem>>, %arg22: memref<1x64xf32, #tpu.memory_space<vmem>>, %arg23: memref<3x64x32xf32, #tpu.memory_space<vmem>>, %arg24: memref<1x32xf32, #tpu.memory_space<vmem>>, %arg25: memref<1x32xf32, #tpu.memory_space<vmem>>, %arg26: memref<1x32xf32, #tpu.memory_space<vmem>>, %arg27: memref<1x8x32xf32, #tpu.memory_space<vmem>>) attributes {dimension_semantics = [#tpu.dimension_semantics<parallel>], iteration_bounds = array<i64: 2>, scalar_prefetch = 1 : i64, scratch_operands = 0 : i64, tpu.core_type = #tpu.core_type<tc>, window_params = [{transform_indices = @transform_0, window_bounds = array<i64: 1, 8, 32>}, {transform_indices = @transform_1, window_bounds = array<i64: 1, 8, 32>}, {transform_indices = @transform_2, window_bounds = array<i64: 1, 1, 8>}, {pipeline_mode = #tpu.pipeline_mode<synchronous>, transform_indices = @transform_3, window_bounds = array<i64: 1, 32>}, {pipeline_mode = #tpu.pipeline_mode<synchronous>, transform_indices = @transform_4, window_bounds = array<i64: 1, 32>}, {pipeline_mode = #tpu.pipeline_mode<synchronous>, transform_indices = @transform_5, window_bounds = array<i64: 1, 32>}, {pipeline_mode = #tpu.pipeline_mode<synchronous>, transform_indices = @transform_6, window_bounds = array<i64: 1, 32>}, {pipeline_mode = #tpu.pipeline_mode<synchronous>, transform_indices = @transform_7, window_bounds = array<i64: 1, 32>}, {pipeline_mode = #tpu.pipeline_mode<synchronous>, transform_indices = @transform_8, window_bounds = array<i64: 1, 32>}, {pipeline_mode = #tpu.pipeline_mode<synchronous>, transform_indices = @transform_9, window_bounds = array<i64: 12, 32, 8>}, {pipeline_mode = #tpu.pipeline_mode<synchronous>, transform_indices = @transform_10, window_bounds = array<i64: 12, 1, 8>}, {pipeline_mode = #tpu.pipeline_mode<synchronous>, transform_indices = @transform_11, window_bounds = array<i64: 4, 8, 32>}, {pipeline_mode = #tpu.pipeline_mode<synchronous>, transform_indices = @transform_12, window_bounds = array<i64: 1, 32>}, {pipeline_mode = #tpu.pipeline_mode<synchronous>, transform_indices = @transform_13, window_bounds = array<i64: 4, 32, 8>}, {pipeline_mode = #tpu.pipeline_mode<synchronous>, transform_indices = @transform_14, window_bounds = array<i64: 4, 1, 8>}, {pipeline_mode = #tpu.pipeline_mode<synchronous>, transform_indices = @transform_15, window_bounds = array<i64: 8, 32, 8>}, {pipeline_mode = #tpu.pipeline_mode<synchronous>, transform_indices = @transform_16, window_bounds = array<i64: 8, 1, 8>}, {pipeline_mode = #tpu.pipeline_mode<synchronous>, transform_indices = @transform_17, window_bounds = array<i64: 4, 8, 32>}, {pipeline_mode = #tpu.pipeline_mode<synchronous>, transform_indices = @transform_18, window_bounds = array<i64: 1, 32>}, {pipeline_mode = #tpu.pipeline_mode<synchronous>, transform_indices = @transform_19, window_bounds = array<i64: 3, 32, 64>}, {pipeline_mode = #tpu.pipeline_mode<synchronous>, transform_indices = @transform_20, window_bounds = array<i64: 1, 64>}, {pipeline_mode = #tpu.pipeline_mode<synchronous>, transform_indices = @transform_21, window_bounds = array<i64: 3, 64, 32>}, {pipeline_mode = #tpu.pipeline_mode<synchronous>, transform_indices = @transform_22, window_bounds = array<i64: 1, 32>}, {pipeline_mode = #tpu.pipeline_mode<synchronous>, transform_indices = @transform_23, window_bounds = array<i64: 1, 32>}, {pipeline_mode = #tpu.pipeline_mode<synchronous>, transform_indices = @transform_24, window_bounds = array<i64: 1, 32>}, {transform_indices = @transform_25, window_bounds = array<i64: 1, 8, 32>}]} {
    %c0 = arith.constant 0 : index
    %c0_0 = arith.constant 0 : index
    %c0_1 = arith.constant 0 : index
    %0 = vector.load %arg2[%c0, %c0_0, %c0_1] : memref<1x8x32xf32, #tpu.memory_space<vmem>>, vector<1x8x32xf32>
    %1 = vector.shape_cast %0 : vector<1x8x32xf32> to vector<8x32xf32>
    %c0_2 = arith.constant 0 : index
    %c0_3 = arith.constant 0 : index
    %c0_4 = arith.constant 0 : index
    %2 = vector.load %arg3[%c0_2, %c0_3, %c0_4] : memref<1x8x32xf32, #tpu.memory_space<vmem>>, vector<1x8x32xf32>
    %3 = vector.shape_cast %2 : vector<1x8x32xf32> to vector<8x32xf32>
    %c0_5 = arith.constant 0 : index
    %c0_6 = arith.constant 0 : index
    %4 = vector.load %arg5[%c0_5, %c0_6] : memref<1x32xf32, #tpu.memory_space<vmem>>, vector<1x32xf32>
    %c0_7 = arith.constant 0 : index
    %c0_8 = arith.constant 0 : index
    %5 = vector.load %arg6[%c0_7, %c0_8] : memref<1x32xf32, #tpu.memory_space<vmem>>, vector<1x32xf32>
    %c0_9 = arith.constant 0 : index
    %c0_10 = arith.constant 0 : index
    %6 = vector.load %arg7[%c0_9, %c0_10] : memref<1x32xf32, #tpu.memory_space<vmem>>, vector<1x32xf32>
    %c0_11 = arith.constant 0 : index
    %c0_12 = arith.constant 0 : index
    %7 = vector.load %arg8[%c0_11, %c0_12] : memref<1x32xf32, #tpu.memory_space<vmem>>, vector<1x32xf32>
    %c0_13 = arith.constant 0 : index
    %c0_14 = arith.constant 0 : index
    %8 = vector.load %arg9[%c0_13, %c0_14] : memref<1x32xf32, #tpu.memory_space<vmem>>, vector<1x32xf32>
    %c0_15 = arith.constant 0 : index
    %c0_16 = arith.constant 0 : index
    %9 = vector.load %arg10[%c0_15, %c0_16] : memref<1x32xf32, #tpu.memory_space<vmem>>, vector<1x32xf32>
    %c0_17 = arith.constant 0 : index
    %c0_18 = arith.constant 0 : index
    %c0_19 = arith.constant 0 : index
    %10 = vector.load %arg11[%c0_17, %c0_18, %c0_19] : memref<12x32x8xf32, #tpu.memory_space<vmem>>, vector<12x32x8xf32>
    %c0_20 = arith.constant 0 : index
    %c0_21 = arith.constant 0 : index
    %c0_22 = arith.constant 0 : index
    %11 = vector.load %arg12[%c0_20, %c0_21, %c0_22] : memref<12x1x8xf32, #tpu.memory_space<vmem>>, vector<12x1x8xf32>
    %c0_23 = arith.constant 0 : index
    %c0_24 = arith.constant 0 : index
    %c0_25 = arith.constant 0 : index
    %12 = vector.load %arg13[%c0_23, %c0_24, %c0_25] : memref<4x8x32xf32, #tpu.memory_space<vmem>>, vector<4x8x32xf32>
    %c0_26 = arith.constant 0 : index
    %c0_27 = arith.constant 0 : index
    %13 = vector.load %arg14[%c0_26, %c0_27] : memref<1x32xf32, #tpu.memory_space<vmem>>, vector<1x32xf32>
    %c0_28 = arith.constant 0 : index
    %c0_29 = arith.constant 0 : index
    %c0_30 = arith.constant 0 : index
    %14 = vector.load %arg15[%c0_28, %c0_29, %c0_30] : memref<4x32x8xf32, #tpu.memory_space<vmem>>, vector<4x32x8xf32>
    %c0_31 = arith.constant 0 : index
    %c0_32 = arith.constant 0 : index
    %c0_33 = arith.constant 0 : index
    %15 = vector.load %arg16[%c0_31, %c0_32, %c0_33] : memref<4x1x8xf32, #tpu.memory_space<vmem>>, vector<4x1x8xf32>
    %c0_34 = arith.constant 0 : index
    %c0_35 = arith.constant 0 : index
    %c0_36 = arith.constant 0 : index
    %16 = vector.load %arg17[%c0_34, %c0_35, %c0_36] : memref<8x32x8xf32, #tpu.memory_space<vmem>>, vector<8x32x8xf32>
    %c0_37 = arith.constant 0 : index
    %c0_38 = arith.constant 0 : index
    %c0_39 = arith.constant 0 : index
    %17 = vector.load %arg18[%c0_37, %c0_38, %c0_39] : memref<8x1x8xf32, #tpu.memory_space<vmem>>, vector<8x1x8xf32>
    %c0_40 = arith.constant 0 : index
    %c0_41 = arith.constant 0 : index
    %c0_42 = arith.constant 0 : index
    %18 = vector.load %arg19[%c0_40, %c0_41, %c0_42] : memref<4x8x32xf32, #tpu.memory_space<vmem>>, vector<4x8x32xf32>
    %c0_43 = arith.constant 0 : index
    %c0_44 = arith.constant 0 : index
    %19 = vector.load %arg20[%c0_43, %c0_44] : memref<1x32xf32, #tpu.memory_space<vmem>>, vector<1x32xf32>
    %c0_45 = arith.constant 0 : index
    %c0_46 = arith.constant 0 : index
    %c0_47 = arith.constant 0 : index
    %20 = vector.load %arg21[%c0_45, %c0_46, %c0_47] : memref<3x32x64xf32, #tpu.memory_space<vmem>>, vector<1x32x64xf32>
    %21 = vector.shape_cast %20 : vector<1x32x64xf32> to vector<32x64xf32>
    %c1 = arith.constant 1 : index
    %c0_48 = arith.constant 0 : index
    %c0_49 = arith.constant 0 : index
    %22 = vector.load %arg21[%c1, %c0_48, %c0_49] : memref<3x32x64xf32, #tpu.memory_space<vmem>>, vector<1x32x64xf32>
    %23 = vector.shape_cast %22 : vector<1x32x64xf32> to vector<32x64xf32>
    %c2 = arith.constant 2 : index
    %c0_50 = arith.constant 0 : index
    %c0_51 = arith.constant 0 : index
    %24 = vector.load %arg21[%c2, %c0_50, %c0_51] : memref<3x32x64xf32, #tpu.memory_space<vmem>>, vector<1x32x64xf32>
    %25 = vector.shape_cast %24 : vector<1x32x64xf32> to vector<32x64xf32>
    %c0_52 = arith.constant 0 : index
    %c0_53 = arith.constant 0 : index
    %c0_54 = arith.constant 0 : index
    %26 = vector.load %arg23[%c0_52, %c0_53, %c0_54] : memref<3x64x32xf32, #tpu.memory_space<vmem>>, vector<1x64x32xf32>
    %27 = vector.shape_cast %26 : vector<1x64x32xf32> to vector<64x32xf32>
    %c1_55 = arith.constant 1 : index
    %c0_56 = arith.constant 0 : index
    %c0_57 = arith.constant 0 : index
    %28 = vector.load %arg23[%c1_55, %c0_56, %c0_57] : memref<3x64x32xf32, #tpu.memory_space<vmem>>, vector<1x64x32xf32>
    %29 = vector.shape_cast %28 : vector<1x64x32xf32> to vector<64x32xf32>
    %c2_58 = arith.constant 2 : index
    %c0_59 = arith.constant 0 : index
    %c0_60 = arith.constant 0 : index
    %30 = vector.load %arg23[%c2_58, %c0_59, %c0_60] : memref<3x64x32xf32, #tpu.memory_space<vmem>>, vector<1x64x32xf32>
    %31 = vector.shape_cast %30 : vector<1x64x32xf32> to vector<64x32xf32>
    %c0_61 = arith.constant 0 : index
    %c0_62 = arith.constant 0 : index
    %32 = vector.load %arg22[%c0_61, %c0_62] : memref<1x64xf32, #tpu.memory_space<vmem>>, vector<1x64xf32>
    %c0_63 = arith.constant 0 : index
    %c0_64 = arith.constant 0 : index
    %33 = vector.load %arg24[%c0_63, %c0_64] : memref<1x32xf32, #tpu.memory_space<vmem>>, vector<1x32xf32>
    %c0_65 = arith.constant 0 : index
    %c0_66 = arith.constant 0 : index
    %34 = vector.load %arg25[%c0_65, %c0_66] : memref<1x32xf32, #tpu.memory_space<vmem>>, vector<1x32xf32>
    %c0_67 = arith.constant 0 : index
    %c0_68 = arith.constant 0 : index
    %35 = vector.load %arg26[%c0_67, %c0_68] : memref<1x32xf32, #tpu.memory_space<vmem>>, vector<1x32xf32>
    %36 = arith.index_cast %arg0 : i32 to index
    %37 = memref.load %arg1[%36] : memref<2xi32, #tpu.memory_space<smem>>
    %38 = tpu.iota {dimensions = array<i32: 0>} : vector<8x8xi32>
    %39 = tpu.iota {dimensions = array<i32: 1>} : vector<8x8xi32>
    %40 = arith.cmpi sle, %39, %38 : vector<8x8xi32>
    %41 = vector.broadcast %37 : i32 to vector<8x8xi32>
    %42 = arith.cmpi slt, %38, %41 : vector<8x8xi32>
    %43 = arith.andi %40, %42 : vector<8x8xi1>
    %cst = arith.constant 0.000000e+00 : f32
    %cst_69 = arith.constant -1.000000e+09 : f32
    %44 = vector.broadcast %cst : f32 to vector<8x8xf32>
    %45 = vector.broadcast %cst_69 : f32 to vector<8x8xf32>
    %46 = arith.select %43, %44, %45 : vector<8x8xi1>, vector<8x8xf32>
    %47 = vector.shape_cast %46 : vector<8x8xf32> to vector<1x8x8xf32>
    %c0_70 = arith.constant 0 : index
    %c0_71 = arith.constant 0 : index
    %c0_72 = arith.constant 0 : index
    %48 = vector.load %arg4[%c0_70, %c0_71, %c0_72] : memref<1x1x8xf32, #tpu.memory_space<vmem>>, vector<1x1x8xf32>
    %49 = vector.shape_cast %48 : vector<1x1x8xf32> to vector<1x8xf32>
    %50 = vector.shape_cast %49 : vector<1x8xf32> to vector<1x1x8xf32>
    %51 = tpu.iota {dimensions = array<i32: 0>} : vector<8x1xi32>
    %c0_i32 = arith.constant 0 : i32
    %52 = vector.broadcast %c0_i32 : i32 to vector<8x1xi32>
    %53 = arith.cmpi sgt, %51, %52 : vector<8x1xi32>
    %54 = arith.extui %53 : vector<8x1xi1> to vector<8x1xi32>
    %55 = arith.sitofp %54 : vector<8x1xi32> to vector<8x1xf32>
    %c7_i32 = arith.constant 7 : i32
    %56 = vector.broadcast %c7_i32 : i32 to vector<8x1xi32>
    %57 = arith.cmpi slt, %51, %56 : vector<8x1xi32>
    %58 = arith.extui %57 : vector<8x1xi1> to vector<8x1xi32>
    %59 = arith.sitofp %58 : vector<8x1xi32> to vector<8x1xf32>
    %60 = vector.shape_cast %3 : vector<8x32xf32> to vector<1x8x32xf32>
    %61 = vector.shape_cast %60 : vector<1x8x32xf32> to vector<1x8x32xf32>
    %62 = vector.broadcast %61 : vector<1x8x32xf32> to vector<8x8x32xf32>
    "tpu.trace_start"() <{level = 10 : i32, message = "gsd,gdf->gsf"}> : () -> ()
    %cst_73 = arith.constant dense<0.000000e+00> : vector<8x8x8xf32>
    %63 = tpu.matmul %62, %16, %cst_73 {dimension_numbers = #tpu.dot_dimension_numbers<[2], [1], [1], [2], [0, 0, 0, 1, 1, 2], [0], [0]>} : vector<8x8x32xf32>, vector<8x32x8xf32>, vector<8x8x8xf32> -> vector<8x8x8xf32>
    "tpu.trace_stop"() : () -> ()
    %64 = vector.broadcast %17 : vector<8x1x8xf32> to vector<8x8x8xf32>
    %65 = arith.addf %63, %64 : vector<8x8x8xf32>
    %66 = vector.extract_strided_slice %65 {offsets = [0, 0, 0], sizes = [4, 8, 8], strides = [1, 1, 1]} : vector<8x8x8xf32> to vector<4x8x8xf32>
    %67 = vector.extract_strided_slice %65 {offsets = [4, 0, 0], sizes = [4, 8, 8], strides = [1, 1, 1]} : vector<8x8x8xf32> to vector<4x8x8xf32>
    %cst_74 = arith.constant dense<0.000000e+00> : vector<8xf32>
    %68 = vector.multi_reduction <add>, %1, %cst_74 [1] : vector<8x32xf32> to vector<8xf32>
    %69 = vector.shape_cast %68 : vector<8xf32> to vector<8x1xf32>
    %cst_75 = arith.constant 3.200000e+01 : f32
    %70 = vector.broadcast %cst_75 : f32 to vector<8x1xf32>
    %71 = arith.divf %69, %70 : vector<8x1xf32>
    %72 = vector.broadcast %71 : vector<8x1xf32> to vector<8x32xf32>
    %73 = arith.subf %1, %72 : vector<8x32xf32>
    %74 = arith.mulf %73, %73 : vector<8x32xf32>
    %cst_76 = arith.constant dense<0.000000e+00> : vector<8xf32>
    %75 = vector.multi_reduction <add>, %74, %cst_76 [1] : vector<8x32xf32> to vector<8xf32>
    %76 = vector.shape_cast %75 : vector<8xf32> to vector<8x1xf32>
    %cst_77 = arith.constant 3.200000e+01 : f32
    %77 = vector.broadcast %cst_77 : f32 to vector<8x1xf32>
    %78 = arith.divf %76, %77 : vector<8x1xf32>
    %79 = vector.broadcast %71 : vector<8x1xf32> to vector<8x32xf32>
    %80 = arith.subf %1, %79 : vector<8x32xf32>
    %cst_78 = arith.constant 9.99999997E-7 : f32
    %81 = vector.broadcast %cst_78 : f32 to vector<8x1xf32>
    %82 = arith.addf %78, %81 : vector<8x1xf32>
    %83 = math.rsqrt %82 : vector<8x1xf32>
    %84 = vector.broadcast %83 : vector<8x1xf32> to vector<8x32xf32>
    %85 = arith.mulf %80, %84 : vector<8x32xf32>
    %86 = vector.broadcast %4 : vector<1x32xf32> to vector<8x32xf32>
    %87 = arith.mulf %85, %86 : vector<8x32xf32>
    %88 = vector.broadcast %5 : vector<1x32xf32> to vector<8x32xf32>
    %89 = arith.addf %87, %88 : vector<8x32xf32>
    %90 = vector.shape_cast %89 : vector<8x32xf32> to vector<1x8x32xf32>
    %91 = vector.shape_cast %90 : vector<1x8x32xf32> to vector<1x8x32xf32>
    %92 = vector.broadcast %91 : vector<1x8x32xf32> to vector<12x8x32xf32>
    "tpu.trace_start"() <{level = 10 : i32, message = "gsd,gdf->gsf"}> : () -> ()
    %cst_79 = arith.constant dense<0.000000e+00> : vector<12x8x8xf32>
    %93 = tpu.matmul %92, %10, %cst_79 {dimension_numbers = #tpu.dot_dimension_numbers<[2], [1], [1], [2], [0, 0, 0, 1, 1, 2], [0], [0]>} : vector<12x8x32xf32>, vector<12x32x8xf32>, vector<12x8x8xf32> -> vector<12x8x8xf32>
    "tpu.trace_stop"() : () -> ()
    %94 = vector.broadcast %11 : vector<12x1x8xf32> to vector<12x8x8xf32>
    %95 = arith.addf %93, %94 : vector<12x8x8xf32>
    %96 = vector.extract_strided_slice %95 {offsets = [0, 0, 0], sizes = [4, 8, 8], strides = [1, 1, 1]} : vector<12x8x8xf32> to vector<4x8x8xf32>
    %97 = vector.extract_strided_slice %95 {offsets = [4, 0, 0], sizes = [4, 8, 8], strides = [1, 1, 1]} : vector<12x8x8xf32> to vector<4x8x8xf32>
    %98 = vector.extract_strided_slice %95 {offsets = [8, 0, 0], sizes = [4, 8, 8], strides = [1, 1, 1]} : vector<12x8x8xf32> to vector<4x8x8xf32>
    "tpu.trace_start"() <{level = 10 : i32, message = "hqf,hkf->hqk"}> : () -> ()
    %cst_80 = arith.constant dense<0.000000e+00> : vector<4x8x8xf32>
    %99 = tpu.matmul %96, %97, %cst_80 {dimension_numbers = #tpu.dot_dimension_numbers<[2], [2], [1], [1], [0, 0, 0, 1, 1, 1], [0], [0]>} : vector<4x8x8xf32>, vector<4x8x8xf32>, vector<4x8x8xf32> -> vector<4x8x8xf32>
    "tpu.trace_stop"() : () -> ()
    %100 = vector.broadcast %47 : vector<1x8x8xf32> to vector<4x8x8xf32>
    %101 = arith.addf %99, %100 : vector<4x8x8xf32>
    %cst_81 = arith.constant dense<0xFF800000> : vector<4x8xf32>
    %102 = vector.multi_reduction <maximumf>, %101, %cst_81 [2] : vector<4x8x8xf32> to vector<4x8xf32>
    %103 = vector.shape_cast %102 : vector<4x8xf32> to vector<4x8x1xf32>
    %104 = vector.broadcast %103 : vector<4x8x1xf32> to vector<4x8x8xf32>
    %105 = arith.subf %101, %104 : vector<4x8x8xf32>
    %106 = math.exp %105 : vector<4x8x8xf32>
    %cst_82 = arith.constant dense<0.000000e+00> : vector<4x8xf32>
    %107 = vector.multi_reduction <add>, %106, %cst_82 [2] : vector<4x8x8xf32> to vector<4x8xf32>
    %108 = vector.shape_cast %107 : vector<4x8xf32> to vector<4x8x1xf32>
    %109 = tpu.reciprocal %108 {approx = true} : vector<4x8x1xf32> -> vector<4x8x1xf32>
    %110 = vector.broadcast %109 : vector<4x8x1xf32> to vector<4x8x8xf32>
    %111 = arith.mulf %106, %110 : vector<4x8x8xf32>
    "tpu.trace_start"() <{level = 10 : i32, message = "hqk,hkf->hqf"}> : () -> ()
    %cst_83 = arith.constant dense<0.000000e+00> : vector<4x8x8xf32>
    %112 = tpu.matmul %111, %98, %cst_83 {dimension_numbers = #tpu.dot_dimension_numbers<[2], [1], [1], [2], [0, 0, 0, 1, 1, 2], [0], [0]>} : vector<4x8x8xf32>, vector<4x8x8xf32>, vector<4x8x8xf32> -> vector<4x8x8xf32>
    "tpu.trace_stop"() : () -> ()
    "tpu.trace_start"() <{level = 10 : i32, message = "hqf,hfd->hqd"}> : () -> ()
    %cst_84 = arith.constant dense<0.000000e+00> : vector<4x8x32xf32>
    %113 = tpu.matmul %112, %12, %cst_84 {dimension_numbers = #tpu.dot_dimension_numbers<[2], [1], [1], [2], [0, 0, 0, 1, 1, 2], [0], [0]>} : vector<4x8x8xf32>, vector<4x8x32xf32>, vector<4x8x32xf32> -> vector<4x8x32xf32>
    "tpu.trace_stop"() : () -> ()
    %cst_85 = arith.constant dense<0.000000e+00> : vector<8x32xf32>
    %114 = vector.multi_reduction <add>, %113, %cst_85 [0] : vector<4x8x32xf32> to vector<8x32xf32>
    %115 = vector.broadcast %13 : vector<1x32xf32> to vector<8x32xf32>
    %116 = arith.addf %114, %115 : vector<8x32xf32>
    %117 = arith.addf %1, %116 : vector<8x32xf32>
    %cst_86 = arith.constant dense<0.000000e+00> : vector<8xf32>
    %118 = vector.multi_reduction <add>, %117, %cst_86 [1] : vector<8x32xf32> to vector<8xf32>
    %119 = vector.shape_cast %118 : vector<8xf32> to vector<8x1xf32>
    %cst_87 = arith.constant 3.200000e+01 : f32
    %120 = vector.broadcast %cst_87 : f32 to vector<8x1xf32>
    %121 = arith.divf %119, %120 : vector<8x1xf32>
    %122 = vector.broadcast %121 : vector<8x1xf32> to vector<8x32xf32>
    %123 = arith.subf %117, %122 : vector<8x32xf32>
    %124 = arith.mulf %123, %123 : vector<8x32xf32>
    %cst_88 = arith.constant dense<0.000000e+00> : vector<8xf32>
    %125 = vector.multi_reduction <add>, %124, %cst_88 [1] : vector<8x32xf32> to vector<8xf32>
    %126 = vector.shape_cast %125 : vector<8xf32> to vector<8x1xf32>
    %cst_89 = arith.constant 3.200000e+01 : f32
    %127 = vector.broadcast %cst_89 : f32 to vector<8x1xf32>
    %128 = arith.divf %126, %127 : vector<8x1xf32>
    %129 = vector.broadcast %121 : vector<8x1xf32> to vector<8x32xf32>
    %130 = arith.subf %117, %129 : vector<8x32xf32>
    %cst_90 = arith.constant 9.99999997E-7 : f32
    %131 = vector.broadcast %cst_90 : f32 to vector<8x1xf32>
    %132 = arith.addf %128, %131 : vector<8x1xf32>
    %133 = math.rsqrt %132 : vector<8x1xf32>
    %134 = vector.broadcast %133 : vector<8x1xf32> to vector<8x32xf32>
    %135 = arith.mulf %130, %134 : vector<8x32xf32>
    %136 = vector.broadcast %6 : vector<1x32xf32> to vector<8x32xf32>
    %137 = arith.mulf %135, %136 : vector<8x32xf32>
    %138 = vector.broadcast %7 : vector<1x32xf32> to vector<8x32xf32>
    %139 = arith.addf %137, %138 : vector<8x32xf32>
    %140 = vector.shape_cast %139 : vector<8x32xf32> to vector<1x8x32xf32>
    %141 = vector.shape_cast %140 : vector<1x8x32xf32> to vector<1x8x32xf32>
    %142 = vector.broadcast %141 : vector<1x8x32xf32> to vector<4x8x32xf32>
    "tpu.trace_start"() <{level = 10 : i32, message = "gsd,gdf->gsf"}> : () -> ()
    %cst_91 = arith.constant dense<0.000000e+00> : vector<4x8x8xf32>
    %143 = tpu.matmul %142, %14, %cst_91 {dimension_numbers = #tpu.dot_dimension_numbers<[2], [1], [1], [2], [0, 0, 0, 1, 1, 2], [0], [0]>} : vector<4x8x32xf32>, vector<4x32x8xf32>, vector<4x8x8xf32> -> vector<4x8x8xf32>
    "tpu.trace_stop"() : () -> ()
    %144 = vector.broadcast %15 : vector<4x1x8xf32> to vector<4x8x8xf32>
    %145 = arith.addf %143, %144 : vector<4x8x8xf32>
    "tpu.trace_start"() <{level = 10 : i32, message = "hqf,hkf->hqk"}> : () -> ()
    %cst_92 = arith.constant dense<0.000000e+00> : vector<4x8x8xf32>
    %146 = tpu.matmul %145, %66, %cst_92 {dimension_numbers = #tpu.dot_dimension_numbers<[2], [2], [1], [1], [0, 0, 0, 1, 1, 1], [0], [0]>} : vector<4x8x8xf32>, vector<4x8x8xf32>, vector<4x8x8xf32> -> vector<4x8x8xf32>
    "tpu.trace_stop"() : () -> ()
    %147 = vector.broadcast %50 : vector<1x1x8xf32> to vector<4x8x8xf32>
    %148 = arith.addf %146, %147 : vector<4x8x8xf32>
    %cst_93 = arith.constant dense<0xFF800000> : vector<4x8xf32>
    %149 = vector.multi_reduction <maximumf>, %148, %cst_93 [2] : vector<4x8x8xf32> to vector<4x8xf32>
    %150 = vector.shape_cast %149 : vector<4x8xf32> to vector<4x8x1xf32>
    %151 = vector.broadcast %150 : vector<4x8x1xf32> to vector<4x8x8xf32>
    %152 = arith.subf %148, %151 : vector<4x8x8xf32>
    %153 = math.exp %152 : vector<4x8x8xf32>
    %cst_94 = arith.constant dense<0.000000e+00> : vector<4x8xf32>
    %154 = vector.multi_reduction <add>, %153, %cst_94 [2] : vector<4x8x8xf32> to vector<4x8xf32>
    %155 = vector.shape_cast %154 : vector<4x8xf32> to vector<4x8x1xf32>
    %156 = tpu.reciprocal %155 {approx = true} : vector<4x8x1xf32> -> vector<4x8x1xf32>
    %157 = vector.broadcast %156 : vector<4x8x1xf32> to vector<4x8x8xf32>
    %158 = arith.mulf %153, %157 : vector<4x8x8xf32>
    "tpu.trace_start"() <{level = 10 : i32, message = "hqk,hkf->hqf"}> : () -> ()
    %cst_95 = arith.constant dense<0.000000e+00> : vector<4x8x8xf32>
    %159 = tpu.matmul %158, %67, %cst_95 {dimension_numbers = #tpu.dot_dimension_numbers<[2], [1], [1], [2], [0, 0, 0, 1, 1, 2], [0], [0]>} : vector<4x8x8xf32>, vector<4x8x8xf32>, vector<4x8x8xf32> -> vector<4x8x8xf32>
    "tpu.trace_stop"() : () -> ()
    "tpu.trace_start"() <{level = 10 : i32, message = "hqf,hfd->hqd"}> : () -> ()
    %cst_96 = arith.constant dense<0.000000e+00> : vector<4x8x32xf32>
    %160 = tpu.matmul %159, %18, %cst_96 {dimension_numbers = #tpu.dot_dimension_numbers<[2], [1], [1], [2], [0, 0, 0, 1, 1, 2], [0], [0]>} : vector<4x8x8xf32>, vector<4x8x32xf32>, vector<4x8x32xf32> -> vector<4x8x32xf32>
    "tpu.trace_stop"() : () -> ()
    %cst_97 = arith.constant dense<0.000000e+00> : vector<8x32xf32>
    %161 = vector.multi_reduction <add>, %160, %cst_97 [0] : vector<4x8x32xf32> to vector<8x32xf32>
    %162 = vector.broadcast %19 : vector<1x32xf32> to vector<8x32xf32>
    %163 = arith.addf %161, %162 : vector<8x32xf32>
    %164 = arith.addf %117, %163 : vector<8x32xf32>
    %cst_98 = arith.constant dense<0.000000e+00> : vector<8xf32>
    %165 = vector.multi_reduction <add>, %164, %cst_98 [1] : vector<8x32xf32> to vector<8xf32>
    %166 = vector.shape_cast %165 : vector<8xf32> to vector<8x1xf32>
    %cst_99 = arith.constant 3.200000e+01 : f32
    %167 = vector.broadcast %cst_99 : f32 to vector<8x1xf32>
    %168 = arith.divf %166, %167 : vector<8x1xf32>
    %169 = vector.broadcast %168 : vector<8x1xf32> to vector<8x32xf32>
    %170 = arith.subf %164, %169 : vector<8x32xf32>
    %171 = arith.mulf %170, %170 : vector<8x32xf32>
    %cst_100 = arith.constant dense<0.000000e+00> : vector<8xf32>
    %172 = vector.multi_reduction <add>, %171, %cst_100 [1] : vector<8x32xf32> to vector<8xf32>
    %173 = vector.shape_cast %172 : vector<8xf32> to vector<8x1xf32>
    %cst_101 = arith.constant 3.200000e+01 : f32
    %174 = vector.broadcast %cst_101 : f32 to vector<8x1xf32>
    %175 = arith.divf %173, %174 : vector<8x1xf32>
    %176 = vector.broadcast %168 : vector<8x1xf32> to vector<8x32xf32>
    %177 = arith.subf %164, %176 : vector<8x32xf32>
    %cst_102 = arith.constant 9.99999997E-7 : f32
    %178 = vector.broadcast %cst_102 : f32 to vector<8x1xf32>
    %179 = arith.addf %175, %178 : vector<8x1xf32>
    %180 = math.rsqrt %179 : vector<8x1xf32>
    %181 = vector.broadcast %180 : vector<8x1xf32> to vector<8x32xf32>
    %182 = arith.mulf %177, %181 : vector<8x32xf32>
    %183 = vector.broadcast %8 : vector<1x32xf32> to vector<8x32xf32>
    %184 = arith.mulf %182, %183 : vector<8x32xf32>
    %185 = vector.broadcast %9 : vector<1x32xf32> to vector<8x32xf32>
    %186 = arith.addf %184, %185 : vector<8x32xf32>
    %c1_i32 = arith.constant 1 : i32
    %187 = tpu.dynamic_rotate %186 by %c1_i32 dim 0 : vector<8x32xf32>, i32 -> vector<8x32xf32>
    %188 = vector.broadcast %55 : vector<8x1xf32> to vector<8x32xf32>
    %189 = arith.mulf %187, %188 : vector<8x32xf32>
    %c7_i32_103 = arith.constant 7 : i32
    %190 = tpu.dynamic_rotate %186 by %c7_i32_103 dim 0 : vector<8x32xf32>, i32 -> vector<8x32xf32>
    %191 = vector.broadcast %59 : vector<8x1xf32> to vector<8x32xf32>
    %192 = arith.mulf %190, %191 : vector<8x32xf32>
    %cst_104 = arith.constant dense<0.000000e+00> : vector<8x64xf32>
    %193 = tpu.matmul %189, %21, %cst_104 {dimension_numbers = #tpu.dot_dimension_numbers<[1], [0], [0], [1], [0, 0, 1, 1], [], []>} : vector<8x32xf32>, vector<32x64xf32>, vector<8x64xf32> -> vector<8x64xf32>
    %cst_105 = arith.constant dense<0.000000e+00> : vector<8x64xf32>
    %194 = tpu.matmul %186, %23, %cst_105 {dimension_numbers = #tpu.dot_dimension_numbers<[1], [0], [0], [1], [0, 0, 1, 1], [], []>} : vector<8x32xf32>, vector<32x64xf32>, vector<8x64xf32> -> vector<8x64xf32>
    %195 = arith.addf %193, %194 : vector<8x64xf32>
    %cst_106 = arith.constant dense<0.000000e+00> : vector<8x64xf32>
    %196 = tpu.matmul %192, %25, %cst_106 {dimension_numbers = #tpu.dot_dimension_numbers<[1], [0], [0], [1], [0, 0, 1, 1], [], []>} : vector<8x32xf32>, vector<32x64xf32>, vector<8x64xf32> -> vector<8x64xf32>
    %197 = arith.addf %195, %196 : vector<8x64xf32>
    %198 = vector.broadcast %32 : vector<1x64xf32> to vector<8x64xf32>
    %199 = arith.addf %197, %198 : vector<8x64xf32>
    %cst_107 = arith.constant 0.000000e+00 : f32
    %200 = vector.broadcast %cst_107 : f32 to vector<8x64xf32>
    %201 = arith.maximumf %199, %200 : vector<8x64xf32>
    %c1_i32_108 = arith.constant 1 : i32
    %202 = tpu.dynamic_rotate %201 by %c1_i32_108 dim 0 : vector<8x64xf32>, i32 -> vector<8x64xf32>
    %203 = vector.broadcast %55 : vector<8x1xf32> to vector<8x64xf32>
    %204 = arith.mulf %202, %203 : vector<8x64xf32>
    %c7_i32_109 = arith.constant 7 : i32
    %205 = tpu.dynamic_rotate %201 by %c7_i32_109 dim 0 : vector<8x64xf32>, i32 -> vector<8x64xf32>
    %206 = vector.broadcast %59 : vector<8x1xf32> to vector<8x64xf32>
    %207 = arith.mulf %205, %206 : vector<8x64xf32>
    %cst_110 = arith.constant dense<0.000000e+00> : vector<8x32xf32>
    %208 = tpu.matmul %204, %27, %cst_110 {dimension_numbers = #tpu.dot_dimension_numbers<[1], [0], [0], [1], [0, 0, 1, 1], [], []>} : vector<8x64xf32>, vector<64x32xf32>, vector<8x32xf32> -> vector<8x32xf32>
    %cst_111 = arith.constant dense<0.000000e+00> : vector<8x32xf32>
    %209 = tpu.matmul %201, %29, %cst_111 {dimension_numbers = #tpu.dot_dimension_numbers<[1], [0], [0], [1], [0, 0, 1, 1], [], []>} : vector<8x64xf32>, vector<64x32xf32>, vector<8x32xf32> -> vector<8x32xf32>
    %210 = arith.addf %208, %209 : vector<8x32xf32>
    %cst_112 = arith.constant dense<0.000000e+00> : vector<8x32xf32>
    %211 = tpu.matmul %207, %31, %cst_112 {dimension_numbers = #tpu.dot_dimension_numbers<[1], [0], [0], [1], [0, 0, 1, 1], [], []>} : vector<8x64xf32>, vector<64x32xf32>, vector<8x32xf32> -> vector<8x32xf32>
    %212 = arith.addf %210, %211 : vector<8x32xf32>
    %213 = vector.broadcast %33 : vector<1x32xf32> to vector<8x32xf32>
    %214 = arith.addf %212, %213 : vector<8x32xf32>
    %215 = arith.addf %164, %214 : vector<8x32xf32>
    %cst_113 = arith.constant dense<0.000000e+00> : vector<8xf32>
    %216 = vector.multi_reduction <add>, %215, %cst_113 [1] : vector<8x32xf32> to vector<8xf32>
    %217 = vector.shape_cast %216 : vector<8xf32> to vector<8x1xf32>
    %cst_114 = arith.constant 3.200000e+01 : f32
    %218 = vector.broadcast %cst_114 : f32 to vector<8x1xf32>
    %219 = arith.divf %217, %218 : vector<8x1xf32>
    %220 = vector.broadcast %219 : vector<8x1xf32> to vector<8x32xf32>
    %221 = arith.subf %215, %220 : vector<8x32xf32>
    %222 = arith.mulf %221, %221 : vector<8x32xf32>
    %cst_115 = arith.constant dense<0.000000e+00> : vector<8xf32>
    %223 = vector.multi_reduction <add>, %222, %cst_115 [1] : vector<8x32xf32> to vector<8xf32>
    %224 = vector.shape_cast %223 : vector<8xf32> to vector<8x1xf32>
    %cst_116 = arith.constant 3.200000e+01 : f32
    %225 = vector.broadcast %cst_116 : f32 to vector<8x1xf32>
    %226 = arith.divf %224, %225 : vector<8x1xf32>
    %227 = vector.broadcast %219 : vector<8x1xf32> to vector<8x32xf32>
    %228 = arith.subf %215, %227 : vector<8x32xf32>
    %cst_117 = arith.constant 9.99999997E-7 : f32
    %229 = vector.broadcast %cst_117 : f32 to vector<8x1xf32>
    %230 = arith.addf %226, %229 : vector<8x1xf32>
    %231 = math.rsqrt %230 : vector<8x1xf32>
    %232 = vector.broadcast %231 : vector<8x1xf32> to vector<8x32xf32>
    %233 = arith.mulf %228, %232 : vector<8x32xf32>
    %234 = vector.broadcast %4 : vector<1x32xf32> to vector<8x32xf32>
    %235 = arith.mulf %233, %234 : vector<8x32xf32>
    %236 = vector.broadcast %5 : vector<1x32xf32> to vector<8x32xf32>
    %237 = arith.addf %235, %236 : vector<8x32xf32>
    %238 = vector.shape_cast %237 : vector<8x32xf32> to vector<1x8x32xf32>
    %239 = vector.shape_cast %238 : vector<1x8x32xf32> to vector<1x8x32xf32>
    %240 = vector.broadcast %239 : vector<1x8x32xf32> to vector<12x8x32xf32>
    "tpu.trace_start"() <{level = 10 : i32, message = "gsd,gdf->gsf"}> : () -> ()
    %cst_118 = arith.constant dense<0.000000e+00> : vector<12x8x8xf32>
    %241 = tpu.matmul %240, %10, %cst_118 {dimension_numbers = #tpu.dot_dimension_numbers<[2], [1], [1], [2], [0, 0, 0, 1, 1, 2], [0], [0]>} : vector<12x8x32xf32>, vector<12x32x8xf32>, vector<12x8x8xf32> -> vector<12x8x8xf32>
    "tpu.trace_stop"() : () -> ()
    %242 = vector.broadcast %11 : vector<12x1x8xf32> to vector<12x8x8xf32>
    %243 = arith.addf %241, %242 : vector<12x8x8xf32>
    %244 = vector.extract_strided_slice %243 {offsets = [0, 0, 0], sizes = [4, 8, 8], strides = [1, 1, 1]} : vector<12x8x8xf32> to vector<4x8x8xf32>
    %245 = vector.extract_strided_slice %243 {offsets = [4, 0, 0], sizes = [4, 8, 8], strides = [1, 1, 1]} : vector<12x8x8xf32> to vector<4x8x8xf32>
    %246 = vector.extract_strided_slice %243 {offsets = [8, 0, 0], sizes = [4, 8, 8], strides = [1, 1, 1]} : vector<12x8x8xf32> to vector<4x8x8xf32>
    "tpu.trace_start"() <{level = 10 : i32, message = "hqf,hkf->hqk"}> : () -> ()
    %cst_119 = arith.constant dense<0.000000e+00> : vector<4x8x8xf32>
    %247 = tpu.matmul %244, %245, %cst_119 {dimension_numbers = #tpu.dot_dimension_numbers<[2], [2], [1], [1], [0, 0, 0, 1, 1, 1], [0], [0]>} : vector<4x8x8xf32>, vector<4x8x8xf32>, vector<4x8x8xf32> -> vector<4x8x8xf32>
    "tpu.trace_stop"() : () -> ()
    %248 = vector.broadcast %47 : vector<1x8x8xf32> to vector<4x8x8xf32>
    %249 = arith.addf %247, %248 : vector<4x8x8xf32>
    %cst_120 = arith.constant dense<0xFF800000> : vector<4x8xf32>
    %250 = vector.multi_reduction <maximumf>, %249, %cst_120 [2] : vector<4x8x8xf32> to vector<4x8xf32>
    %251 = vector.shape_cast %250 : vector<4x8xf32> to vector<4x8x1xf32>
    %252 = vector.broadcast %251 : vector<4x8x1xf32> to vector<4x8x8xf32>
    %253 = arith.subf %249, %252 : vector<4x8x8xf32>
    %254 = math.exp %253 : vector<4x8x8xf32>
    %cst_121 = arith.constant dense<0.000000e+00> : vector<4x8xf32>
    %255 = vector.multi_reduction <add>, %254, %cst_121 [2] : vector<4x8x8xf32> to vector<4x8xf32>
    %256 = vector.shape_cast %255 : vector<4x8xf32> to vector<4x8x1xf32>
    %257 = tpu.reciprocal %256 {approx = true} : vector<4x8x1xf32> -> vector<4x8x1xf32>
    %258 = vector.broadcast %257 : vector<4x8x1xf32> to vector<4x8x8xf32>
    %259 = arith.mulf %254, %258 : vector<4x8x8xf32>
    "tpu.trace_start"() <{level = 10 : i32, message = "hqk,hkf->hqf"}> : () -> ()
    %cst_122 = arith.constant dense<0.000000e+00> : vector<4x8x8xf32>
    %260 = tpu.matmul %259, %246, %cst_122 {dimension_numbers = #tpu.dot_dimension_numbers<[2], [1], [1], [2], [0, 0, 0, 1, 1, 2], [0], [0]>} : vector<4x8x8xf32>, vector<4x8x8xf32>, vector<4x8x8xf32> -> vector<4x8x8xf32>
    "tpu.trace_stop"() : () -> ()
    "tpu.trace_start"() <{level = 10 : i32, message = "hqf,hfd->hqd"}> : () -> ()
    %cst_123 = arith.constant dense<0.000000e+00> : vector<4x8x32xf32>
    %261 = tpu.matmul %260, %12, %cst_123 {dimension_numbers = #tpu.dot_dimension_numbers<[2], [1], [1], [2], [0, 0, 0, 1, 1, 2], [0], [0]>} : vector<4x8x8xf32>, vector<4x8x32xf32>, vector<4x8x32xf32> -> vector<4x8x32xf32>
    "tpu.trace_stop"() : () -> ()
    %cst_124 = arith.constant dense<0.000000e+00> : vector<8x32xf32>
    %262 = vector.multi_reduction <add>, %261, %cst_124 [0] : vector<4x8x32xf32> to vector<8x32xf32>
    %263 = vector.broadcast %13 : vector<1x32xf32> to vector<8x32xf32>
    %264 = arith.addf %262, %263 : vector<8x32xf32>
    %265 = arith.addf %215, %264 : vector<8x32xf32>
    %cst_125 = arith.constant dense<0.000000e+00> : vector<8xf32>
    %266 = vector.multi_reduction <add>, %265, %cst_125 [1] : vector<8x32xf32> to vector<8xf32>
    %267 = vector.shape_cast %266 : vector<8xf32> to vector<8x1xf32>
    %cst_126 = arith.constant 3.200000e+01 : f32
    %268 = vector.broadcast %cst_126 : f32 to vector<8x1xf32>
    %269 = arith.divf %267, %268 : vector<8x1xf32>
    %270 = vector.broadcast %269 : vector<8x1xf32> to vector<8x32xf32>
    %271 = arith.subf %265, %270 : vector<8x32xf32>
    %272 = arith.mulf %271, %271 : vector<8x32xf32>
    %cst_127 = arith.constant dense<0.000000e+00> : vector<8xf32>
    %273 = vector.multi_reduction <add>, %272, %cst_127 [1] : vector<8x32xf32> to vector<8xf32>
    %274 = vector.shape_cast %273 : vector<8xf32> to vector<8x1xf32>
    %cst_128 = arith.constant 3.200000e+01 : f32
    %275 = vector.broadcast %cst_128 : f32 to vector<8x1xf32>
    %276 = arith.divf %274, %275 : vector<8x1xf32>
    %277 = vector.broadcast %269 : vector<8x1xf32> to vector<8x32xf32>
    %278 = arith.subf %265, %277 : vector<8x32xf32>
    %cst_129 = arith.constant 9.99999997E-7 : f32
    %279 = vector.broadcast %cst_129 : f32 to vector<8x1xf32>
    %280 = arith.addf %276, %279 : vector<8x1xf32>
    %281 = math.rsqrt %280 : vector<8x1xf32>
    %282 = vector.broadcast %281 : vector<8x1xf32> to vector<8x32xf32>
    %283 = arith.mulf %278, %282 : vector<8x32xf32>
    %284 = vector.broadcast %6 : vector<1x32xf32> to vector<8x32xf32>
    %285 = arith.mulf %283, %284 : vector<8x32xf32>
    %286 = vector.broadcast %7 : vector<1x32xf32> to vector<8x32xf32>
    %287 = arith.addf %285, %286 : vector<8x32xf32>
    %288 = vector.shape_cast %287 : vector<8x32xf32> to vector<1x8x32xf32>
    %289 = vector.shape_cast %288 : vector<1x8x32xf32> to vector<1x8x32xf32>
    %290 = vector.broadcast %289 : vector<1x8x32xf32> to vector<4x8x32xf32>
    "tpu.trace_start"() <{level = 10 : i32, message = "gsd,gdf->gsf"}> : () -> ()
    %cst_130 = arith.constant dense<0.000000e+00> : vector<4x8x8xf32>
    %291 = tpu.matmul %290, %14, %cst_130 {dimension_numbers = #tpu.dot_dimension_numbers<[2], [1], [1], [2], [0, 0, 0, 1, 1, 2], [0], [0]>} : vector<4x8x32xf32>, vector<4x32x8xf32>, vector<4x8x8xf32> -> vector<4x8x8xf32>
    "tpu.trace_stop"() : () -> ()
    %292 = vector.broadcast %15 : vector<4x1x8xf32> to vector<4x8x8xf32>
    %293 = arith.addf %291, %292 : vector<4x8x8xf32>
    "tpu.trace_start"() <{level = 10 : i32, message = "hqf,hkf->hqk"}> : () -> ()
    %cst_131 = arith.constant dense<0.000000e+00> : vector<4x8x8xf32>
    %294 = tpu.matmul %293, %66, %cst_131 {dimension_numbers = #tpu.dot_dimension_numbers<[2], [2], [1], [1], [0, 0, 0, 1, 1, 1], [0], [0]>} : vector<4x8x8xf32>, vector<4x8x8xf32>, vector<4x8x8xf32> -> vector<4x8x8xf32>
    "tpu.trace_stop"() : () -> ()
    %295 = vector.broadcast %50 : vector<1x1x8xf32> to vector<4x8x8xf32>
    %296 = arith.addf %294, %295 : vector<4x8x8xf32>
    %cst_132 = arith.constant dense<0xFF800000> : vector<4x8xf32>
    %297 = vector.multi_reduction <maximumf>, %296, %cst_132 [2] : vector<4x8x8xf32> to vector<4x8xf32>
    %298 = vector.shape_cast %297 : vector<4x8xf32> to vector<4x8x1xf32>
    %299 = vector.broadcast %298 : vector<4x8x1xf32> to vector<4x8x8xf32>
    %300 = arith.subf %296, %299 : vector<4x8x8xf32>
    %301 = math.exp %300 : vector<4x8x8xf32>
    %cst_133 = arith.constant dense<0.000000e+00> : vector<4x8xf32>
    %302 = vector.multi_reduction <add>, %301, %cst_133 [2] : vector<4x8x8xf32> to vector<4x8xf32>
    %303 = vector.shape_cast %302 : vector<4x8xf32> to vector<4x8x1xf32>
    %304 = tpu.reciprocal %303 {approx = true} : vector<4x8x1xf32> -> vector<4x8x1xf32>
    %305 = vector.broadcast %304 : vector<4x8x1xf32> to vector<4x8x8xf32>
    %306 = arith.mulf %301, %305 : vector<4x8x8xf32>
    "tpu.trace_start"() <{level = 10 : i32, message = "hqk,hkf->hqf"}> : () -> ()
    %cst_134 = arith.constant dense<0.000000e+00> : vector<4x8x8xf32>
    %307 = tpu.matmul %306, %67, %cst_134 {dimension_numbers = #tpu.dot_dimension_numbers<[2], [1], [1], [2], [0, 0, 0, 1, 1, 2], [0], [0]>} : vector<4x8x8xf32>, vector<4x8x8xf32>, vector<4x8x8xf32> -> vector<4x8x8xf32>
    "tpu.trace_stop"() : () -> ()
    "tpu.trace_start"() <{level = 10 : i32, message = "hqf,hfd->hqd"}> : () -> ()
    %cst_135 = arith.constant dense<0.000000e+00> : vector<4x8x32xf32>
    %308 = tpu.matmul %307, %18, %cst_135 {dimension_numbers = #tpu.dot_dimension_numbers<[2], [1], [1], [2], [0, 0, 0, 1, 1, 2], [0], [0]>} : vector<4x8x8xf32>, vector<4x8x32xf32>, vector<4x8x32xf32> -> vector<4x8x32xf32>
    "tpu.trace_stop"() : () -> ()
    %cst_136 = arith.constant dense<0.000000e+00> : vector<8x32xf32>
    %309 = vector.multi_reduction <add>, %308, %cst_136 [0] : vector<4x8x32xf32> to vector<8x32xf32>
    %310 = vector.broadcast %19 : vector<1x32xf32> to vector<8x32xf32>
    %311 = arith.addf %309, %310 : vector<8x32xf32>
    %312 = arith.addf %265, %311 : vector<8x32xf32>
    %cst_137 = arith.constant dense<0.000000e+00> : vector<8xf32>
    %313 = vector.multi_reduction <add>, %312, %cst_137 [1] : vector<8x32xf32> to vector<8xf32>
    %314 = vector.shape_cast %313 : vector<8xf32> to vector<8x1xf32>
    %cst_138 = arith.constant 3.200000e+01 : f32
    %315 = vector.broadcast %cst_138 : f32 to vector<8x1xf32>
    %316 = arith.divf %314, %315 : vector<8x1xf32>
    %317 = vector.broadcast %316 : vector<8x1xf32> to vector<8x32xf32>
    %318 = arith.subf %312, %317 : vector<8x32xf32>
    %319 = arith.mulf %318, %318 : vector<8x32xf32>
    %cst_139 = arith.constant dense<0.000000e+00> : vector<8xf32>
    %320 = vector.multi_reduction <add>, %319, %cst_139 [1] : vector<8x32xf32> to vector<8xf32>
    %321 = vector.shape_cast %320 : vector<8xf32> to vector<8x1xf32>
    %cst_140 = arith.constant 3.200000e+01 : f32
    %322 = vector.broadcast %cst_140 : f32 to vector<8x1xf32>
    %323 = arith.divf %321, %322 : vector<8x1xf32>
    %324 = vector.broadcast %316 : vector<8x1xf32> to vector<8x32xf32>
    %325 = arith.subf %312, %324 : vector<8x32xf32>
    %cst_141 = arith.constant 9.99999997E-7 : f32
    %326 = vector.broadcast %cst_141 : f32 to vector<8x1xf32>
    %327 = arith.addf %323, %326 : vector<8x1xf32>
    %328 = math.rsqrt %327 : vector<8x1xf32>
    %329 = vector.broadcast %328 : vector<8x1xf32> to vector<8x32xf32>
    %330 = arith.mulf %325, %329 : vector<8x32xf32>
    %331 = vector.broadcast %8 : vector<1x32xf32> to vector<8x32xf32>
    %332 = arith.mulf %330, %331 : vector<8x32xf32>
    %333 = vector.broadcast %9 : vector<1x32xf32> to vector<8x32xf32>
    %334 = arith.addf %332, %333 : vector<8x32xf32>
    %c1_i32_142 = arith.constant 1 : i32
    %335 = tpu.dynamic_rotate %334 by %c1_i32_142 dim 0 : vector<8x32xf32>, i32 -> vector<8x32xf32>
    %336 = vector.broadcast %55 : vector<8x1xf32> to vector<8x32xf32>
    %337 = arith.mulf %335, %336 : vector<8x32xf32>
    %c7_i32_143 = arith.constant 7 : i32
    %338 = tpu.dynamic_rotate %334 by %c7_i32_143 dim 0 : vector<8x32xf32>, i32 -> vector<8x32xf32>
    %339 = vector.broadcast %59 : vector<8x1xf32> to vector<8x32xf32>
    %340 = arith.mulf %338, %339 : vector<8x32xf32>
    %cst_144 = arith.constant dense<0.000000e+00> : vector<8x64xf32>
    %341 = tpu.matmul %337, %21, %cst_144 {dimension_numbers = #tpu.dot_dimension_numbers<[1], [0], [0], [1], [0, 0, 1, 1], [], []>} : vector<8x32xf32>, vector<32x64xf32>, vector<8x64xf32> -> vector<8x64xf32>
    %cst_145 = arith.constant dense<0.000000e+00> : vector<8x64xf32>
    %342 = tpu.matmul %334, %23, %cst_145 {dimension_numbers = #tpu.dot_dimension_numbers<[1], [0], [0], [1], [0, 0, 1, 1], [], []>} : vector<8x32xf32>, vector<32x64xf32>, vector<8x64xf32> -> vector<8x64xf32>
    %343 = arith.addf %341, %342 : vector<8x64xf32>
    %cst_146 = arith.constant dense<0.000000e+00> : vector<8x64xf32>
    %344 = tpu.matmul %340, %25, %cst_146 {dimension_numbers = #tpu.dot_dimension_numbers<[1], [0], [0], [1], [0, 0, 1, 1], [], []>} : vector<8x32xf32>, vector<32x64xf32>, vector<8x64xf32> -> vector<8x64xf32>
    %345 = arith.addf %343, %344 : vector<8x64xf32>
    %346 = vector.broadcast %32 : vector<1x64xf32> to vector<8x64xf32>
    %347 = arith.addf %345, %346 : vector<8x64xf32>
    %cst_147 = arith.constant 0.000000e+00 : f32
    %348 = vector.broadcast %cst_147 : f32 to vector<8x64xf32>
    %349 = arith.maximumf %347, %348 : vector<8x64xf32>
    %c1_i32_148 = arith.constant 1 : i32
    %350 = tpu.dynamic_rotate %349 by %c1_i32_148 dim 0 : vector<8x64xf32>, i32 -> vector<8x64xf32>
    %351 = vector.broadcast %55 : vector<8x1xf32> to vector<8x64xf32>
    %352 = arith.mulf %350, %351 : vector<8x64xf32>
    %c7_i32_149 = arith.constant 7 : i32
    %353 = tpu.dynamic_rotate %349 by %c7_i32_149 dim 0 : vector<8x64xf32>, i32 -> vector<8x64xf32>
    %354 = vector.broadcast %59 : vector<8x1xf32> to vector<8x64xf32>
    %355 = arith.mulf %353, %354 : vector<8x64xf32>
    %cst_150 = arith.constant dense<0.000000e+00> : vector<8x32xf32>
    %356 = tpu.matmul %352, %27, %cst_150 {dimension_numbers = #tpu.dot_dimension_numbers<[1], [0], [0], [1], [0, 0, 1, 1], [], []>} : vector<8x64xf32>, vector<64x32xf32>, vector<8x32xf32> -> vector<8x32xf32>
    %cst_151 = arith.constant dense<0.000000e+00> : vector<8x32xf32>
    %357 = tpu.matmul %349, %29, %cst_151 {dimension_numbers = #tpu.dot_dimension_numbers<[1], [0], [0], [1], [0, 0, 1, 1], [], []>} : vector<8x64xf32>, vector<64x32xf32>, vector<8x32xf32> -> vector<8x32xf32>
    %358 = arith.addf %356, %357 : vector<8x32xf32>
    %cst_152 = arith.constant dense<0.000000e+00> : vector<8x32xf32>
    %359 = tpu.matmul %355, %31, %cst_152 {dimension_numbers = #tpu.dot_dimension_numbers<[1], [0], [0], [1], [0, 0, 1, 1], [], []>} : vector<8x64xf32>, vector<64x32xf32>, vector<8x32xf32> -> vector<8x32xf32>
    %360 = arith.addf %358, %359 : vector<8x32xf32>
    %361 = vector.broadcast %33 : vector<1x32xf32> to vector<8x32xf32>
    %362 = arith.addf %360, %361 : vector<8x32xf32>
    %363 = arith.addf %312, %362 : vector<8x32xf32>
    %cst_153 = arith.constant dense<0.000000e+00> : vector<8xf32>
    %364 = vector.multi_reduction <add>, %363, %cst_153 [1] : vector<8x32xf32> to vector<8xf32>
    %365 = vector.shape_cast %364 : vector<8xf32> to vector<8x1xf32>
    %cst_154 = arith.constant 3.200000e+01 : f32
    %366 = vector.broadcast %cst_154 : f32 to vector<8x1xf32>
    %367 = arith.divf %365, %366 : vector<8x1xf32>
    %368 = vector.broadcast %367 : vector<8x1xf32> to vector<8x32xf32>
    %369 = arith.subf %363, %368 : vector<8x32xf32>
    %370 = arith.mulf %369, %369 : vector<8x32xf32>
    %cst_155 = arith.constant dense<0.000000e+00> : vector<8xf32>
    %371 = vector.multi_reduction <add>, %370, %cst_155 [1] : vector<8x32xf32> to vector<8xf32>
    %372 = vector.shape_cast %371 : vector<8xf32> to vector<8x1xf32>
    %cst_156 = arith.constant 3.200000e+01 : f32
    %373 = vector.broadcast %cst_156 : f32 to vector<8x1xf32>
    %374 = arith.divf %372, %373 : vector<8x1xf32>
    %375 = vector.broadcast %367 : vector<8x1xf32> to vector<8x32xf32>
    %376 = arith.subf %363, %375 : vector<8x32xf32>
    %cst_157 = arith.constant 9.99999997E-7 : f32
    %377 = vector.broadcast %cst_157 : f32 to vector<8x1xf32>
    %378 = arith.addf %374, %377 : vector<8x1xf32>
    %379 = math.rsqrt %378 : vector<8x1xf32>
    %380 = vector.broadcast %379 : vector<8x1xf32> to vector<8x32xf32>
    %381 = arith.mulf %376, %380 : vector<8x32xf32>
    %382 = vector.broadcast %34 : vector<1x32xf32> to vector<8x32xf32>
    %383 = arith.mulf %381, %382 : vector<8x32xf32>
    %384 = vector.broadcast %35 : vector<1x32xf32> to vector<8x32xf32>
    %385 = arith.addf %383, %384 : vector<8x32xf32>
    %c0_158 = arith.constant 0 : index
    %c0_159 = arith.constant 0 : index
    %c0_160 = arith.constant 0 : index
    %386 = vector.load %arg27[%c0_158, %c0_159, %c0_160] : memref<1x8x32xf32, #tpu.memory_space<vmem>>, vector<1x8x32xf32>
    %387 = vector.shape_cast %386 : vector<1x8x32xf32> to vector<8x32xf32>
    %388 = vector.shape_cast %385 : vector<8x32xf32> to vector<1x8x32xf32>
    tpu.vector_store %arg27[%c0_158, %c0_159, %c0_160], %388 {strides = array<i32>} : memref<1x8x32xf32, #tpu.memory_space<vmem>>, vector<1x8x32xf32>,
    return
  }
  func.func @transform_0(%arg0: i32, %arg1: memref<2xi32, #tpu.memory_space<smem>>) -> (i32, i32, i32) {
    %c0_i32 = arith.constant 0 : i32
    %c0_i32_0 = arith.constant 0 : i32
    %c0_i32_1 = arith.constant 0 : i32
    return %arg0, %c0_i32, %c0_i32_0 : i32, i32, i32
  }
  func.func @transform_1(%arg0: i32, %arg1: memref<2xi32, #tpu.memory_space<smem>>) -> (i32, i32, i32) {
    %c0_i32 = arith.constant 0 : i32
    %c0_i32_0 = arith.constant 0 : i32
    %c0_i32_1 = arith.constant 0 : i32
    return %arg0, %c0_i32, %c0_i32_0 : i32, i32, i32
  }
  func.func @transform_2(%arg0: i32, %arg1: memref<2xi32, #tpu.memory_space<smem>>) -> (i32, i32, i32) {
    %c0_i32 = arith.constant 0 : i32
    %c0_i32_0 = arith.constant 0 : i32
    %c0_i32_1 = arith.constant 0 : i32
    return %arg0, %c0_i32, %c0_i32_0 : i32, i32, i32
  }
  func.func @transform_3(%arg0: i32, %arg1: memref<2xi32, #tpu.memory_space<smem>>) -> (i32, i32) {
    %c0_i32 = arith.constant 0 : i32
    %c0_i32_0 = arith.constant 0 : i32
    %c0_i32_1 = arith.constant 0 : i32
    return %c0_i32, %c0_i32_0 : i32, i32
  }
  func.func @transform_4(%arg0: i32, %arg1: memref<2xi32, #tpu.memory_space<smem>>) -> (i32, i32) {
    %c0_i32 = arith.constant 0 : i32
    %c0_i32_0 = arith.constant 0 : i32
    %c0_i32_1 = arith.constant 0 : i32
    return %c0_i32, %c0_i32_0 : i32, i32
  }
  func.func @transform_5(%arg0: i32, %arg1: memref<2xi32, #tpu.memory_space<smem>>) -> (i32, i32) {
    %c0_i32 = arith.constant 0 : i32
    %c0_i32_0 = arith.constant 0 : i32
    %c0_i32_1 = arith.constant 0 : i32
    return %c0_i32, %c0_i32_0 : i32, i32
  }
  func.func @transform_6(%arg0: i32, %arg1: memref<2xi32, #tpu.memory_space<smem>>) -> (i32, i32) {
    %c0_i32 = arith.constant 0 : i32
    %c0_i32_0 = arith.constant 0 : i32
    %c0_i32_1 = arith.constant 0 : i32
    return %c0_i32, %c0_i32_0 : i32, i32
  }
  func.func @transform_7(%arg0: i32, %arg1: memref<2xi32, #tpu.memory_space<smem>>) -> (i32, i32) {
    %c0_i32 = arith.constant 0 : i32
    %c0_i32_0 = arith.constant 0 : i32
    %c0_i32_1 = arith.constant 0 : i32
    return %c0_i32, %c0_i32_0 : i32, i32
  }
  func.func @transform_8(%arg0: i32, %arg1: memref<2xi32, #tpu.memory_space<smem>>) -> (i32, i32) {
    %c0_i32 = arith.constant 0 : i32
    %c0_i32_0 = arith.constant 0 : i32
    %c0_i32_1 = arith.constant 0 : i32
    return %c0_i32, %c0_i32_0 : i32, i32
  }
  func.func @transform_9(%arg0: i32, %arg1: memref<2xi32, #tpu.memory_space<smem>>) -> (i32, i32, i32) {
    %c0_i32 = arith.constant 0 : i32
    %c0_i32_0 = arith.constant 0 : i32
    %c0_i32_1 = arith.constant 0 : i32
    %c0_i32_2 = arith.constant 0 : i32
    return %c0_i32, %c0_i32_0, %c0_i32_1 : i32, i32, i32
  }
  func.func @transform_10(%arg0: i32, %arg1: memref<2xi32, #tpu.memory_space<smem>>) -> (i32, i32, i32) {
    %c0_i32 = arith.constant 0 : i32
    %c0_i32_0 = arith.constant 0 : i32
    %c0_i32_1 = arith.constant 0 : i32
    %c0_i32_2 = arith.constant 0 : i32
    return %c0_i32, %c0_i32_0, %c0_i32_1 : i32, i32, i32
  }
  func.func @transform_11(%arg0: i32, %arg1: memref<2xi32, #tpu.memory_space<smem>>) -> (i32, i32, i32) {
    %c0_i32 = arith.constant 0 : i32
    %c0_i32_0 = arith.constant 0 : i32
    %c0_i32_1 = arith.constant 0 : i32
    %c0_i32_2 = arith.constant 0 : i32
    return %c0_i32, %c0_i32_0, %c0_i32_1 : i32, i32, i32
  }
  func.func @transform_12(%arg0: i32, %arg1: memref<2xi32, #tpu.memory_space<smem>>) -> (i32, i32) {
    %c0_i32 = arith.constant 0 : i32
    %c0_i32_0 = arith.constant 0 : i32
    %c0_i32_1 = arith.constant 0 : i32
    return %c0_i32, %c0_i32_0 : i32, i32
  }
  func.func @transform_13(%arg0: i32, %arg1: memref<2xi32, #tpu.memory_space<smem>>) -> (i32, i32, i32) {
    %c0_i32 = arith.constant 0 : i32
    %c0_i32_0 = arith.constant 0 : i32
    %c0_i32_1 = arith.constant 0 : i32
    %c0_i32_2 = arith.constant 0 : i32
    return %c0_i32, %c0_i32_0, %c0_i32_1 : i32, i32, i32
  }
  func.func @transform_14(%arg0: i32, %arg1: memref<2xi32, #tpu.memory_space<smem>>) -> (i32, i32, i32) {
    %c0_i32 = arith.constant 0 : i32
    %c0_i32_0 = arith.constant 0 : i32
    %c0_i32_1 = arith.constant 0 : i32
    %c0_i32_2 = arith.constant 0 : i32
    return %c0_i32, %c0_i32_0, %c0_i32_1 : i32, i32, i32
  }
  func.func @transform_15(%arg0: i32, %arg1: memref<2xi32, #tpu.memory_space<smem>>) -> (i32, i32, i32) {
    %c0_i32 = arith.constant 0 : i32
    %c0_i32_0 = arith.constant 0 : i32
    %c0_i32_1 = arith.constant 0 : i32
    %c0_i32_2 = arith.constant 0 : i32
    return %c0_i32, %c0_i32_0, %c0_i32_1 : i32, i32, i32
  }
  func.func @transform_16(%arg0: i32, %arg1: memref<2xi32, #tpu.memory_space<smem>>) -> (i32, i32, i32) {
    %c0_i32 = arith.constant 0 : i32
    %c0_i32_0 = arith.constant 0 : i32
    %c0_i32_1 = arith.constant 0 : i32
    %c0_i32_2 = arith.constant 0 : i32
    return %c0_i32, %c0_i32_0, %c0_i32_1 : i32, i32, i32
  }
  func.func @transform_17(%arg0: i32, %arg1: memref<2xi32, #tpu.memory_space<smem>>) -> (i32, i32, i32) {
    %c0_i32 = arith.constant 0 : i32
    %c0_i32_0 = arith.constant 0 : i32
    %c0_i32_1 = arith.constant 0 : i32
    %c0_i32_2 = arith.constant 0 : i32
    return %c0_i32, %c0_i32_0, %c0_i32_1 : i32, i32, i32
  }
  func.func @transform_18(%arg0: i32, %arg1: memref<2xi32, #tpu.memory_space<smem>>) -> (i32, i32) {
    %c0_i32 = arith.constant 0 : i32
    %c0_i32_0 = arith.constant 0 : i32
    %c0_i32_1 = arith.constant 0 : i32
    return %c0_i32, %c0_i32_0 : i32, i32
  }
  func.func @transform_19(%arg0: i32, %arg1: memref<2xi32, #tpu.memory_space<smem>>) -> (i32, i32, i32) {
    %c0_i32 = arith.constant 0 : i32
    %c0_i32_0 = arith.constant 0 : i32
    %c0_i32_1 = arith.constant 0 : i32
    %c0_i32_2 = arith.constant 0 : i32
    return %c0_i32, %c0_i32_0, %c0_i32_1 : i32, i32, i32
  }
  func.func @transform_20(%arg0: i32, %arg1: memref<2xi32, #tpu.memory_space<smem>>) -> (i32, i32) {
    %c0_i32 = arith.constant 0 : i32
    %c0_i32_0 = arith.constant 0 : i32
    %c0_i32_1 = arith.constant 0 : i32
    return %c0_i32, %c0_i32_0 : i32, i32
  }
  func.func @transform_21(%arg0: i32, %arg1: memref<2xi32, #tpu.memory_space<smem>>) -> (i32, i32, i32) {
    %c0_i32 = arith.constant 0 : i32
    %c0_i32_0 = arith.constant 0 : i32
    %c0_i32_1 = arith.constant 0 : i32
    %c0_i32_2 = arith.constant 0 : i32
    return %c0_i32, %c0_i32_0, %c0_i32_1 : i32, i32, i32
  }
  func.func @transform_22(%arg0: i32, %arg1: memref<2xi32, #tpu.memory_space<smem>>) -> (i32, i32) {
    %c0_i32 = arith.constant 0 : i32
    %c0_i32_0 = arith.constant 0 : i32
    %c0_i32_1 = arith.constant 0 : i32
    return %c0_i32, %c0_i32_0 : i32, i32
  }
  func.func @transform_23(%arg0: i32, %arg1: memref<2xi32, #tpu.memory_space<smem>>) -> (i32, i32) {
    %c0_i32 = arith.constant 0 : i32
    %c0_i32_0 = arith.constant 0 : i32
    %c0_i32_1 = arith.constant 0 : i32
    return %c0_i32, %c0_i32_0 : i32, i32
  }
  func.func @transform_24(%arg0: i32, %arg1: memref<2xi32, #tpu.memory_space<smem>>) -> (i32, i32) {
    %c0_i32 = arith.constant 0 : i32
    %c0_i32_0 = arith.constant 0 : i32
    %c0_i32_1 = arith.constant 0 : i32
    return %c0_i32, %c0_i32_0 : i32, i32
  }
  func.func @transform_25(%arg0: i32, %arg1: memref<2xi32, #tpu.memory_space<smem>>) -> (i32, i32, i32) {
    %c0_i32 = arith.constant 0 : i32
    %c0_i32_0 = arith.constant 0 : i32
    %c0_i32_1 = arith.constant 0 : i32
    return %arg0, %c0_i32, %c0_i32_0 : i32, i32, i32
  }
}

</mosaic_0001>

<llo_original>
// kernel: decoder_forward.1
$region0: #{decoder_forward.1}
  #allocation0 [shape = 'u32[]', space=smem, size = 0x4, offset = 0x4, fixed_abs, tag = 'smem constant byte address 0x4 - core index']
  #allocation1 [shape = 'u32[72,128]{1,0:T(1,128)}', space=vmem, size = 0x9000, scoped, tag = 'internal scratch']
  #allocation2 [shape = 's32[1]{0}', space=sflag, size = 0x4, scoped, tag = 'scoped memory for decoder_forward.1']
  #allocation3 [shape = 'u8[512]{0}', space=smem, size = 0x200, scoped, tag = 'prefetched SMEM operand 0']
  %s0 = inlined_call_operand.vmem [shape: s32[2], index: 0, kind: input, shape index: {}]
  %s1 = inlined_call_operand.vmem [shape: f32[2,8,32], index: 1, kind: input, shape index: {}]
  %s2 = inlined_call_operand.vmem [shape: f32[2,8,32], index: 2, kind: input, shape index: {}]
  %s3 = inlined_call_operand.vmem [shape: f32[2,1,8], index: 3, kind: input, shape index: {}]
  %s4 = inlined_call_operand.vmem [shape: f32[1,32], index: 4, kind: input, shape index: {}]
  %s5 = inlined_call_operand.vmem [shape: f32[1,32], index: 5, kind: input, shape index: {}]
  %s6 = inlined_call_operand.vmem [shape: f32[1,32], index: 6, kind: input, shape index: {}]
  %s7 = inlined_call_operand.vmem [shape: f32[1,32], index: 7, kind: input, shape index: {}]
  %s8 = inlined_call_operand.vmem [shape: f32[1,32], index: 8, kind: input, shape index: {}]
  %s9 = inlined_call_operand.vmem [shape: f32[1,32], index: 9, kind: input, shape index: {}]
  %s10 = inlined_call_operand.vmem [shape: f32[12,32,8], index: 10, kind: input, shape index: {}]
  %s11 = inlined_call_operand.vmem [shape: f32[12,1,8], index: 11, kind: input, shape index: {}]
  %s12 = inlined_call_operand.vmem [shape: f32[4,8,32], index: 12, kind: input, shape index: {}]
  %s13 = inlined_call_operand.vmem [shape: f32[1,32], index: 13, kind: input, shape index: {}]
  %s14 = inlined_call_operand.vmem [shape: f32[4,32,8], index: 14, kind: input, shape index: {}]
  %s15 = inlined_call_operand.vmem [shape: f32[4,1,8], index: 15, kind: input, shape index: {}]
  %s16 = inlined_call_operand.vmem [shape: f32[8,32,8], index: 16, kind: input, shape index: {}]
  %s17 = inlined_call_operand.vmem [shape: f32[8,1,8], index: 17, kind: input, shape index: {}]
  %s18 = inlined_call_operand.vmem [shape: f32[4,8,32], index: 18, kind: input, shape index: {}]
  %s19 = inlined_call_operand.vmem [shape: f32[1,32], index: 19, kind: input, shape index: {}]
  %s20 = inlined_call_operand.vmem [shape: f32[3,32,64], index: 20, kind: input, shape index: {}]
  %s21 = inlined_call_operand.vmem [shape: f32[1,64], index: 21, kind: input, shape index: {}]
  %s22 = inlined_call_operand.vmem [shape: f32[3,64,32], index: 22, kind: input, shape index: {}]
  %s23 = inlined_call_operand.vmem [shape: f32[1,32], index: 23, kind: input, shape index: {}]
  %s24 = inlined_call_operand.vmem [shape: f32[1,32], index: 24, kind: input, shape index: {}]
  %s25 = inlined_call_operand.vmem [shape: f32[1,32], index: 25, kind: input, shape index: {}]
  %s26 = inlined_call_operand.hbm [shape: f32[2,8,32], index: 26, kind: output, shape index: {}]
  %s27 = sld [smem:[#allocation0]]
  $region133: #{decoder_forward.1} parent=0
    _
  %s29 = ssub.s32 1, %s27
  %s30 = scalar_select 0, %s29, %s27
  %s32 = sshll.u32 %s0, 4
  %s33 = int_to_ptr.vmem [resolvable:$true] %s32
  %35 = dma.vmem_to_smem %s33, 16, [#allocation3], [#allocation2]
  %37 = dma.done [#allocation2], 16
  %38 = sfence
  $region1: #{decoder_forward.1} parent=0
    #allocation4 [shape = 'u8[8192]{0}', space=vmem, size = 0x2000, scoped, tag = 'output window, operand 0']
    #allocation5 [shape = 's32[2]{0}', space=sflag, size = 0x8, scoped, tag = 'scoped memory for decoder_forward.1']
    %39 = vsyncpa [#allocation5], 0
    %s40 = scalar_lea.sflag [#allocation5], 1
    %41 = vsyncpa %s40, 0
    loop: start=0, step=1, limit=4
    $region2: #{decoder_forward.1} parent=1 // loop_pre_header
      _
    $region3: #{decoder_forward.1} parent=1 // loop_header
      %s43 = sphi 0, %s47
      %p44 = scmp.ge.s32.totalorder %s43, 4
      %s53 = sphi 0, %s55
      %s56 = sphi 0, %s53
      %s57 = sphi 0, %s56
      %s73 = sphi 0, %s57
      %s79 = sphi 0, %s81
      %s82 = sphi 0, %s79
      %s83 = sphi 0, %s82
      %s99 = sphi 0, %s83
      %s105 = sphi 0, %s107
      %s108 = sphi 0, %s105
      %s109 = sphi 0, %s108
      %s125 = sphi 0, %s109
      %s129 = sphi 0, %s129
      %s131 = sphi 0, %s129
      %s132 = sphi 0, %s131
      %s146 = sphi 0, %s132
      %s150 = sphi 0, %s150
      %s152 = sphi 0, %s150
      %s153 = sphi 0, %s152
      %s167 = sphi 0, %s153
      %s171 = sphi 0, %s171
      %s173 = sphi 0, %s171
      %s174 = sphi 0, %s173
      %s188 = sphi 0, %s174
      %s192 = sphi 0, %s192
      %s194 = sphi 0, %s192
      %s195 = sphi 0, %s194
      %s209 = sphi 0, %s195
      %s213 = sphi 0, %s213
      %s215 = sphi 0, %s213
      %s216 = sphi 0, %s215
      %s230 = sphi 0, %s216
      %s234 = sphi 0, %s234
      %s236 = sphi 0, %s234
      %s237 = sphi 0, %s236
      %s251 = sphi 0, %s237
      %s255 = sphi 0, %s255
      %s257 = sphi 0, %s255
      %s258 = sphi 0, %s257
      %s272 = sphi 0, %s258
      %s276 = sphi 0, %s276
      %s278 = sphi 0, %s276
      %s279 = sphi 0, %s278
      %s293 = sphi 0, %s279
      %s297 = sphi 0, %s297
      %s299 = sphi 0, %s297
      %s300 = sphi 0, %s299
      %s314 = sphi 0, %s300
      %s318 = sphi 0, %s318
      %s320 = sphi 0, %s318
      %s321 = sphi 0, %s320
      %s335 = sphi 0, %s321
      %s339 = sphi 0, %s339
      %s341 = sphi 0, %s339
      %s342 = sphi 0, %s341
      %s356 = sphi 0, %s342
      %s360 = sphi 0, %s360
      %s362 = sphi 0, %s360
      %s363 = sphi 0, %s362
      %s377 = sphi 0, %s363
      %s381 = sphi 0, %s381
      %s383 = sphi 0, %s381
      %s384 = sphi 0, %s383
      %s398 = sphi 0, %s384
      %s402 = sphi 0, %s402
      %s404 = sphi 0, %s402
      %s405 = sphi 0, %s404
      %s419 = sphi 0, %s405
      %s423 = sphi 0, %s423
      %s425 = sphi 0, %s423
      %s426 = sphi 0, %s425
      %s440 = sphi 0, %s426
      %s444 = sphi 0, %s444
      %s446 = sphi 0, %s444
      %s447 = sphi 0, %s446
      %s461 = sphi 0, %s447
      %s465 = sphi 0, %s465
      %s467 = sphi 0, %s465
      %s468 = sphi 0, %s467
      %s482 = sphi 0, %s468
      %s486 = sphi 0, %s486
      %s488 = sphi 0, %s486
      %s489 = sphi 0, %s488
      %s503 = sphi 0, %s489
      %s507 = sphi 0, %s507
      %s509 = sphi 0, %s507
      %s510 = sphi 0, %s509
      %s524 = sphi 0, %s510
      %s528 = sphi 0, %s528
      %s530 = sphi 0, %s528
      %s531 = sphi 0, %s530
      %s545 = sphi 0, %s531
      %s549 = sphi 0, %s549
      %s551 = sphi 0, %s549
      %s552 = sphi 0, %s551
      %s566 = sphi 0, %s552
      %s570 = sphi 0, %s570
      %s572 = sphi 0, %s570
      %s573 = sphi 0, %s572
      %s587 = sphi 0, %s573
      %s593 = sphi 0, %s595
      %s596 = sphi 0, %s593
      %s597 = sphi 0, %s596
      %s613 = sphi 0, %s597
    $region4: #{decoder_forward.1} parent=1 // loop_header_branch
      %46 = sbr.rel (%p44) target = $region8
    $region5: #{decoder_forward.1} parent=1 // loop_body
      %s48 = ssub.s32 %s43, 1
      %s49 = ssub.s32 %s43, 2
      %s50 = sadd.s32 %s43, 1
      %s51 = ssub.s32 %s43, %s50
      %p52 = scmp.eq.s32.totalorder %s51, 0
      %s54 = sadd.s32 %s53, 1
      %s55 = scalar_select %p52, %s53, %s54
      %p58 = pneg %p52
      %p59 = scmp.eq.s32.totalorder %s43, 1
      %p60 = por %p58, %p59
      %p61 = scmp.ne.s32.totalorder %s53, %s56
      %p62 = scmp.eq.s32.totalorder %s43, 0
      %p63 = por %p61, %p62
      %p64 = scmp.ne.s32.totalorder %s53, %s56
      %p65 = scmp.eq.s32.totalorder %s48, 1
      %p66 = por %p64, %p65
      %p67 = scmp.ne.s32.totalorder %s56, %s57
      %p68 = scmp.eq.s32.totalorder %s48, 0
      %p69 = por %p67, %p68
      %p70 = scmp.ne.s32.totalorder %s56, %s57
      %p71 = scmp.eq.s32.totalorder %s49, 1
      %p72 = por %p70, %p71
      %p74 = scmp.ne.s32.totalorder %s57, %s73
      %p75 = scmp.eq.s32.totalorder %s49, 0
      %p76 = por %p74, %p75
      %s77 = ssub.s32 %s43, %s50
      %p78 = scmp.eq.s32.totalorder %s77, 0
      %s80 = sadd.s32 %s79, 1
      %s81 = scalar_select %p78, %s79, %s80
      %p84 = pneg %p78
      %p85 = scmp.eq.s32.totalorder %s43, 1
      %p86 = por %p84, %p85
      %p87 = scmp.ne.s32.totalorder %s79, %s82
      %p88 = scmp.eq.s32.totalorder %s43, 0
      %p89 = por %p87, %p88
      %p90 = scmp.ne.s32.totalorder %s79, %s82
      %p91 = scmp.eq.s32.totalorder %s48, 1
      %p92 = por %p90, %p91
      %p93 = scmp.ne.s32.totalorder %s82, %s83
      %p94 = scmp.eq.s32.totalorder %s48, 0
      %p95 = por %p93, %p94
      %p96 = scmp.ne.s32.totalorder %s82, %s83
      %p97 = scmp.eq.s32.totalorder %s49, 1
      %p98 = por %p96, %p97
      %p100 = scmp.ne.s32.totalorder %s83, %s99
      %p101 = scmp.eq.s32.totalorder %s49, 0
      %p102 = por %p100, %p101
      %s103 = ssub.s32 %s43, %s50
      %p104 = scmp.eq.s32.totalorder %s103, 0
      %s106 = sadd.s32 %s105, 1
      %s107 = scalar_select %p104, %s105, %s106
      %p110 = pneg %p104
      %p111 = scmp.eq.s32.totalorder %s43, 1
      %p112 = por %p110, %p111
      %p113 = scmp.ne.s32.totalorder %s105, %s108
      %p114 = scmp.eq.s32.totalorder %s43, 0
      %p115 = por %p113, %p114
      %p116 = scmp.ne.s32.totalorder %s105, %s108
      %p117 = scmp.eq.s32.totalorder %s48, 1
      %p118 = por %p116, %p117
      %p119 = scmp.ne.s32.totalorder %s108, %s109
      %p120 = scmp.eq.s32.totalorder %s48, 0
      %p121 = por %p119, %p120
      %p122 = scmp.ne.s32.totalorder %s108, %s109
      %p123 = scmp.eq.s32.totalorder %s49, 1
      %p124 = por %p122, %p123
      %p126 = scmp.ne.s32.totalorder %s109, %s125
      %p127 = scmp.eq.s32.totalorder %s49, 0
      %p128 = por %p126, %p127
      %s130 = sadd.s32 %s129, 1
      %p133 = scmp.eq.s32.totalorder %s43, 1
      %p134 = scmp.ne.s32.totalorder %s129, %s131
      %p135 = scmp.eq.s32.totalorder %s43, 0
      %p136 = por %p134, %p135
      %p137 = scmp.ne.s32.totalorder %s129, %s131
      %p138 = scmp.eq.s32.totalorder %s48, 1
      %p139 = por %p137, %p138
      %p140 = scmp.ne.s32.totalorder %s131, %s132
      %p141 = scmp.eq.s32.totalorder %s48, 0
      %p142 = por %p140, %p141
      %p143 = scmp.ne.s32.totalorder %s131, %s132
      %p144 = scmp.eq.s32.totalorder %s49, 1
      %p145 = por %p143, %p144
      %p147 = scmp.ne.s32.totalorder %s132, %s146
      %p148 = scmp.eq.s32.totalorder %s49, 0
      %p149 = por %p147, %p148
      %s151 = sadd.s32 %s150, 1
      %p154 = scmp.eq.s32.totalorder %s43, 1
      %p155 = scmp.ne.s32.totalorder %s150, %s152
      %p156 = scmp.eq.s32.totalorder %s43, 0
      %p157 = por %p155, %p156
      %p158 = scmp.ne.s32.totalorder %s150, %s152
      %p159 = scmp.eq.s32.totalorder %s48, 1
      %p160 = por %p158, %p159
      %p161 = scmp.ne.s32.totalorder %s152, %s153
      %p162 = scmp.eq.s32.totalorder %s48, 0
      %p163 = por %p161, %p162
      %p164 = scmp.ne.s32.totalorder %s152, %s153
      %p165 = scmp.eq.s32.totalorder %s49, 1
      %p166 = por %p164, %p165
      %p168 = scmp.ne.s32.totalorder %s153, %s167
      %p169 = scmp.eq.s32.totalorder %s49, 0
      %p170 = por %p168, %p169
      %s172 = sadd.s32 %s171, 1
      %p175 = scmp.eq.s32.totalorder %s43, 1
      %p176 = scmp.ne.s32.totalorder %s171, %s173
      %p177 = scmp.eq.s32.totalorder %s43, 0
      %p178 = por %p176, %p177
      %p179 = scmp.ne.s32.totalorder %s171, %s173
      %p180 = scmp.eq.s32.totalorder %s48, 1
      %p181 = por %p179, %p180
      %p182 = scmp.ne.s32.totalorder %s173, %s174
      %p183 = scmp.eq.s32.totalorder %s48, 0
      %p184 = por %p182, %p183
      %p185 = scmp.ne.s32.totalorder %s173, %s174
      %p186 = scmp.eq.s32.totalorder %s49, 1
      %p187 = por %p185, %p186
      %p189 = scmp.ne.s32.totalorder %s174, %s188
      %p190 = scmp.eq.s32.totalorder %s49, 0
      %p191 = por %p189, %p190
      %s193 = sadd.s32 %s192, 1
      %p196 = scmp.eq.s32.totalorder %s43, 1
      %p197 = scmp.ne.s32.totalorder %s192, %s194
      %p198 = scmp.eq.s32.totalorder %s43, 0
      %p199 = por %p197, %p198
      %p200 = scmp.ne.s32.totalorder %s192, %s194
      %p201 = scmp.eq.s32.totalorder %s48, 1
      %p202 = por %p200, %p201
      %p203 = scmp.ne.s32.totalorder %s194, %s195
      %p204 = scmp.eq.s32.totalorder %s48, 0
      %p205 = por %p203, %p204
      %p206 = scmp.ne.s32.totalorder %s194, %s195
      %p207 = scmp.eq.s32.totalorder %s49, 1
      %p208 = por %p206, %p207
      %p210 = scmp.ne.s32.totalorder %s195, %s209
      %p211 = scmp.eq.s32.totalorder %s49, 0
      %p212 = por %p210, %p211
      %s214 = sadd.s32 %s213, 1
      %p217 = scmp.eq.s32.totalorder %s43, 1
      %p218 = scmp.ne.s32.totalorder %s213, %s215
      %p219 = scmp.eq.s32.totalorder %s43, 0
      %p220 = por %p218, %p219
      %p221 = scmp.ne.s32.totalorder %s213, %s215
      %p222 = scmp.eq.s32.totalorder %s48, 1
      %p223 = por %p221, %p222
      %p224 = scmp.ne.s32.totalorder %s215, %s216
      %p225 = scmp.eq.s32.totalorder %s48, 0
      %p226 = por %p224, %p225
      %p227 = scmp.ne.s32.totalorder %s215, %s216
      %p228 = scmp.eq.s32.totalorder %s49, 1
      %p229 = por %p227, %p228
      %p231 = scmp.ne.s32.totalorder %s216, %s230
      %p232 = scmp.eq.s32.totalorder %s49, 0
      %p233 = por %p231, %p232
      %s235 = sadd.s32 %s234, 1
      %p238 = scmp.eq.s32.totalorder %s43, 1
      %p239 = scmp.ne.s32.totalorder %s234, %s236
      %p240 = scmp.eq.s32.totalorder %s43, 0
      %p241 = por %p239, %p240
      %p242 = scmp.ne.s32.totalorder %s234, %s236
      %p243 = scmp.eq.s32.totalorder %s48, 1
      %p244 = por %p242, %p243
      %p245 = scmp.ne.s32.totalorder %s236, %s237
      %p246 = scmp.eq.s32.totalorder %s48, 0
      %p247 = por %p245, %p246
      %p248 = scmp.ne.s32.totalorder %s236, %s237
      %p249 = scmp.eq.s32.totalorder %s49, 1
      %p250 = por %p248, %p249
      %p252 = scmp.ne.s32.totalorder %s237, %s251
      %p253 = scmp.eq.s32.totalorder %s49, 0
      %p254 = por %p252, %p253
      %s256 = sadd.s32 %s255, 1
      %p259 = scmp.eq.s32.totalorder %s43, 1
      %p260 = scmp.ne.s32.totalorder %s255, %s257
      %p261 = scmp.eq.s32.totalorder %s43, 0
      %p262 = por %p260, %p261
      %p263 = scmp.ne.s32.totalorder %s255, %s257
      %p264 = scmp.eq.s32.totalorder %s48, 1
      %p265 = por %p263, %p264
      %p266 = scmp.ne.s32.totalorder %s257, %s258
      %p267 = scmp.eq.s32.totalorder %s48, 0
      %p268 = por %p266, %p267
      %p269 = scmp.ne.s32.totalorder %s257, %s258
      %p270 = scmp.eq.s32.totalorder %s49, 1
      %p271 = por %p269, %p270
      %p273 = scmp.ne.s32.totalorder %s258, %s272
      %p274 = scmp.eq.s32.totalorder %s49, 0
      %p275 = por %p273, %p274
      %s277 = sadd.s32 %s276, 1
      %p280 = scmp.eq.s32.totalorder %s43, 1
      %p281 = scmp.ne.s32.totalorder %s276, %s278
      %p282 = scmp.eq.s32.totalorder %s43, 0
      %p283 = por %p281, %p282
      %p284 = scmp.ne.s32.totalorder %s276, %s278
      %p285 = scmp.eq.s32.totalorder %s48, 1
      %p286 = por %p284, %p285
      %p287 = scmp.ne.s32.totalorder %s278, %s279
      %p288 = scmp.eq.s32.totalorder %s48, 0
      %p289 = por %p287, %p288
      %p290 = scmp.ne.s32.totalorder %s278, %s279
      %p291 = scmp.eq.s32.totalorder %s49, 1
      %p292 = por %p290, %p291
      %p294 = scmp.ne.s32.totalorder %s279, %s293
      %p295 = scmp.eq.s32.totalorder %s49, 0
      %p296 = por %p294, %p295
      %s298 = sadd.s32 %s297, 1
      %p301 = scmp.eq.s32.totalorder %s43, 1
      %p302 = scmp.ne.s32.totalorder %s297, %s299
      %p303 = scmp.eq.s32.totalorder %s43, 0
      %p304 = por %p302, %p303
      %p305 = scmp.ne.s32.totalorder %s297, %s299
      %p306 = scmp.eq.s32.totalorder %s48, 1
      %p307 = por %p305, %p306
      %p308 = scmp.ne.s32.totalorder %s299, %s300
      %p309 = scmp.eq.s32.totalorder %s48, 0
      %p310 = por %p308, %p309
      %p311 = scmp.ne.s32.totalorder %s299, %s300
      %p312 = scmp.eq.s32.totalorder %s49, 1
      %p313 = por %p311, %p312
      %p315 = scmp.ne.s32.totalorder %s300, %s314
      %p316 = scmp.eq.s32.totalorder %s49, 0
      %p317 = por %p315, %p316
      %s319 = sadd.s32 %s318, 1
      %p322 = scmp.eq.s32.totalorder %s43, 1
      %p323 = scmp.ne.s32.totalorder %s318, %s320
      %p324 = scmp.eq.s32.totalorder %s43, 0
      %p325 = por %p323, %p324
      %p326 = scmp.ne.s32.totalorder %s318, %s320
      %p327 = scmp.eq.s32.totalorder %s48, 1
      %p328 = por %p326, %p327
      %p329 = scmp.ne.s32.totalorder %s320, %s321
      %p330 = scmp.eq.s32.totalorder %s48, 0
      %p331 = por %p329, %p330
      %p332 = scmp.ne.s32.totalorder %s320, %s321
      %p333 = scmp.eq.s32.totalorder %s49, 1
      %p334 = por %p332, %p333
      %p336 = scmp.ne.s32.totalorder %s321, %s335
      %p337 = scmp.eq.s32.totalorder %s49, 0
      %p338 = por %p336, %p337
      %s340 = sadd.s32 %s339, 1
      %p343 = scmp.eq.s32.totalorder %s43, 1
      %p344 = scmp.ne.s32.totalorder %s339, %s341
      %p345 = scmp.eq.s32.totalorder %s43, 0
      %p346 = por %p344, %p345
      %p347 = scmp.ne.s32.totalorder %s339, %s341
      %p348 = scmp.eq.s32.totalorder %s48, 1
      %p349 = por %p347, %p348
      %p350 = scmp.ne.s32.totalorder %s341, %s342
      %p351 = scmp.eq.s32.totalorder %s48, 0
      %p352 = por %p350, %p351
      %p353 = scmp.ne.s32.totalorder %s341, %s342
      %p354 = scmp.eq.s32.totalorder %s49, 1
      %p355 = por %p353, %p354
      %p357 = scmp.ne.s32.totalorder %s342, %s356
      %p358 = scmp.eq.s32.totalorder %s49, 0
      %p359 = por %p357, %p358
      %s361 = sadd.s32 %s360, 1
      %p364 = scmp.eq.s32.totalorder %s43, 1
      %p365 = scmp.ne.s32.totalorder %s360, %s362
      %p366 = scmp.eq.s32.totalorder %s43, 0
      %p367 = por %p365, %p366
      %p368 = scmp.ne.s32.totalorder %s360, %s362
      %p369 = scmp.eq.s32.totalorder %s48, 1
      %p370 = por %p368, %p369
      %p371 = scmp.ne.s32.totalorder %s362, %s363
      %p372 = scmp.eq.s32.totalorder %s48, 0
      %p373 = por %p371, %p372
      %p374 = scmp.ne.s32.totalorder %s362, %s363
      %p375 = scmp.eq.s32.totalorder %s49, 1
      %p376 = por %p374, %p375
      %p378 = scmp.ne.s32.totalorder %s363, %s377
      %p379 = scmp.eq.s32.totalorder %s49, 0
      %p380 = por %p378, %p379
      %s382 = sadd.s32 %s381, 1
      %p385 = scmp.eq.s32.totalorder %s43, 1
      %p386 = scmp.ne.s32.totalorder %s381, %s383
      %p387 = scmp.eq.s32.totalorder %s43, 0
      %p388 = por %p386, %p387
      %p389 = scmp.ne.s32.totalorder %s381, %s383
      %p390 = scmp.eq.s32.totalorder %s48, 1
      %p391 = por %p389, %p390
      %p392 = scmp.ne.s32.totalorder %s383, %s384
      %p393 = scmp.eq.s32.totalorder %s48, 0
      %p394 = por %p392, %p393
      %p395 = scmp.ne.s32.totalorder %s383, %s384
      %p396 = scmp.eq.s32.totalorder %s49, 1
      %p397 = por %p395, %p396
      %p399 = scmp.ne.s32.totalorder %s384, %s398
      %p400 = scmp.eq.s32.totalorder %s49, 0
      %p401 = por %p399, %p400
      %s403 = sadd.s32 %s402, 1
      %p406 = scmp.eq.s32.totalorder %s43, 1
      %p407 = scmp.ne.s32.totalorder %s402, %s404
      %p408 = scmp.eq.s32.totalorder %s43, 0
      %p409 = por %p407, %p408
      %p410 = scmp.ne.s32.totalorder %s402, %s404
      %p411 = scmp.eq.s32.totalorder %s48, 1
      %p412 = por %p410, %p411
      %p413 = scmp.ne.s32.totalorder %s404, %s405
      %p414 = scmp.eq.s32.totalorder %s48, 0
      %p415 = por %p413, %p414
      %p416 = scmp.ne.s32.totalorder %s404, %s405
      %p417 = scmp.eq.s32.totalorder %s49, 1
      %p418 = por %p416, %p417
      %p420 = scmp.ne.s32.totalorder %s405, %s419
      %p421 = scmp.eq.s32.totalorder %s49, 0
      %p422 = por %p420, %p421
      %s424 = sadd.s32 %s423, 1
      %p427 = scmp.eq.s32.totalorder %s43, 1
      %p428 = scmp.ne.s32.totalorder %s423, %s425
      %p429 = scmp.eq.s32.totalorder %s43, 0
      %p430 = por %p428, %p429
      %p431 = scmp.ne.s32.totalorder %s423, %s425
      %p432 = scmp.eq.s32.totalorder %s48, 1
      %p433 = por %p431, %p432
      %p434 = scmp.ne.s32.totalorder %s425, %s426
      %p435 = scmp.eq.s32.totalorder %s48, 0
      %p436 = por %p434, %p435
      %p437 = scmp.ne.s32.totalorder %s425, %s426
      %p438 = scmp.eq.s32.totalorder %s49, 1
      %p439 = por %p437, %p438
      %p441 = scmp.ne.s32.totalorder %s426, %s440
      %p442 = scmp.eq.s32.totalorder %s49, 0
      %p443 = por %p441, %p442
      %s445 = sadd.s32 %s444, 1
      %p448 = scmp.eq.s32.totalorder %s43, 1
      %p449 = scmp.ne.s32.totalorder %s444, %s446
      %p450 = scmp.eq.s32.totalorder %s43, 0
      %p451 = por %p449, %p450
      %p452 = scmp.ne.s32.totalorder %s444, %s446
      %p453 = scmp.eq.s32.totalorder %s48, 1
      %p454 = por %p452, %p453
      %p455 = scmp.ne.s32.totalorder %s446, %s447
      %p456 = scmp.eq.s32.totalorder %s48, 0
      %p457 = por %p455, %p456
      %p458 = scmp.ne.s32.totalorder %s446, %s447
      %p459 = scmp.eq.s32.totalorder %s49, 1
      %p460 = por %p458, %p459
      %p462 = scmp.ne.s32.totalorder %s447, %s461
      %p463 = scmp.eq.s32.totalorder %s49, 0
      %p464 = por %p462, %p463
      %s466 = sadd.s32 %s465, 1
      %p469 = scmp.eq.s32.totalorder %s43, 1
      %p470 = scmp.ne.s32.totalorder %s465, %s467
      %p471 = scmp.eq.s32.totalorder %s43, 0
      %p472 = por %p470, %p471
      %p473 = scmp.ne.s32.totalorder %s465, %s467
      %p474 = scmp.eq.s32.totalorder %s48, 1
      %p475 = por %p473, %p474
      %p476 = scmp.ne.s32.totalorder %s467, %s468
      %p477 = scmp.eq.s32.totalorder %s48, 0
      %p478 = por %p476, %p477
      %p479 = scmp.ne.s32.totalorder %s467, %s468
      %p480 = scmp.eq.s32.totalorder %s49, 1
      %p481 = por %p479, %p480
      %p483 = scmp.ne.s32.totalorder %s468, %s482
      %p484 = scmp.eq.s32.totalorder %s49, 0
      %p485 = por %p483, %p484
      %s487 = sadd.s32 %s486, 1
      %p490 = scmp.eq.s32.totalorder %s43, 1
      %p491 = scmp.ne.s32.totalorder %s486, %s488
      %p492 = scmp.eq.s32.totalorder %s43, 0
      %p493 = por %p491, %p492
      %p494 = scmp.ne.s32.totalorder %s486, %s488
      %p495 = scmp.eq.s32.totalorder %s48, 1
      %p496 = por %p494, %p495
      %p497 = scmp.ne.s32.totalorder %s488, %s489
      %p498 = scmp.eq.s32.totalorder %s48, 0
      %p499 = por %p497, %p498
      %p500 = scmp.ne.s32.totalorder %s488, %s489
      %p501 = scmp.eq.s32.totalorder %s49, 1
      %p502 = por %p500, %p501
      %p504 = scmp.ne.s32.totalorder %s489, %s503
      %p505 = scmp.eq.s32.totalorder %s49, 0
      %p506 = por %p504, %p505
      %s508 = sadd.s32 %s507, 1
      %p511 = scmp.eq.s32.totalorder %s43, 1
      %p512 = scmp.ne.s32.totalorder %s507, %s509
      %p513 = scmp.eq.s32.totalorder %s43, 0
      %p514 = por %p512, %p513
      %p515 = scmp.ne.s32.totalorder %s507, %s509
      %p516 = scmp.eq.s32.totalorder %s48, 1
      %p517 = por %p515, %p516
      %p518 = scmp.ne.s32.totalorder %s509, %s510
      %p519 = scmp.eq.s32.totalorder %s48, 0
      %p520 = por %p518, %p519
      %p521 = scmp.ne.s32.totalorder %s509, %s510
      %p522 = scmp.eq.s32.totalorder %s49, 1
      %p523 = por %p521, %p522
      %p525 = scmp.ne.s32.totalorder %s510, %s524
      %p526 = scmp.eq.s32.totalorder %s49, 0
      %p527 = por %p525, %p526
      %s529 = sadd.s32 %s528, 1
      %p532 = scmp.eq.s32.totalorder %s43, 1
      %p533 = scmp.ne.s32.totalorder %s528, %s530
      %p534 = scmp.eq.s32.totalorder %s43, 0
      %p535 = por %p533, %p534
      %p536 = scmp.ne.s32.totalorder %s528, %s530
      %p537 = scmp.eq.s32.totalorder %s48, 1
      %p538 = por %p536, %p537
      %p539 = scmp.ne.s32.totalorder %s530, %s531
      %p540 = scmp.eq.s32.totalorder %s48, 0
      %p541 = por %p539, %p540
      %p542 = scmp.ne.s32.totalorder %s530, %s531
      %p543 = scmp.eq.s32.totalorder %s49, 1
      %p544 = por %p542, %p543
      %p546 = scmp.ne.s32.totalorder %s531, %s545
      %p547 = scmp.eq.s32.totalorder %s49, 0
      %p548 = por %p546, %p547
      %s550 = sadd.s32 %s549, 1
      %p553 = scmp.eq.s32.totalorder %s43, 1
      %p554 = scmp.ne.s32.totalorder %s549, %s551
      %p555 = scmp.eq.s32.totalorder %s43, 0
      %p556 = por %p554, %p555
      %p557 = scmp.ne.s32.totalorder %s549, %s551
      %p558 = scmp.eq.s32.totalorder %s48, 1
      %p559 = por %p557, %p558
      %p560 = scmp.ne.s32.totalorder %s551, %s552
      %p561 = scmp.eq.s32.totalorder %s48, 0
      %p562 = por %p560, %p561
      %p563 = scmp.ne.s32.totalorder %s551, %s552
      %p564 = scmp.eq.s32.totalorder %s49, 1
      %p565 = por %p563, %p564
      %p567 = scmp.ne.s32.totalorder %s552, %s566
      %p568 = scmp.eq.s32.totalorder %s49, 0
      %p569 = por %p567, %p568
      %s571 = sadd.s32 %s570, 1
      %p574 = scmp.eq.s32.totalorder %s43, 1
      %p575 = scmp.ne.s32.totalorder %s570, %s572
      %p576 = scmp.eq.s32.totalorder %s43, 0
      %p577 = por %p575, %p576
      %p578 = scmp.ne.s32.totalorder %s570, %s572
      %p579 = scmp.eq.s32.totalorder %s48, 1
      %p580 = por %p578, %p579
      %p581 = scmp.ne.s32.totalorder %s572, %s573
      %p582 = scmp.eq.s32.totalorder %s48, 0
      %p583 = por %p581, %p582
      %p584 = scmp.ne.s32.totalorder %s572, %s573
      %p585 = scmp.eq.s32.totalorder %s49, 1
      %p586 = por %p584, %p585
      %p588 = scmp.ne.s32.totalorder %s573, %s587
      %p589 = scmp.eq.s32.totalorder %s49, 0
      %p590 = por %p588, %p589
      %s591 = ssub.s32 %s43, %s50
      %p592 = scmp.eq.s32.totalorder %s591, 0
      %s594 = sadd.s32 %s593, 1
      %s595 = scalar_select %p592, %s593, %s594
      %p598 = pneg %p592
      %p599 = scmp.eq.s32.totalorder %s43, 1
      %p600 = por %p598, %p599
      %p601 = scmp.ne.s32.totalorder %s593, %s596
      %p602 = scmp.eq.s32.totalorder %s43, 0
      %p603 = por %p601, %p602
      %p604 = scmp.ne.s32.totalorder %s593, %s596
      %p605 = scmp.eq.s32.totalorder %s48, 1
      %p606 = por %p604, %p605
      %p607 = scmp.ne.s32.totalorder %s596, %s597
      %p608 = scmp.eq.s32.totalorder %s48, 0
      %p609 = por %p607, %p608
      %p610 = scmp.ne.s32.totalorder %s596, %s597
      %p611 = scmp.eq.s32.totalorder %s49, 1
      %p612 = por %p610, %p611
      %p614 = scmp.ne.s32.totalorder %s597, %s613
      %p615 = scmp.eq.s32.totalorder %s49, 0
      %p616 = por %p614, %p615
      %p617 = scmp.le.s32.totalorder 1, %s43
      %p618 = scmp.lt.s32.totalorder %s43, 3
      %p619 = pnand %p617, %p618
      %p620 = pneg %p619
      // Predicated region
      $region9: #{decoder_forward.1} parent=5 // pred_check
        _
      $region10: #{decoder_forward.1} parent=5 // pred_check_branch
        %622 = sbr.rel (%p619) target = $region12
      $region11: #{decoder_forward.1} parent=5 // pred_region
        %s623 = ssub.s32 %s43, 1
        // Predicated region
        $region13: #{decoder_forward.1} parent=11 // pred_check
          %p624 = pneg %p142
        $region14: #{decoder_forward.1} parent=11 // pred_check_branch
          %626 = sbr.rel (%p624) target = $region16
        $region15: #{decoder_forward.1} parent=11 // pred_region
          _
        $region16: #{decoder_forward.1} parent=11 // pred_fallthru
          _
        // Predicated region
        $region17: #{decoder_forward.1} parent=11 // pred_check
          %p627 = pneg %p163
        $region18: #{decoder_forward.1} parent=11 // pred_check_branch
          %629 = sbr.rel (%p627) target = $region20
        $region19: #{decoder_forward.1} parent=11 // pred_region
          _
        $region20: #{decoder_forward.1} parent=11 // pred_fallthru
          _
        // Predicated region
        $region21: #{decoder_forward.1} parent=11 // pred_check
          %p630 = pneg %p184
        $region22: #{decoder_forward.1} parent=11 // pred_check_branch
          %632 = sbr.rel (%p630) target = $region24
        $region23: #{decoder_forward.1} parent=11 // pred_region
          _
        $region24: #{decoder_forward.1} parent=11 // pred_fallthru
          _
        // Predicated region
        $region25: #{decoder_forward.1} parent=11 // pred_check
          %p633 = pneg %p205
        $region26: #{decoder_forward.1} parent=11 // pred_check_branch
          %635 = sbr.rel (%p633) target = $region28
        $region27: #{decoder_forward.1} parent=11 // pred_region
          _
        $region28: #{decoder_forward.1} parent=11 // pred_fallthru
          _
        // Predicated region
        $region29: #{decoder_forward.1} parent=11 // pred_check
          %p636 = pneg %p226
        $region30: #{decoder_forward.1} parent=11 // pred_check_branch
          %638 = sbr.rel (%p636) target = $region32
        $region31: #{decoder_forward.1} parent=11 // pred_region
          _
        $region32: #{decoder_forward.1} parent=11 // pred_fallthru
          _
        // Predicated region
        $region33: #{decoder_forward.1} parent=11 // pred_check
          %p639 = pneg %p247
        $region34: #{decoder_forward.1} parent=11 // pred_check_branch
          %641 = sbr.rel (%p639) target = $region36
        $region35: #{decoder_forward.1} parent=11 // pred_region
          _
        $region36: #{decoder_forward.1} parent=11 // pred_fallthru
          _
        // Predicated region
        $region37: #{decoder_forward.1} parent=11 // pred_check
          %p642 = pneg %p268
        $region38: #{decoder_forward.1} parent=11 // pred_check_branch
          %644 = sbr.rel (%p642) target = $region40
        $region39: #{decoder_forward.1} parent=11 // pred_region
          _
        $region40: #{decoder_forward.1} parent=11 // pred_fallthru
          _
        // Predicated region
        $region41: #{decoder_forward.1} parent=11 // pred_check
          %p645 = pneg %p289
        $region42: #{decoder_forward.1} parent=11 // pred_check_branch
          %647 = sbr.rel (%p645) target = $region44
        $region43: #{decoder_forward.1} parent=11 // pred_region
          _
        $region44: #{decoder_forward.1} parent=11 // pred_fallthru
          _
        // Predicated region
        $region45: #{decoder_forward.1} parent=11 // pred_check
          %p648 = pneg %p310
        $region46: #{decoder_forward.1} parent=11 // pred_check_branch
          %650 = sbr.rel (%p648) target = $region48
        $region47: #{decoder_forward.1} parent=11 // pred_region
          _
        $region48: #{decoder_forward.1} parent=11 // pred_fallthru
          _
        // Predicated region
        $region49: #{decoder_forward.1} parent=11 // pred_check
          %p651 = pneg %p331
        $region50: #{decoder_forward.1} parent=11 // pred_check_branch
          %653 = sbr.rel (%p651) target = $region52
        $region51: #{decoder_forward.1} parent=11 // pred_region
          _
        $region52: #{decoder_forward.1} parent=11 // pred_fallthru
          _
        // Predicated region
        $region53: #{decoder_forward.1} parent=11 // pred_check
          %p654 = pneg %p352
        $region54: #{decoder_forward.1} parent=11 // pred_check_branch
          %656 = sbr.rel (%p654) target = $region56
        $region55: #{decoder_forward.1} parent=11 // pred_region
          _
        $region56: #{decoder_forward.1} parent=11 // pred_fallthru
          _
        // Predicated region
        $region57: #{decoder_forward.1} parent=11 // pred_check
          %p657 = pneg %p373
        $region58: #{decoder_forward.1} parent=11 // pred_check_branch
          %659 = sbr.rel (%p657) target = $region60
        $region59: #{decoder_forward.1} parent=11 // pred_region
          _
        $region60: #{decoder_forward.1} parent=11 // pred_fallthru
          _
        // Predicated region
        $region61: #{decoder_forward.1} parent=11 // pred_check
          %p660 = pneg %p394
        $region62: #{decoder_forward.1} parent=11 // pred_check_branch
          %662 = sbr.rel (%p660) target = $region64
        $region63: #{decoder_forward.1} parent=11 // pred_region
          _
        $region64: #{decoder_forward.1} parent=11 // pred_fallthru
          _
        // Predicated region
        $region65: #{decoder_forward.1} parent=11 // pred_check
          %p663 = pneg %p415
        $region66: #{decoder_forward.1} parent=11 // pred_check_branch
          %665 = sbr.rel (%p663) target = $region68
        $region67: #{decoder_forward.1} parent=11 // pred_region
          _
        $region68: #{decoder_forward.1} parent=11 // pred_fallthru
          _
        // Predicated region
        $region69: #{decoder_forward.1} parent=11 // pred_check
          %p666 = pneg %p436
        $region70: #{decoder_forward.1} parent=11 // pred_check_branch
          %668 = sbr.rel (%p666) target = $region72
        $region71: #{decoder_forward.1} parent=11 // pred_region
          _
        $region72: #{decoder_forward.1} parent=11 // pred_fallthru
          _
        // Predicated region
        $region73: #{decoder_forward.1} parent=11 // pred_check
          %p669 = pneg %p457
        $region74: #{decoder_forward.1} parent=11 // pred_check_branch
          %671 = sbr.rel (%p669) target = $region76
        $region75: #{decoder_forward.1} parent=11 // pred_region
          _
        $region76: #{decoder_forward.1} parent=11 // pred_fallthru
          _
        // Predicated region
        $region77: #{decoder_forward.1} parent=11 // pred_check
          %p672 = pneg %p478
        $region78: #{decoder_forward.1} parent=11 // pred_check_branch
          %674 = sbr.rel (%p672) target = $region80
        $region79: #{decoder_forward.1} parent=11 // pred_region
          _
        $region80: #{decoder_forward.1} parent=11 // pred_fallthru
          _
        // Predicated region
        $region81: #{decoder_forward.1} parent=11 // pred_check
          %p675 = pneg %p499
        $region82: #{decoder_forward.1} parent=11 // pred_check_branch
          %677 = sbr.rel (%p675) target = $region84
        $region83: #{decoder_forward.1} parent=11 // pred_region
          _
        $region84: #{decoder_forward.1} parent=11 // pred_fallthru
          _
        // Predicated region
        $region85: #{decoder_forward.1} parent=11 // pred_check
          %p678 = pneg %p520
        $region86: #{decoder_forward.1} parent=11 // pred_check_branch
          %680 = sbr.rel (%p678) target = $region88
        $region87: #{decoder_forward.1} parent=11 // pred_region
          _
        $region88: #{decoder_forward.1} parent=11 // pred_fallthru
          _
        // Predicated region
        $region89: #{decoder_forward.1} parent=11 // pred_check
          %p681 = pneg %p541
        $region90: #{decoder_forward.1} parent=11 // pred_check_branch
          %683 = sbr.rel (%p681) target = $region92
        $region91: #{decoder_forward.1} parent=11 // pred_region
          _
        $region92: #{decoder_forward.1} parent=11 // pred_fallthru
          _
        // Predicated region
        $region93: #{decoder_forward.1} parent=11 // pred_check
          %p684 = pneg %p562
        $region94: #{decoder_forward.1} parent=11 // pred_check_branch
          %686 = sbr.rel (%p684) target = $region96
        $region95: #{decoder_forward.1} parent=11 // pred_region
          _
        $region96: #{decoder_forward.1} parent=11 // pred_fallthru
          _
        // Predicated region
        $region97: #{decoder_forward.1} parent=11 // pred_check
          %p687 = pneg %p583
        $region98: #{decoder_forward.1} parent=11 // pred_check_branch
          %689 = sbr.rel (%p687) target = $region100
        $region99: #{decoder_forward.1} parent=11 // pred_region
          _
        $region100: #{decoder_forward.1} parent=11 // pred_fallthru
          _
      $region12: #{decoder_forward.1} parent=5 // pred_fallthru
        _
      %p690 = scmp.lt.s32.totalorder %s43, 2
      // Predicated region
      $region101: #{decoder_forward.1} parent=5 // pred_check
        %p691 = pneg %p690
      $region102: #{decoder_forward.1} parent=5 // pred_check_branch
        %693 = sbr.rel (%p691) target = $region104
      $region103: #{decoder_forward.1} parent=5 // pred_region
        // Predicated region
        $region105: #{decoder_forward.1} parent=103 // pred_check
          %p694 = pneg %p63
        $region106: #{decoder_forward.1} parent=103 // pred_check_branch
          %696 = sbr.rel (%p694) target = $region108
        $region107: #{decoder_forward.1} parent=103 // pred_region
          %p697 = scmp.lt.s32.totalorder %s43, 1
          %s698 = scalar_select %p697, %s43, 1
          %s699 = smul.addr %s698, 8
          %s700 = scalar_lea.vmem %s1, %s699
        $region108: #{decoder_forward.1} parent=103 // pred_fallthru
          _
        // Predicated region
        $region109: #{decoder_forward.1} parent=103 // pred_check
          %p701 = pneg %p89
        $region110: #{decoder_forward.1} parent=103 // pred_check_branch
          %703 = sbr.rel (%p701) target = $region112
        $region111: #{decoder_forward.1} parent=103 // pred_region
          %p704 = scmp.lt.s32.totalorder %s43, 1
          %s705 = scalar_select %p704, %s43, 1
          %s706 = smul.addr %s705, 8
          %s707 = scalar_lea.vmem %s2, %s706
        $region112: #{decoder_forward.1} parent=103 // pred_fallthru
          _
        // Predicated region
        $region113: #{decoder_forward.1} parent=103 // pred_check
          %p708 = pneg %p115
        $region114: #{decoder_forward.1} parent=103 // pred_check_branch
          %710 = sbr.rel (%p708) target = $region116
        $region115: #{decoder_forward.1} parent=103 // pred_region
          %p711 = scmp.lt.s32.totalorder %s43, 1
          %s712 = scalar_select %p711, %s43, 1
          %s713 = scalar_lea.vmem %s3, %s712
        $region116: #{decoder_forward.1} parent=103 // pred_fallthru
          _
      $region104: #{decoder_forward.1} parent=5 // pred_fallthru
        _
      %p714 = scmp.le.s32.totalorder 1, %s43
      %p715 = scmp.lt.s32.totalorder %s43, 3
      %p716 = pnand %p714, %p715
      %p717 = pneg %p716
      // Predicated region
      $region117: #{decoder_forward.1} parent=5 // pred_check
        _
      $region118: #{decoder_forward.1} parent=5 // pred_check_branch
        %719 = sbr.rel (%p716) target = $region120
      $region119: #{decoder_forward.1} parent=5 // pred_region
        %s720 = ssub.s32 %s43, 1
        %p721 = scmp.lt.s32.totalorder %s48, 1
        %s722 = scalar_select %p721, %s48, 1
        %s723 = smul.addr %s722, 8
        %s724 = scalar_lea.vmem %s1, %s723
        %p725 = pneg %p69
        %p726 = pneg %p66
        %p727 = scmp.lt.s32.totalorder %s48, 1
        %s728 = scalar_select %p727, %s48, 1
        %s729 = smul.addr %s728, 8
        %s730 = scalar_lea.vmem %s2, %s729
        %p731 = pneg %p95
        %p732 = pneg %p92
        %p733 = scmp.lt.s32.totalorder %s48, 1
        %s734 = scalar_select %p733, %s48, 1
        %s735 = scalar_lea.vmem %s3, %s734
        %p736 = pneg %p121
        %p737 = pneg %p118
        %p738 = pneg %p142
        %p739 = pneg %p139
        %p740 = pneg %p163
        %p741 = pneg %p160
        %p742 = pneg %p184
        %p743 = pneg %p181
        %p744 = pneg %p205
        %p745 = pneg %p202
        %p746 = pneg %p226
        %p747 = pneg %p223
        %p748 = pneg %p247
        %p749 = pneg %p244
        %p750 = pneg %p268
        %p751 = pneg %p265
        %p752 = pneg %p289
        %p753 = pneg %p286
        %p754 = pneg %p310
        %p755 = pneg %p307
        %p756 = pneg %p331
        %p757 = pneg %p328
        %p758 = pneg %p352
        %p759 = pneg %p349
        %p760 = pneg %p373
        %p761 = pneg %p370
        %p762 = pneg %p394
        %p763 = pneg %p391
        %p764 = pneg %p415
        %p765 = pneg %p412
        %p766 = pneg %p436
        %p767 = pneg %p433
        %p768 = pneg %p457
        %p769 = pneg %p454
        %p770 = pneg %p478
        %p771 = pneg %p475
        %p772 = pneg %p499
        %p773 = pneg %p496
        %p774 = pneg %p520
        %p775 = pneg %p517
        %p776 = pneg %p541
        %p777 = pneg %p538
        %p778 = pneg %p562
        %p779 = pneg %p559
        %p780 = pneg %p583
        %p781 = pneg %p580
        %p782 = pneg %p609
        %p783 = pneg %p606
        %s784 = sand.u32 %s596, 1
        %s785 = scalar_lea.sflag [#allocation5], %s784
        %s786 = sand.u32 %s596, 1
        %s787 = smul.addr %s786, 8
        %s788 = scalar_lea.vmem [#allocation4], %s787
        %p789 = scmp.lt.s32.totalorder %s48, 1
        %s790 = scalar_select %p789, %s48, 1
        %s791 = smul.addr %s790, 8
        %s792 = scalar_lea.vmem %s1, %s791
        %p793 = scmp.lt.s32.totalorder %s48, 1
        %s794 = scalar_select %p793, %s48, 1
        %s795 = smul.addr %s794, 8
        %s796 = scalar_lea.vmem %s2, %s795
        %p797 = scmp.lt.s32.totalorder %s48, 1
        %s798 = scalar_select %p797, %s48, 1
        %s799 = scalar_lea.vmem %s3, %s798
        %v800 = vld [vmem:[%s792] sm:$0xff]
        %v801 = vld [vmem:[%s796] sm:$0xff]
        %v802 = vld [vmem:[%s4] sm:$0x1]
        %v803 = vld [vmem:[%s5] sm:$0x1]
        %v804 = vld [vmem:[%s6] sm:$0x1]
        %v805 = vld [vmem:[%s7] sm:$0x1]
        %v806 = vld [vmem:[%s8] sm:$0x1]
        %v807 = vld [vmem:[%s9] sm:$0x1]
        %v808 = vld [vmem:[%s10] sm:$0xff]
        %v809 = vld [vmem:[%s10 + $0x8] sm:$0xff]
        %v810 = vld [vmem:[%s10 + $0x10] sm:$0xff]
        %v811 = vld [vmem:[%s10 + $0x18] sm:$0xff]
        %v812 = vld [vmem:[%s10 + $0x20] sm:$0xff]
        %v813 = vld [vmem:[%s10 + $0x28] sm:$0xff]
        %v814 = vld [vmem:[%s10 + $0x30] sm:$0xff]
        %v815 = vld [vmem:[%s10 + $0x38] sm:$0xff]
        %v816 = vld [vmem:[%s10 + $0x40] sm:$0xff]
        %v817 = vld [vmem:[%s10 + $0x48] sm:$0xff]
        %v818 = vld [vmem:[%s10 + $0x50] sm:$0xff]
        %v819 = vld [vmem:[%s10 + $0x58] sm:$0xff]
        %v820 = vld [vmem:[%s10 + $0x60] sm:$0xff]
        %v821 = vld [vmem:[%s10 + $0x68] sm:$0xff]
        %v822 = vld [vmem:[%s10 + $0x70] sm:$0xff]
        %v823 = vld [vmem:[%s10 + $0x78] sm:$0xff]
        %v824 = vld [vmem:[%s10 + $0x80] sm:$0xff]
        %v825 = vld [vmem:[%s10 + $0x88] sm:$0xff]
        %v826 = vld [vmem:[%s10 + $0x90] sm:$0xff]
        %v827 = vld [vmem:[%s10 + $0x98] sm:$0xff]
        %v828 = vld [vmem:[%s10 + $0xa0] sm:$0xff]
        %v829 = vld [vmem:[%s10 + $0xa8] sm:$0xff]
        %v830 = vld [vmem:[%s10 + $0xb0] sm:$0xff]
        %v831 = vld [vmem:[%s10 + $0xb8] sm:$0xff]
        %v832 = vld [vmem:[%s10 + $0xc0] sm:$0xff]
        %v833 = vld [vmem:[%s10 + $0xc8] sm:$0xff]
        %v834 = vld [vmem:[%s10 + $0xd0] sm:$0xff]
        %v835 = vld [vmem:[%s10 + $0xd8] sm:$0xff]
        %v836 = vld [vmem:[%s10 + $0xe0] sm:$0xff]
        %v837 = vld [vmem:[%s10 + $0xe8] sm:$0xff]
        %v838 = vld [vmem:[%s10 + $0xf0] sm:$0xff]
        %v839 = vld [vmem:[%s10 + $0xf8] sm:$0xff]
        %v840 = vld [vmem:[%s10 + $0x100] sm:$0xff]
        %v841 = vld [vmem:[%s10 + $0x108] sm:$0xff]
        %v842 = vld [vmem:[%s10 + $0x110] sm:$0xff]
        %v843 = vld [vmem:[%s10 + $0x118] sm:$0xff]
        %v844 = vld [vmem:[%s10 + $0x120] sm:$0xff]
        %v845 = vld [vmem:[%s10 + $0x128] sm:$0xff]
        %v846 = vld [vmem:[%s10 + $0x130] sm:$0xff]
        %v847 = vld [vmem:[%s10 + $0x138] sm:$0xff]
        %v848 = vld [vmem:[%s10 + $0x140] sm:$0xff]
        %v849 = vld [vmem:[%s10 + $0x148] sm:$0xff]
        %v850 = vld [vmem:[%s10 + $0x150] sm:$0xff]
        %v851 = vld [vmem:[%s10 + $0x158] sm:$0xff]
        %v852 = vld [vmem:[%s10 + $0x160] sm:$0xff]
        %v853 = vld [vmem:[%s10 + $0x168] sm:$0xff]
        %v854 = vld [vmem:[%s10 + $0x170] sm:$0xff]
        %v855 = vld [vmem:[%s10 + $0x178] sm:$0xff]
        %v856 = vld [vmem:[%s11] sm:$0x1]
        %v857 = vld [vmem:[%s11 + $0x1] sm:$0x1]
        %v858 = vld [vmem:[%s11 + $0x2] sm:$0x1]
        %v859 = vld [vmem:[%s11 + $0x3] sm:$0x1]
        %v860 = vld [vmem:[%s11 + $0x4] sm:$0x1]
        %v861 = vld [vmem:[%s11 + $0x5] sm:$0x1]
        %v862 = vld [vmem:[%s11 + $0x6] sm:$0x1]
        %v863 = vld [vmem:[%s11 + $0x7] sm:$0x1]
        %v864 = vld [vmem:[%s11 + $0x8] sm:$0x1]
        %v865 = vld [vmem:[%s11 + $0x9] sm:$0x1]
        %v866 = vld [vmem:[%s11 + $0xa] sm:$0x1]
        %v867 = vld [vmem:[%s11 + $0xb] sm:$0x1]
        %v868 = vld [vmem:[%s12] sm:$0xff]
        %v869 = vld [vmem:[%s12 + $0x8] sm:$0xff]
        %v870 = vld [vmem:[%s12 + $0x10] sm:$0xff]
        %v871 = vld [vmem:[%s12 + $0x18] sm:$0xff]
        %v872 = vld [vmem:[%s13] sm:$0x1]
        %v873 = vld [vmem:[%s14] sm:$0xff]
        %v874 = vld [vmem:[%s14 + $0x8] sm:$0xff]
        %v875 = vld [vmem:[%s14 + $0x10] sm:$0xff]
        %v876 = vld [vmem:[%s14 + $0x18] sm:$0xff]
        %v877 = vld [vmem:[%s14 + $0x20] sm:$0xff]
        %v878 = vld [vmem:[%s14 + $0x28] sm:$0xff]
        %v879 = vld [vmem:[%s14 + $0x30] sm:$0xff]
        %v880 = vld [vmem:[%s14 + $0x38] sm:$0xff]
        %v881 = vld [vmem:[%s14 + $0x40] sm:$0xff]
        %v882 = vld [vmem:[%s14 + $0x48] sm:$0xff]
        %v883 = vld [vmem:[%s14 + $0x50] sm:$0xff]
        %v884 = vld [vmem:[%s14 + $0x58] sm:$0xff]
        %v885 = vld [vmem:[%s14 + $0x60] sm:$0xff]
        %v886 = vld [vmem:[%s14 + $0x68] sm:$0xff]
        %v887 = vld [vmem:[%s14 + $0x70] sm:$0xff]
        %v888 = vld [vmem:[%s14 + $0x78] sm:$0xff]
        %v889 = vld [vmem:[%s15] sm:$0x1]
        %v890 = vld [vmem:[%s15 + $0x1] sm:$0x1]
        %v891 = vld [vmem:[%s15 + $0x2] sm:$0x1]
        %v892 = vld [vmem:[%s15 + $0x3] sm:$0x1]
        %v893 = vld [vmem:[%s16] sm:$0xff]
        %v894 = vld [vmem:[%s16 + $0x8] sm:$0xff]
        %v895 = vld [vmem:[%s16 + $0x10] sm:$0xff]
        %v896 = vld [vmem:[%s16 + $0x18] sm:$0xff]
        %v897 = vld [vmem:[%s16 + $0x20] sm:$0xff]
        %v898 = vld [vmem:[%s16 + $0x28] sm:$0xff]
        %v899 = vld [vmem:[%s16 + $0x30] sm:$0xff]
        %v900 = vld [vmem:[%s16 + $0x38] sm:$0xff]
        %v901 = vld [vmem:[%s16 + $0x40] sm:$0xff]
        %v902 = vld [vmem:[%s16 + $0x48] sm:$0xff]
        %v903 = vld [vmem:[%s16 + $0x50] sm:$0xff]
        %v904 = vld [vmem:[%s16 + $0x58] sm:$0xff]
        %v905 = vld [vmem:[%s16 + $0x60] sm:$0xff]
        %v906 = vld [vmem:[%s16 + $0x68] sm:$0xff]
        %v907 = vld [vmem:[%s16 + $0x70] sm:$0xff]
        %v908 = vld [vmem:[%s16 + $0x78] sm:$0xff]
        %v909 = vld [vmem:[%s16 + $0x80] sm:$0xff]
        %v910 = vld [vmem:[%s16 + $0x88] sm:$0xff]
        %v911 = vld [vmem:[%s16 + $0x90] sm:$0xff]
        %v912 = vld [vmem:[%s16 + $0x98] sm:$0xff]
        %v913 = vld [vmem:[%s16 + $0xa0] sm:$0xff]
        %v914 = vld [vmem:[%s16 + $0xa8] sm:$0xff]
        %v915 = vld [vmem:[%s16 + $0xb0] sm:$0xff]
        %v916 = vld [vmem:[%s16 + $0xb8] sm:$0xff]
        %v917 = vld [vmem:[%s16 + $0xc0] sm:$0xff]
        %v918 = vld [vmem:[%s16 + $0xc8] sm:$0xff]
        %v919 = vld [vmem:[%s16 + $0xd0] sm:$0xff]
        %v920 = vld [vmem:[%s16 + $0xd8] sm:$0xff]
        %v921 = vld [vmem:[%s16 + $0xe0] sm:$0xff]
        %v922 = vld [vmem:[%s16 + $0xe8] sm:$0xff]
        %v923 = vld [vmem:[%s16 + $0xf0] sm:$0xff]
        %v924 = vld [vmem:[%s16 + $0xf8] sm:$0xff]
        %v925 = vld [vmem:[%s17] sm:$0x1]
        %v926 = vld [vmem:[%s17 + $0x1] sm:$0x1]
        %v927 = vld [vmem:[%s17 + $0x2] sm:$0x1]
        %v928 = vld [vmem:[%s17 + $0x3] sm:$0x1]
        %v929 = vld [vmem:[%s17 + $0x4] sm:$0x1]
        %v930 = vld [vmem:[%s17 + $0x5] sm:$0x1]
        %v931 = vld [vmem:[%s17 + $0x6] sm:$0x1]
        %v932 = vld [vmem:[%s17 + $0x7] sm:$0x1]
        %v933 = vld [vmem:[%s18] sm:$0xff]
        %v934 = vld [vmem:[%s18 + $0x8] sm:$0xff]
        %v935 = vld [vmem:[%s18 + $0x10] sm:$0xff]
        %v936 = vld [vmem:[%s18 + $0x18] sm:$0xff]
        %v937 = vld [vmem:[%s19] sm:$0x1]
        %v938 = vld [vmem:[%s20] sm:$0xff]
        %v939 = vld [vmem:[%s20 + $0x8] sm:$0xff]
        %v940 = vld [vmem:[%s20 + $0x10] sm:$0xff]
        %v941 = vld [vmem:[%s20 + $0x18] sm:$0xff]
        %s942 = scalar_lea.vmem %s20, 32
        %v943 = vld [vmem:[%s942] sm:$0xff]
        %v944 = vld [vmem:[%s942 + $0x8] sm:$0xff]
        %v945 = vld [vmem:[%s942 + $0x10] sm:$0xff]
        %v946 = vld [vmem:[%s942 + $0x18] sm:$0xff]
        %s947 = scalar_lea.vmem %s20, 64
        %v948 = vld [vmem:[%s947] sm:$0xff]
        %v949 = vld [vmem:[%s947 + $0x8] sm:$0xff]
        %v950 = vld [vmem:[%s947 + $0x10] sm:$0xff]
        %v951 = vld [vmem:[%s947 + $0x18] sm:$0xff]
        %v952 = vld [vmem:[%s22] sm:$0xff]
        %v953 = vld [vmem:[%s22 + $0x8] sm:$0xff]
        %v954 = vld [vmem:[%s22 + $0x10] sm:$0xff]
        %v955 = vld [vmem:[%s22 + $0x18] sm:$0xff]
        %v956 = vld [vmem:[%s22 + $0x20] sm:$0xff]
        %v957 = vld [vmem:[%s22 + $0x28] sm:$0xff]
        %v958 = vld [vmem:[%s22 + $0x30] sm:$0xff]
        %v959 = vld [vmem:[%s22 + $0x38] sm:$0xff]
        %s960 = scalar_lea.vmem %s22, 64
        %v961 = vld [vmem:[%s960] sm:$0xff]
        %v962 = vld [vmem:[%s960 + $0x8] sm:$0xff]
        %v963 = vld [vmem:[%s960 + $0x10] sm:$0xff]
        %v964 = vld [vmem:[%s960 + $0x18] sm:$0xff]
        %v965 = vld [vmem:[%s960 + $0x20] sm:$0xff]
        %v966 = vld [vmem:[%s960 + $0x28] sm:$0xff]
        %v967 = vld [vmem:[%s960 + $0x30] sm:$0xff]
        %v968 = vld [vmem:[%s960 + $0x38] sm:$0xff]
        %s969 = scalar_lea.vmem %s22, 128
        %v970 = vld [vmem:[%s969] sm:$0xff]
        %v971 = vld [vmem:[%s969 + $0x8] sm:$0xff]
        %v972 = vld [vmem:[%s969 + $0x10] sm:$0xff]
        %v973 = vld [vmem:[%s969 + $0x18] sm:$0xff]
        %v974 = vld [vmem:[%s969 + $0x20] sm:$0xff]
        %v975 = vld [vmem:[%s969 + $0x28] sm:$0xff]
        %v976 = vld [vmem:[%s969 + $0x30] sm:$0xff]
        %v977 = vld [vmem:[%s969 + $0x38] sm:$0xff]
        %v978 = vld [vmem:[%s21] sm:$0x1]
        %v979 = vld [vmem:[%s23] sm:$0x1]
        %v980 = vld [vmem:[%s24] sm:$0x1]
        %v981 = vld [vmem:[%s25] sm:$0x1]
        %s982 = sld [smem:[#allocation3 + %s48]]
        %v983 = vlaneseq
        %v984 = vshrl.u32 %v983, 7
        %v985 = vlaneseq
        %v986 = vand.u32 %v985, 127
        %vm987 = vcmp.le.s32.totalorder %v986, %v984
        %v988 = vstv %s982
        %vm989 = vcmp.lt.s32.totalorder %v984, %v988
        %vm990 = vmand %vm987, %vm989
        %v991 = vsel %vm990, 0.0, -1e+09
        %v992 = vld [vmem:[%s799] sm:$0x1]
        %vm993 = vcmp.gt.s32.totalorder %v984, 0
        %v994 = vsel %vm993, 1, 0
        %v995 = vcvt.s32.f32 %v994
        %vm996 = vcmp.lt.s32.totalorder %v984, 7
        %v997 = vsel %vm996, 1, 0
        %v998 = vcvt.s32.f32 %v997
        %v1007 = vperm.slane %v925, 0
        %v1008 = vperm.slane %v926, 0
        %v1009 = vperm.slane %v927, 0
        %v1010 = vperm.slane %v928, 0
        %v1011 = vperm.slane %v929, 0
        %v1012 = vperm.slane %v930, 0
        %v1013 = vperm.slane %v931, 0
        %v1014 = vperm.slane %v932, 0
        %vm1023 = vcmask 261120
        %v1025 = vsel %vm1023, %v801, 0
        %1027 = vmatpush.msra.mxu0 0.0
        %1028 = vmatpush.msra.mxu0 0.0
        %1029 = vmatpush.msra.mxu0 0.0
        %1030 = vmatpush.msra.mxu0 0.0
        %1031 = vmatpush.msra.mxu0 0.0
        %1032 = vmatpush.msra.mxu0 0.0
        %1033 = vmatpush.msra.mxu0 0.0
        %1034 = vmatpush.msra.mxu0 0.0
        %1035 = vmatpush.msra.mxu0 0.0
        %1036 = vmatpush.msra.mxu0 0.0
        %1037 = vmatpush.msra.mxu0 0.0
        %1038 = vmatpush.msra.mxu0 0.0
        %1039 = vmatpush.msra.mxu0 %v896
        %1040 = vmatpush.msra.mxu0 %v895
        %1041 = vmatpush.msra.mxu0 %v894
        %1042 = vmatpush.msra.mxu0 %v893
        %1043 = vmatmul.f32.gmra.mxu0 %v1025
        %v1044 = vpop.f32.mrf.mxu0
        %v1045 = vadd.f32 %v1007, %v1044
        %1046 = vdwg.mxu0
        %1047 = vmatpush.msra.mxu0 0.0
        %1048 = vmatpush.msra.mxu0 0.0
        %1049 = vmatpush.msra.mxu0 0.0
        %1050 = vmatpush.msra.mxu0 0.0
        %1051 = vmatpush.msra.mxu0 0.0
        %1052 = vmatpush.msra.mxu0 0.0
        %1053 = vmatpush.msra.mxu0 0.0
        %1054 = vmatpush.msra.mxu0 0.0
        %1055 = vmatpush.msra.mxu0 0.0
        %1056 = vmatpush.msra.mxu0 0.0
        %1057 = vmatpush.msra.mxu0 0.0
        %1058 = vmatpush.msra.mxu0 0.0
        %1059 = vmatpush.msra.mxu0 %v900
        %1060 = vmatpush.msra.mxu0 %v899
        %1061 = vmatpush.msra.mxu0 %v898
        %1062 = vmatpush.msra.mxu0 %v897
        %1063 = vmatmul.f32.gmra.mxu0 %v1025
        %v1064 = vpop.f32.mrf.mxu0
        %v1065 = vadd.f32 %v1008, %v1064
        %1066 = vdwg.mxu0
        %1067 = vmatpush.msra.mxu0 0.0
        %1068 = vmatpush.msra.mxu0 0.0
        %1069 = vmatpush.msra.mxu0 0.0
        %1070 = vmatpush.msra.mxu0 0.0
        %1071 = vmatpush.msra.mxu0 0.0
        %1072 = vmatpush.msra.mxu0 0.0
        %1073 = vmatpush.msra.mxu0 0.0
        %1074 = vmatpush.msra.mxu0 0.0
        %1075 = vmatpush.msra.mxu0 0.0
        %1076 = vmatpush.msra.mxu0 0.0
        %1077 = vmatpush.msra.mxu0 0.0
        %1078 = vmatpush.msra.mxu0 0.0
        %1079 = vmatpush.msra.mxu0 %v904
        %1080 = vmatpush.msra.mxu0 %v903
        %1081 = vmatpush.msra.mxu0 %v902
        %1082 = vmatpush.msra.mxu0 %v901
        %1083 = vmatmul.f32.gmra.mxu0 %v1025
        %v1084 = vpop.f32.mrf.mxu0
        %v1085 = vadd.f32 %v1009, %v1084
        %1086 = vdwg.mxu0
        %1087 = vmatpush.msra.mxu0 0.0
        %1088 = vmatpush.msra.mxu0 0.0
        %1089 = vmatpush.msra.mxu0 0.0
        %1090 = vmatpush.msra.mxu0 0.0
        %1091 = vmatpush.msra.mxu0 0.0
        %1092 = vmatpush.msra.mxu0 0.0
        %1093 = vmatpush.msra.mxu0 0.0
        %1094 = vmatpush.msra.mxu0 0.0
        %1095 = vmatpush.msra.mxu0 0.0
        %1096 = vmatpush.msra.mxu0 0.0
        %1097 = vmatpush.msra.mxu0 0.0
        %1098 = vmatpush.msra.mxu0 0.0
        %1099 = vmatpush.msra.mxu0 %v908
        %1100 = vmatpush.msra.mxu0 %v907
        %1101 = vmatpush.msra.mxu0 %v906
        %1102 = vmatpush.msra.mxu0 %v905
        %1103 = vmatmul.f32.gmra.mxu0 %v1025
        %v1104 = vpop.f32.mrf.mxu0
        %v1105 = vadd.f32 %v1010, %v1104
        %1106 = vdwg.mxu0
        %1107 = vmatpush.msra.mxu0 0.0
        %1108 = vmatpush.msra.mxu0 0.0
        %1109 = vmatpush.msra.mxu0 0.0
        %1110 = vmatpush.msra.mxu0 0.0
        %1111 = vmatpush.msra.mxu0 0.0
        %1112 = vmatpush.msra.mxu0 0.0
        %1113 = vmatpush.msra.mxu0 0.0
        %1114 = vmatpush.msra.mxu0 0.0
        %1115 = vmatpush.msra.mxu0 0.0
        %1116 = vmatpush.msra.mxu0 0.0
        %1117 = vmatpush.msra.mxu0 0.0
        %1118 = vmatpush.msra.mxu0 0.0
        %1119 = vmatpush.msra.mxu0 %v912
        %1120 = vmatpush.msra.mxu0 %v911
        %1121 = vmatpush.msra.mxu0 %v910
        %1122 = vmatpush.msra.mxu0 %v909
        %1123 = vmatmul.f32.gmra.mxu0 %v1025
        %v1124 = vpop.f32.mrf.mxu0
        %v1125 = vadd.f32 %v1011, %v1124
        %1126 = vdwg.mxu0
        %1127 = vmatpush.msra.mxu0 0.0
        %1128 = vmatpush.msra.mxu0 0.0
        %1129 = vmatpush.msra.mxu0 0.0
        %1130 = vmatpush.msra.mxu0 0.0
        %1131 = vmatpush.msra.mxu0 0.0
        %1132 = vmatpush.msra.mxu0 0.0
        %1133 = vmatpush.msra.mxu0 0.0
        %1134 = vmatpush.msra.mxu0 0.0
        %1135 = vmatpush.msra.mxu0 0.0
        %1136 = vmatpush.msra.mxu0 0.0
        %1137 = vmatpush.msra.mxu0 0.0
        %1138 = vmatpush.msra.mxu0 0.0
        %1139 = vmatpush.msra.mxu0 %v916
        %1140 = vmatpush.msra.mxu0 %v915
        %1141 = vmatpush.msra.mxu0 %v914
        %1142 = vmatpush.msra.mxu0 %v913
        %1143 = vmatmul.f32.gmra.mxu0 %v1025
        %v1144 = vpop.f32.mrf.mxu0
        %v1145 = vadd.f32 %v1012, %v1144
        %1146 = vdwg.mxu0
        %1147 = vmatpush.msra.mxu0 0.0
        %1148 = vmatpush.msra.mxu0 0.0
        %1149 = vmatpush.msra.mxu0 0.0
        %1150 = vmatpush.msra.mxu0 0.0
        %1151 = vmatpush.msra.mxu0 0.0
        %1152 = vmatpush.msra.mxu0 0.0
        %1153 = vmatpush.msra.mxu0 0.0
        %1154 = vmatpush.msra.mxu0 0.0
        %1155 = vmatpush.msra.mxu0 0.0
        %1156 = vmatpush.msra.mxu0 0.0
        %1157 = vmatpush.msra.mxu0 0.0
        %1158 = vmatpush.msra.mxu0 0.0
        %1159 = vmatpush.msra.mxu0 %v920
        %1160 = vmatpush.msra.mxu0 %v919
        %1161 = vmatpush.msra.mxu0 %v918
        %1162 = vmatpush.msra.mxu0 %v917
        %1163 = vmatmul.f32.gmra.mxu0 %v1025
        %v1164 = vpop.f32.mrf.mxu0
        %v1165 = vadd.f32 %v1013, %v1164
        %1166 = vdwg.mxu0
        %1167 = vmatpush.msra.mxu0 0.0
        %1168 = vmatpush.msra.mxu0 0.0
        %1169 = vmatpush.msra.mxu0 0.0
        %1170 = vmatpush.msra.mxu0 0.0
        %1171 = vmatpush.msra.mxu0 0.0
        %1172 = vmatpush.msra.mxu0 0.0
        %1173 = vmatpush.msra.mxu0 0.0
        %1174 = vmatpush.msra.mxu0 0.0
        %1175 = vmatpush.msra.mxu0 0.0
        %1176 = vmatpush.msra.mxu0 0.0
        %1177 = vmatpush.msra.mxu0 0.0
        %1178 = vmatpush.msra.mxu0 0.0
        %1179 = vmatpush.msra.mxu0 %v924
        %1180 = vmatpush.msra.mxu0 %v923
        %1181 = vmatpush.msra.mxu0 %v922
        %1182 = vmatpush.msra.mxu0 %v921
        %1183 = vmatmul.f32.gmra.mxu0 %v1025
        %v1184 = vpop.f32.mrf.mxu0
        %v1185 = vadd.f32 %v1014, %v1184
        %1186 = vdwg.mxu0
        %v1187 = vsel %vm1023, %v800, 0.0
        %1188 = vadd.xlane.f32.xlu0 %v1187
        %v1189 = vpop.xlane.xlu0 %1188
        %v1190 = vrcp.pop 32.0
        %v1191 = vmul.f32 32.0, %v1190
        %v1192 = vsub.f32 1.0, %v1191
        %v1193 = vmul.f32 %v1190, %v1192
        %v1194 = vadd.f32 %v1190, %v1193
        %vm1195 = vweird.f32 %v1190
        %v1196 = vsel %vm1195, %v1190, %v1194
        %v1197 = vmul.f32 %v1189, %v1196
        %v1198 = vsub.f32 %v800, %v1197
        %v1199 = vmul.f32 %v1198, %v1198
        %v1200 = vsel %vm1023, %v1199, 0.0
        %1201 = vadd.xlane.f32.xlu0 %v1200
        %v1202 = vpop.xlane.xlu0 %1201
        %v1203 = vmul.f32 %v1202, %v1196
        %v1204 = vadd.f32 %v1203, 1e-06
        %v1205 = vrsqrt.pop %v1204
        %v1206 = vmul.f32 %v1205, %v1204
        %v1207 = vmul.f32 %v1206, %v1205
        %v1208 = vmul.f32 0.5, %v1207
        %v1209 = vsub.f32 1.5, %v1208
        %v1210 = vmul.f32 %v1205, %v1209
        %vm1211 = vweird.f32 %v1204
        %vm1212 = vweird.f32 %v1205
        %vm1213 = vmor %vm1211, %vm1212
        %v1214 = vsel %vm1213, %v1205, %v1210
        %v1215 = vmul.f32 %v1198, %v1214
        %v1217 = vperm.slane %v802, 0
        %v1219 = vmul.f32 %v1215, %v1217
        %v1221 = vperm.slane %v803, 0
        %v1223 = vadd.f32 %v1219, %v1221
        %v1236 = vperm.slane %v856, 0
        %v1237 = vperm.slane %v857, 0
        %v1238 = vperm.slane %v858, 0
        %v1239 = vperm.slane %v859, 0
        %v1240 = vperm.slane %v860, 0
        %v1241 = vperm.slane %v861, 0
        %v1242 = vperm.slane %v862, 0
        %v1243 = vperm.slane %v863, 0
        %v1244 = vperm.slane %v864, 0
        %v1245 = vperm.slane %v865, 0
        %v1246 = vperm.slane %v866, 0
        %v1247 = vperm.slane %v867, 0
        %v1261 = vsel %vm1023, %v1223, 0
        %1263 = vmatpush.msra.mxu0 0.0
        %1264 = vmatpush.msra.mxu0 0.0
        %1265 = vmatpush.msra.mxu0 0.0
        %1266 = vmatpush.msra.mxu0 0.0
        %1267 = vmatpush.msra.mxu0 0.0
        %1268 = vmatpush.msra.mxu0 0.0
        %1269 = vmatpush.msra.mxu0 0.0
        %1270 = vmatpush.msra.mxu0 0.0
        %1271 = vmatpush.msra.mxu0 0.0
        %1272 = vmatpush.msra.mxu0 0.0
        %1273 = vmatpush.msra.mxu0 0.0
        %1274 = vmatpush.msra.mxu0 0.0
        %1275 = vmatpush.msra.mxu0 %v811
        %1276 = vmatpush.msra.mxu0 %v810
        %1277 = vmatpush.msra.mxu0 %v809
        %1278 = vmatpush.msra.mxu0 %v808
        %1279 = vmatmul.f32.gmra.mxu0 %v1261
        %v1280 = vpop.f32.mrf.mxu0
        %v1281 = vadd.f32 %v1236, %v1280
        %1282 = vdwg.mxu0
        %1283 = vmatpush.msra.mxu0 0.0
        %1284 = vmatpush.msra.mxu0 0.0
        %1285 = vmatpush.msra.mxu0 0.0
        %1286 = vmatpush.msra.mxu0 0.0
        %1287 = vmatpush.msra.mxu0 0.0
        %1288 = vmatpush.msra.mxu0 0.0
        %1289 = vmatpush.msra.mxu0 0.0
        %1290 = vmatpush.msra.mxu0 0.0
        %1291 = vmatpush.msra.mxu0 0.0
        %1292 = vmatpush.msra.mxu0 0.0
        %1293 = vmatpush.msra.mxu0 0.0
        %1294 = vmatpush.msra.mxu0 0.0
        %1295 = vmatpush.msra.mxu0 %v815
        %1296 = vmatpush.msra.mxu0 %v814
        %1297 = vmatpush.msra.mxu0 %v813
        %1298 = vmatpush.msra.mxu0 %v812
        %1299 = vmatmul.f32.gmra.mxu0 %v1261
        %v1300 = vpop.f32.mrf.mxu0
        %v1301 = vadd.f32 %v1237, %v1300
        %1302 = vdwg.mxu0
        %1303 = vmatpush.msra.mxu0 0.0
        %1304 = vmatpush.msra.mxu0 0.0
        %1305 = vmatpush.msra.mxu0 0.0
        %1306 = vmatpush.msra.mxu0 0.0
        %1307 = vmatpush.msra.mxu0 0.0
        %1308 = vmatpush.msra.mxu0 0.0
        %1309 = vmatpush.msra.mxu0 0.0
        %1310 = vmatpush.msra.mxu0 0.0
        %1311 = vmatpush.msra.mxu0 0.0
        %1312 = vmatpush.msra.mxu0 0.0
        %1313 = vmatpush.msra.mxu0 0.0
        %1314 = vmatpush.msra.mxu0 0.0
        %1315 = vmatpush.msra.mxu0 %v819
        %1316 = vmatpush.msra.mxu0 %v818
        %1317 = vmatpush.msra.mxu0 %v817
        %1318 = vmatpush.msra.mxu0 %v816
        %1319 = vmatmul.f32.gmra.mxu0 %v1261
        %v1320 = vpop.f32.mrf.mxu0
        %v1321 = vadd.f32 %v1238, %v1320
        %1322 = vdwg.mxu0
        %1323 = vmatpush.msra.mxu0 0.0
        %1324 = vmatpush.msra.mxu0 0.0
        %1325 = vmatpush.msra.mxu0 0.0
        %1326 = vmatpush.msra.mxu0 0.0
        %1327 = vmatpush.msra.mxu0 0.0
        %1328 = vmatpush.msra.mxu0 0.0
        %1329 = vmatpush.msra.mxu0 0.0
        %1330 = vmatpush.msra.mxu0 0.0
        %1331 = vmatpush.msra.mxu0 0.0
        %1332 = vmatpush.msra.mxu0 0.0
        %1333 = vmatpush.msra.mxu0 0.0
        %1334 = vmatpush.msra.mxu0 0.0
        %1335 = vmatpush.msra.mxu0 %v823
        %1336 = vmatpush.msra.mxu0 %v822
        %1337 = vmatpush.msra.mxu0 %v821
        %1338 = vmatpush.msra.mxu0 %v820
        %1339 = vmatmul.f32.gmra.mxu0 %v1261
        %v1340 = vpop.f32.mrf.mxu0
        %v1341 = vadd.f32 %v1239, %v1340
        %1342 = vdwg.mxu0
        %1343 = vmatpush.msra.mxu0 0.0
        %1344 = vmatpush.msra.mxu0 0.0
        %1345 = vmatpush.msra.mxu0 0.0
        %1346 = vmatpush.msra.mxu0 0.0
        %1347 = vmatpush.msra.mxu0 0.0
        %1348 = vmatpush.msra.mxu0 0.0
        %1349 = vmatpush.msra.mxu0 0.0
        %1350 = vmatpush.msra.mxu0 0.0
        %1351 = vmatpush.msra.mxu0 0.0
        %1352 = vmatpush.msra.mxu0 0.0
        %1353 = vmatpush.msra.mxu0 0.0
        %1354 = vmatpush.msra.mxu0 0.0
        %1355 = vmatpush.msra.mxu0 %v827
        %1356 = vmatpush.msra.mxu0 %v826
        %1357 = vmatpush.msra.mxu0 %v825
        %1358 = vmatpush.msra.mxu0 %v824
        %1359 = vmatmul.f32.gmra.mxu0 %v1261
        %v1360 = vpop.f32.mrf.mxu0
        %v1361 = vadd.f32 %v1240, %v1360
        %1362 = vdwg.mxu0
        %1363 = vmatpush.msra.mxu0 0.0
        %1364 = vmatpush.msra.mxu0 0.0
        %1365 = vmatpush.msra.mxu0 0.0
        %1366 = vmatpush.msra.mxu0 0.0
        %1367 = vmatpush.msra.mxu0 0.0
        %1368 = vmatpush.msra.mxu0 0.0
        %1369 = vmatpush.msra.mxu0 0.0
        %1370 = vmatpush.msra.mxu0 0.0
        %1371 = vmatpush.msra.mxu0 0.0
        %1372 = vmatpush.msra.mxu0 0.0
        %1373 = vmatpush.msra.mxu0 0.0
        %1374 = vmatpush.msra.mxu0 0.0
        %1375 = vmatpush.msra.mxu0 %v831
        %1376 = vmatpush.msra.mxu0 %v830
        %1377 = vmatpush.msra.mxu0 %v829
        %1378 = vmatpush.msra.mxu0 %v828
        %1379 = vmatmul.f32.gmra.mxu0 %v1261
        %v1380 = vpop.f32.mrf.mxu0
        %v1381 = vadd.f32 %v1241, %v1380
        %1382 = vdwg.mxu0
        %1383 = vmatpush.msra.mxu0 0.0
        %1384 = vmatpush.msra.mxu0 0.0
        %1385 = vmatpush.msra.mxu0 0.0
        %1386 = vmatpush.msra.mxu0 0.0
        %1387 = vmatpush.msra.mxu0 0.0
        %1388 = vmatpush.msra.mxu0 0.0
        %1389 = vmatpush.msra.mxu0 0.0
        %1390 = vmatpush.msra.mxu0 0.0
        %1391 = vmatpush.msra.mxu0 0.0
        %1392 = vmatpush.msra.mxu0 0.0
        %1393 = vmatpush.msra.mxu0 0.0
        %1394 = vmatpush.msra.mxu0 0.0
        %1395 = vmatpush.msra.mxu0 %v835
        %1396 = vmatpush.msra.mxu0 %v834
        %1397 = vmatpush.msra.mxu0 %v833
        %1398 = vmatpush.msra.mxu0 %v832
        %1399 = vmatmul.f32.gmra.mxu0 %v1261
        %v1400 = vpop.f32.mrf.mxu0
        %v1401 = vadd.f32 %v1242, %v1400
        %1402 = vdwg.mxu0
        %1403 = vmatpush.msra.mxu0 0.0
        %1404 = vmatpush.msra.mxu0 0.0
        %1405 = vmatpush.msra.mxu0 0.0
        %1406 = vmatpush.msra.mxu0 0.0
        %1407 = vmatpush.msra.mxu0 0.0
        %1408 = vmatpush.msra.mxu0 0.0
        %1409 = vmatpush.msra.mxu0 0.0
        %1410 = vmatpush.msra.mxu0 0.0
        %1411 = vmatpush.msra.mxu0 0.0
        %1412 = vmatpush.msra.mxu0 0.0
        %1413 = vmatpush.msra.mxu0 0.0
        %1414 = vmatpush.msra.mxu0 0.0
        %1415 = vmatpush.msra.mxu0 %v839
        %1416 = vmatpush.msra.mxu0 %v838
        %1417 = vmatpush.msra.mxu0 %v837
        %1418 = vmatpush.msra.mxu0 %v836
        %1419 = vmatmul.f32.gmra.mxu0 %v1261
        %v1420 = vpop.f32.mrf.mxu0
        %v1421 = vadd.f32 %v1243, %v1420
        %1422 = vdwg.mxu0
        %1423 = vmatpush.msra.mxu0 0.0
        %1424 = vmatpush.msra.mxu0 0.0
        %1425 = vmatpush.msra.mxu0 0.0
        %1426 = vmatpush.msra.mxu0 0.0
        %1427 = vmatpush.msra.mxu0 0.0
        %1428 = vmatpush.msra.mxu0 0.0
        %1429 = vmatpush.msra.mxu0 0.0
        %1430 = vmatpush.msra.mxu0 0.0
        %1431 = vmatpush.msra.mxu0 0.0
        %1432 = vmatpush.msra.mxu0 0.0
        %1433 = vmatpush.msra.mxu0 0.0
        %1434 = vmatpush.msra.mxu0 0.0
        %1435 = vmatpush.msra.mxu0 %v843
        %1436 = vmatpush.msra.mxu0 %v842
        %1437 = vmatpush.msra.mxu0 %v841
        %1438 = vmatpush.msra.mxu0 %v840
        %1439 = vmatmul.f32.gmra.mxu0 %v1261
        %v1440 = vpop.f32.mrf.mxu0
        %v1441 = vadd.f32 %v1244, %v1440
        %1442 = vdwg.mxu0
        %1443 = vmatpush.msra.mxu0 0.0
        %1444 = vmatpush.msra.mxu0 0.0
        %1445 = vmatpush.msra.mxu0 0.0
        %1446 = vmatpush.msra.mxu0 0.0
        %1447 = vmatpush.msra.mxu0 0.0
        %1448 = vmatpush.msra.mxu0 0.0
        %1449 = vmatpush.msra.mxu0 0.0
        %1450 = vmatpush.msra.mxu0 0.0
        %1451 = vmatpush.msra.mxu0 0.0
        %1452 = vmatpush.msra.mxu0 0.0
        %1453 = vmatpush.msra.mxu0 0.0
        %1454 = vmatpush.msra.mxu0 0.0
        %1455 = vmatpush.msra.mxu0 %v847
        %1456 = vmatpush.msra.mxu0 %v846
        %1457 = vmatpush.msra.mxu0 %v845
        %1458 = vmatpush.msra.mxu0 %v844
        %1459 = vmatmul.f32.gmra.mxu0 %v1261
        %v1460 = vpop.f32.mrf.mxu0
        %v1461 = vadd.f32 %v1245, %v1460
        %1462 = vdwg.mxu0
        %1463 = vmatpush.msra.mxu0 0.0
        %1464 = vmatpush.msra.mxu0 0.0
        %1465 = vmatpush.msra.mxu0 0.0
        %1466 = vmatpush.msra.mxu0 0.0
        %1467 = vmatpush.msra.mxu0 0.0
        %1468 = vmatpush.msra.mxu0 0.0
        %1469 = vmatpush.msra.mxu0 0.0
        %1470 = vmatpush.msra.mxu0 0.0
        %1471 = vmatpush.msra.mxu0 0.0
        %1472 = vmatpush.msra.mxu0 0.0
        %1473 = vmatpush.msra.mxu0 0.0
        %1474 = vmatpush.msra.mxu0 0.0
        %1475 = vmatpush.msra.mxu0 %v851
        %1476 = vmatpush.msra.mxu0 %v850
        %1477 = vmatpush.msra.mxu0 %v849
        %1478 = vmatpush.msra.mxu0 %v848
        %1479 = vmatmul.f32.gmra.mxu0 %v1261
        %v1480 = vpop.f32.mrf.mxu0
        %v1481 = vadd.f32 %v1246, %v1480
        %1482 = vdwg.mxu0
        %1483 = vmatpush.msra.mxu0 0.0
        %1484 = vmatpush.msra.mxu0 0.0
        %1485 = vmatpush.msra.mxu0 0.0
        %1486 = vmatpush.msra.mxu0 0.0
        %1487 = vmatpush.msra.mxu0 0.0
        %1488 = vmatpush.msra.mxu0 0.0
        %1489 = vmatpush.msra.mxu0 0.0
        %1490 = vmatpush.msra.mxu0 0.0
        %1491 = vmatpush.msra.mxu0 0.0
        %1492 = vmatpush.msra.mxu0 0.0
        %1493 = vmatpush.msra.mxu0 0.0
        %1494 = vmatpush.msra.mxu0 0.0
        %1495 = vmatpush.msra.mxu0 %v855
        %1496 = vmatpush.msra.mxu0 %v854
        %1497 = vmatpush.msra.mxu0 %v853
        %1498 = vmatpush.msra.mxu0 %v852
        %1499 = vmatmul.f32.gmra.mxu0 %v1261
        %v1500 = vpop.f32.mrf.mxu0
        %v1501 = vadd.f32 %v1247, %v1500
        %1502 = vdwg.mxu0
        %vm1503 = vcmask 64512
        %v1505 = vsel %vm1503, %v1281, 0
        %v1508 = vsel %vm1503, %v1361, 0
        %1510 = vmatpush.xpose.msra.mxu0 0.0
        %1511 = vmatpush.xpose.msra.mxu0 0.0
        %1512 = vmatpush.xpose.msra.mxu0 0.0
        %1513 = vmatpush.xpose.msra.mxu0 0.0
        %1514 = vmatpush.xpose.msra.mxu0 0.0
        %1515 = vmatpush.xpose.msra.mxu0 0.0
        %1516 = vmatpush.xpose.msra.mxu0 0.0
        %1517 = vmatpush.xpose.msra.mxu0 0.0
        %1518 = vmatpush.xpose.msra.mxu0 0.0
        %1519 = vmatpush.xpose.msra.mxu0 0.0
        %1520 = vmatpush.xpose.msra.mxu0 0.0
        %1521 = vmatpush.xpose.msra.mxu0 0.0
        %1522 = vmatpush.xpose.msra.mxu0 0.0
        %1523 = vmatpush.xpose.msra.mxu0 0.0
        %1524 = vmatpush.xpose.msra.mxu0 0.0
        %1525 = vmatpush.xpose.msra.mxu0 %v1508
        %1526 = vmatmul.f32.gmra.mxu0 %v1505
        %v1527 = vpop.f32.mrf.mxu0
        %v1528 = vadd.f32 %v991, %v1527
        %1529 = vdwg.mxu0
        %v1531 = vsel %vm1503, %v1301, 0
        %v1534 = vsel %vm1503, %v1381, 0
        %1536 = vmatpush.xpose.msra.mxu0 0.0
        %1537 = vmatpush.xpose.msra.mxu0 0.0
        %1538 = vmatpush.xpose.msra.mxu0 0.0
        %1539 = vmatpush.xpose.msra.mxu0 0.0
        %1540 = vmatpush.xpose.msra.mxu0 0.0
        %1541 = vmatpush.xpose.msra.mxu0 0.0
        %1542 = vmatpush.xpose.msra.mxu0 0.0
        %1543 = vmatpush.xpose.msra.mxu0 0.0
        %1544 = vmatpush.xpose.msra.mxu0 0.0
        %1545 = vmatpush.xpose.msra.mxu0 0.0
        %1546 = vmatpush.xpose.msra.mxu0 0.0
        %1547 = vmatpush.xpose.msra.mxu0 0.0
        %1548 = vmatpush.xpose.msra.mxu0 0.0
        %1549 = vmatpush.xpose.msra.mxu0 0.0
        %1550 = vmatpush.xpose.msra.mxu0 0.0
        %1551 = vmatpush.xpose.msra.mxu0 %v1534
        %1552 = vmatmul.f32.gmra.mxu0 %v1531
        %v1553 = vpop.f32.mrf.mxu0
        %v1554 = vadd.f32 %v991, %v1553
        %1555 = vdwg.mxu0
        %v1557 = vsel %vm1503, %v1321, 0
        %v1560 = vsel %vm1503, %v1401, 0
        %1562 = vmatpush.xpose.msra.mxu0 0.0
        %1563 = vmatpush.xpose.msra.mxu0 0.0
        %1564 = vmatpush.xpose.msra.mxu0 0.0
        %1565 = vmatpush.xpose.msra.mxu0 0.0
        %1566 = vmatpush.xpose.msra.mxu0 0.0
        %1567 = vmatpush.xpose.msra.mxu0 0.0
        %1568 = vmatpush.xpose.msra.mxu0 0.0
        %1569 = vmatpush.xpose.msra.mxu0 0.0
        %1570 = vmatpush.xpose.msra.mxu0 0.0
        %1571 = vmatpush.xpose.msra.mxu0 0.0
        %1572 = vmatpush.xpose.msra.mxu0 0.0
        %1573 = vmatpush.xpose.msra.mxu0 0.0
        %1574 = vmatpush.xpose.msra.mxu0 0.0
        %1575 = vmatpush.xpose.msra.mxu0 0.0
        %1576 = vmatpush.xpose.msra.mxu0 0.0
        %1577 = vmatpush.xpose.msra.mxu0 %v1560
        %1578 = vmatmul.f32.gmra.mxu0 %v1557
        %v1579 = vpop.f32.mrf.mxu0
        %v1580 = vadd.f32 %v991, %v1579
        %1581 = vdwg.mxu0
        %v1583 = vsel %vm1503, %v1341, 0
        %v1586 = vsel %vm1503, %v1421, 0
        %1588 = vmatpush.xpose.msra.mxu0 0.0
        %1589 = vmatpush.xpose.msra.mxu0 0.0
        %1590 = vmatpush.xpose.msra.mxu0 0.0
        %1591 = vmatpush.xpose.msra.mxu0 0.0
        %1592 = vmatpush.xpose.msra.mxu0 0.0
        %1593 = vmatpush.xpose.msra.mxu0 0.0
        %1594 = vmatpush.xpose.msra.mxu0 0.0
        %1595 = vmatpush.xpose.msra.mxu0 0.0
        %1596 = vmatpush.xpose.msra.mxu0 0.0
        %1597 = vmatpush.xpose.msra.mxu0 0.0
        %1598 = vmatpush.xpose.msra.mxu0 0.0
        %1599 = vmatpush.xpose.msra.mxu0 0.0
        %1600 = vmatpush.xpose.msra.mxu0 0.0
        %1601 = vmatpush.xpose.msra.mxu0 0.0
        %1602 = vmatpush.xpose.msra.mxu0 0.0
        %1603 = vmatpush.xpose.msra.mxu0 %v1586
        %1604 = vmatmul.f32.gmra.mxu0 %v1583
        %v1605 = vpop.f32.mrf.mxu0
        %v1606 = vadd.f32 %v991, %v1605
        %1607 = vdwg.mxu0
        %v1608 = vsel %vm1503, %v1528, -inf
        %1609 = vmax.xlane.f32.xlu0 %v1608
        %v1610 = vpop.xlane.xlu0 %1609
        %v1611 = vsel %vm1503, %v1554, -inf
        %1612 = vmax.xlane.f32.xlu0 %v1611
        %v1613 = vpop.xlane.xlu0 %1612
        %v1614 = vsel %vm1503, %v1580, -inf
        %1615 = vmax.xlane.f32.xlu0 %v1614
        %v1616 = vpop.xlane.xlu0 %1615
        %v1617 = vsel %vm1503, %v1606, -inf
        %1618 = vmax.xlane.f32.xlu0 %v1617
        %v1619 = vpop.xlane.xlu0 %1618
        %v1620 = vsub.f32 %v1528, %v1610
        %v1621 = vsub.f32 %v1554, %v1613
        %v1622 = vsub.f32 %v1580, %v1616
        %v1623 = vsub.f32 %v1606, %v1619
        %v1624 = vmul.f32 %v1620, 1.442695
        %v1625 = vpow.pop %v1624
        %v1626 = vmul.f32 %v1621, 1.442695
        %v1627 = vpow.pop %v1626
        %v1628 = vmul.f32 %v1622, 1.442695
        %v1629 = vpow.pop %v1628
        %v1630 = vmul.f32 %v1623, 1.442695
        %v1631 = vpow.pop %v1630
        %v1632 = vsel %vm1503, %v1625, 0.0
        %1633 = vadd.xlane.f32.xlu0 %v1632
        %v1634 = vpop.xlane.xlu0 %1633
        %v1635 = vsel %vm1503, %v1627, 0.0
        %1636 = vadd.xlane.f32.xlu0 %v1635
        %v1637 = vpop.xlane.xlu0 %1636
        %v1638 = vsel %vm1503, %v1629, 0.0
        %1639 = vadd.xlane.f32.xlu0 %v1638
        %v1640 = vpop.xlane.xlu0 %1639
        %v1641 = vsel %vm1503, %v1631, 0.0
        %1642 = vadd.xlane.f32.xlu0 %v1641
        %v1643 = vpop.xlane.xlu0 %1642
        %v1644 = vrcp.pop %v1634
        %v1645 = vrcp.pop %v1637
        %v1646 = vrcp.pop %v1640
        %v1647 = vrcp.pop %v1643
        %v1648 = vmul.f32 %v1625, %v1644
        %v1649 = vmul.f32 %v1627, %v1645
        %v1650 = vmul.f32 %v1629, %v1646
        %v1651 = vmul.f32 %v1631, %v1647
        %v1653 = vsel %vm1503, %v1648, 0
        %1655 = vmatpush.msra.mxu0 0.0
        %1656 = vmatpush.msra.mxu0 0.0
        %1657 = vmatpush.msra.mxu0 0.0
        %1658 = vmatpush.msra.mxu0 0.0
        %1659 = vmatpush.msra.mxu0 0.0
        %1660 = vmatpush.msra.mxu0 0.0
        %1661 = vmatpush.msra.mxu0 0.0
        %1662 = vmatpush.msra.mxu0 0.0
        %1663 = vmatpush.msra.mxu0 0.0
        %1664 = vmatpush.msra.mxu0 0.0
        %1665 = vmatpush.msra.mxu0 0.0
        %1666 = vmatpush.msra.mxu0 0.0
        %1667 = vmatpush.msra.mxu0 0.0
        %1668 = vmatpush.msra.mxu0 0.0
        %1669 = vmatpush.msra.mxu0 0.0
        %1670 = vmatpush.msra.mxu0 %v1441
        %1671 = vmatmul.f32.gmra.mxu0 %v1653
        %v1672 = vpop.f32.mrf.mxu0
        %v1673 = vadd.f32 0.0, %v1672
        %1674 = vdwg.mxu0
        %v1676 = vsel %vm1503, %v1649, 0
        %1678 = vmatpush.msra.mxu0 0.0
        %1679 = vmatpush.msra.mxu0 0.0
        %1680 = vmatpush.msra.mxu0 0.0
        %1681 = vmatpush.msra.mxu0 0.0
        %1682 = vmatpush.msra.mxu0 0.0
        %1683 = vmatpush.msra.mxu0 0.0
        %1684 = vmatpush.msra.mxu0 0.0
        %1685 = vmatpush.msra.mxu0 0.0
        %1686 = vmatpush.msra.mxu0 0.0
        %1687 = vmatpush.msra.mxu0 0.0
        %1688 = vmatpush.msra.mxu0 0.0
        %1689 = vmatpush.msra.mxu0 0.0
        %1690 = vmatpush.msra.mxu0 0.0
        %1691 = vmatpush.msra.mxu0 0.0
        %1692 = vmatpush.msra.mxu0 0.0
        %1693 = vmatpush.msra.mxu0 %v1461
        %1694 = vmatmul.f32.gmra.mxu0 %v1676
        %v1695 = vpop.f32.mrf.mxu0
        %v1696 = vadd.f32 0.0, %v1695
        %1697 = vdwg.mxu0
        %v1699 = vsel %vm1503, %v1650, 0
        %1701 = vmatpush.msra.mxu0 0.0
        %1702 = vmatpush.msra.mxu0 0.0
        %1703 = vmatpush.msra.mxu0 0.0
        %1704 = vmatpush.msra.mxu0 0.0
        %1705 = vmatpush.msra.mxu0 0.0
        %1706 = vmatpush.msra.mxu0 0.0
        %1707 = vmatpush.msra.mxu0 0.0
        %1708 = vmatpush.msra.mxu0 0.0
        %1709 = vmatpush.msra.mxu0 0.0
        %1710 = vmatpush.msra.mxu0 0.0
        %1711 = vmatpush.msra.mxu0 0.0
        %1712 = vmatpush.msra.mxu0 0.0
        %1713 = vmatpush.msra.mxu0 0.0
        %1714 = vmatpush.msra.mxu0 0.0
        %1715 = vmatpush.msra.mxu0 0.0
        %1716 = vmatpush.msra.mxu0 %v1481
        %1717 = vmatmul.f32.gmra.mxu0 %v1699
        %v1718 = vpop.f32.mrf.mxu0
        %v1719 = vadd.f32 0.0, %v1718
        %1720 = vdwg.mxu0
        %v1722 = vsel %vm1503, %v1651, 0
        %1724 = vmatpush.msra.mxu0 0.0
        %1725 = vmatpush.msra.mxu0 0.0
        %1726 = vmatpush.msra.mxu0 0.0
        %1727 = vmatpush.msra.mxu0 0.0
        %1728 = vmatpush.msra.mxu0 0.0
        %1729 = vmatpush.msra.mxu0 0.0
        %1730 = vmatpush.msra.mxu0 0.0
        %1731 = vmatpush.msra.mxu0 0.0
        %1732 = vmatpush.msra.mxu0 0.0
        %1733 = vmatpush.msra.mxu0 0.0
        %1734 = vmatpush.msra.mxu0 0.0
        %1735 = vmatpush.msra.mxu0 0.0
        %1736 = vmatpush.msra.mxu0 0.0
        %1737 = vmatpush.msra.mxu0 0.0
        %1738 = vmatpush.msra.mxu0 0.0
        %1739 = vmatpush.msra.mxu0 %v1501
        %1740 = vmatmul.f32.gmra.mxu0 %v1722
        %v1741 = vpop.f32.mrf.mxu0
        %v1742 = vadd.f32 0.0, %v1741
        %1743 = vdwg.mxu0
        %v1745 = vsel %vm1503, %v1673, 0
        %1747 = vmatpush.msra.mxu0 0.0
        %1748 = vmatpush.msra.mxu0 0.0
        %1749 = vmatpush.msra.mxu0 0.0
        %1750 = vmatpush.msra.mxu0 0.0
        %1751 = vmatpush.msra.mxu0 0.0
        %1752 = vmatpush.msra.mxu0 0.0
        %1753 = vmatpush.msra.mxu0 0.0
        %1754 = vmatpush.msra.mxu0 0.0
        %1755 = vmatpush.msra.mxu0 0.0
        %1756 = vmatpush.msra.mxu0 0.0
        %1757 = vmatpush.msra.mxu0 0.0
        %1758 = vmatpush.msra.mxu0 0.0
        %1759 = vmatpush.msra.mxu0 0.0
        %1760 = vmatpush.msra.mxu0 0.0
        %1761 = vmatpush.msra.mxu0 0.0
        %1762 = vmatpush.msra.mxu0 %v868
        %1763 = vmatmul.f32.gmra.mxu0 %v1745
        %v1764 = vpop.f32.mrf.mxu0
        %v1765 = vadd.f32 0.0, %v1764
        %1766 = vdwg.mxu0
        %v1768 = vsel %vm1503, %v1696, 0
        %1770 = vmatpush.msra.mxu0 0.0
        %1771 = vmatpush.msra.mxu0 0.0
        %1772 = vmatpush.msra.mxu0 0.0
        %1773 = vmatpush.msra.mxu0 0.0
        %1774 = vmatpush.msra.mxu0 0.0
        %1775 = vmatpush.msra.mxu0 0.0
        %1776 = vmatpush.msra.mxu0 0.0
        %1777 = vmatpush.msra.mxu0 0.0
        %1778 = vmatpush.msra.mxu0 0.0
        %1779 = vmatpush.msra.mxu0 0.0
        %1780 = vmatpush.msra.mxu0 0.0
        %1781 = vmatpush.msra.mxu0 0.0
        %1782 = vmatpush.msra.mxu0 0.0
        %1783 = vmatpush.msra.mxu0 0.0
        %1784 = vmatpush.msra.mxu0 0.0
        %1785 = vmatpush.msra.mxu0 %v869
        %1786 = vmatmul.f32.gmra.mxu0 %v1768
        %v1787 = vpop.f32.mrf.mxu0
        %v1788 = vadd.f32 0.0, %v1787
        %1789 = vdwg.mxu0
        %v1791 = vsel %vm1503, %v1719, 0
        %1793 = vmatpush.msra.mxu0 0.0
        %1794 = vmatpush.msra.mxu0 0.0
        %1795 = vmatpush.msra.mxu0 0.0
        %1796 = vmatpush.msra.mxu0 0.0
        %1797 = vmatpush.msra.mxu0 0.0
        %1798 = vmatpush.msra.mxu0 0.0
        %1799 = vmatpush.msra.mxu0 0.0
        %1800 = vmatpush.msra.mxu0 0.0
        %1801 = vmatpush.msra.mxu0 0.0
        %1802 = vmatpush.msra.mxu0 0.0
        %1803 = vmatpush.msra.mxu0 0.0
        %1804 = vmatpush.msra.mxu0 0.0
        %1805 = vmatpush.msra.mxu0 0.0
        %1806 = vmatpush.msra.mxu0 0.0
        %1807 = vmatpush.msra.mxu0 0.0
        %1808 = vmatpush.msra.mxu0 %v870
        %1809 = vmatmul.f32.gmra.mxu0 %v1791
        %v1810 = vpop.f32.mrf.mxu0
        %v1811 = vadd.f32 0.0, %v1810
        %1812 = vdwg.mxu0
        %v1814 = vsel %vm1503, %v1742, 0
        %1816 = vmatpush.msra.mxu0 0.0
        %1817 = vmatpush.msra.mxu0 0.0
        %1818 = vmatpush.msra.mxu0 0.0
        %1819 = vmatpush.msra.mxu0 0.0
        %1820 = vmatpush.msra.mxu0 0.0
        %1821 = vmatpush.msra.mxu0 0.0
        %1822 = vmatpush.msra.mxu0 0.0
        %1823 = vmatpush.msra.mxu0 0.0
        %1824 = vmatpush.msra.mxu0 0.0
        %1825 = vmatpush.msra.mxu0 0.0
        %1826 = vmatpush.msra.mxu0 0.0
        %1827 = vmatpush.msra.mxu0 0.0
        %1828 = vmatpush.msra.mxu0 0.0
        %1829 = vmatpush.msra.mxu0 0.0
        %1830 = vmatpush.msra.mxu0 0.0
        %1831 = vmatpush.msra.mxu0 %v871
        %1832 = vmatmul.f32.gmra.mxu0 %v1814
        %v1833 = vpop.f32.mrf.mxu0
        %v1834 = vadd.f32 0.0, %v1833
        %1835 = vdwg.mxu0
        %v1836 = vsel %vm1023, %v1765, 0.0
        %v1837 = vsel %vm1023, %v1788, 0.0
        %v1838 = vadd.f32 %v1836, %v1837
        %v1839 = vsel %vm1023, %v1811, 0.0
        %v1840 = vadd.f32 %v1838, %v1839
        %v1841 = vsel %vm1023, %v1834, 0.0
        %v1842 = vadd.f32 %v1840, %v1841
        %v1844 = vperm.slane %v872, 0
        %v1846 = vadd.f32 %v1842, %v1844
        %v1847 = vadd.f32 %v800, %v1846
        %v1848 = vsel %vm1023, %v1847, 0.0
        %1849 = vadd.xlane.f32.xlu0 %v1848
        %v1850 = vpop.xlane.xlu0 %1849
        %v1851 = vmul.f32 %v1850, %v1196
        %v1852 = vsub.f32 %v1847, %v1851
        %v1853 = vmul.f32 %v1852, %v1852
        %v1854 = vsel %vm1023, %v1853, 0.0
        %1855 = vadd.xlane.f32.xlu0 %v1854
        %v1856 = vpop.xlane.xlu0 %1855
        %v1857 = vmul.f32 %v1856, %v1196
        %v1858 = vadd.f32 %v1857, 1e-06
        %v1859 = vrsqrt.pop %v1858
        %v1860 = vmul.f32 %v1859, %v1858
        %v1861 = vmul.f32 %v1860, %v1859
        %v1862 = vmul.f32 0.5, %v1861
        %v1863 = vsub.f32 1.5, %v1862
        %v1864 = vmul.f32 %v1859, %v1863
        %vm1865 = vweird.f32 %v1858
        %vm1866 = vweird.f32 %v1859
        %vm1867 = vmor %vm1865, %vm1866
        %v1868 = vsel %vm1867, %v1859, %v1864
        %v1869 = vmul.f32 %v1852, %v1868
        %v1871 = vperm.slane %v804, 0
        %v1873 = vmul.f32 %v1869, %v1871
        %v1875 = vperm.slane %v805, 0
        %v1877 = vadd.f32 %v1873, %v1875
        %v1882 = vperm.slane %v889, 0
        %v1883 = vperm.slane %v890, 0
        %v1884 = vperm.slane %v891, 0
        %v1885 = vperm.slane %v892, 0
        %v1891 = vsel %vm1023, %v1877, 0
        %1893 = vmatpush.msra.mxu0 0.0
        %1894 = vmatpush.msra.mxu0 0.0
        %1895 = vmatpush.msra.mxu0 0.0
        %1896 = vmatpush.msra.mxu0 0.0
        %1897 = vmatpush.msra.mxu0 0.0
        %1898 = vmatpush.msra.mxu0 0.0
        %1899 = vmatpush.msra.mxu0 0.0
        %1900 = vmatpush.msra.mxu0 0.0
        %1901 = vmatpush.msra.mxu0 0.0
        %1902 = vmatpush.msra.mxu0 0.0
        %1903 = vmatpush.msra.mxu0 0.0
        %1904 = vmatpush.msra.mxu0 0.0
        %1905 = vmatpush.msra.mxu0 %v876
        %1906 = vmatpush.msra.mxu0 %v875
        %1907 = vmatpush.msra.mxu0 %v874
        %1908 = vmatpush.msra.mxu0 %v873
        %1909 = vmatmul.f32.gmra.mxu0 %v1891
        %v1910 = vpop.f32.mrf.mxu0
        %v1911 = vadd.f32 %v1882, %v1910
        %1912 = vdwg.mxu0
        %1913 = vmatpush.msra.mxu0 0.0
        %1914 = vmatpush.msra.mxu0 0.0
        %1915 = vmatpush.msra.mxu0 0.0
        %1916 = vmatpush.msra.mxu0 0.0
        %1917 = vmatpush.msra.mxu0 0.0
        %1918 = vmatpush.msra.mxu0 0.0
        %1919 = vmatpush.msra.mxu0 0.0
        %1920 = vmatpush.msra.mxu0 0.0
        %1921 = vmatpush.msra.mxu0 0.0
        %1922 = vmatpush.msra.mxu0 0.0
        %1923 = vmatpush.msra.mxu0 0.0
        %1924 = vmatpush.msra.mxu0 0.0
        %1925 = vmatpush.msra.mxu0 %v880
        %1926 = vmatpush.msra.mxu0 %v879
        %1927 = vmatpush.msra.mxu0 %v878
        %1928 = vmatpush.msra.mxu0 %v877
        %1929 = vmatmul.f32.gmra.mxu0 %v1891
        %v1930 = vpop.f32.mrf.mxu0
        %v1931 = vadd.f32 %v1883, %v1930
        %1932 = vdwg.mxu0
        %1933 = vmatpush.msra.mxu0 0.0
        %1934 = vmatpush.msra.mxu0 0.0
        %1935 = vmatpush.msra.mxu0 0.0
        %1936 = vmatpush.msra.mxu0 0.0
        %1937 = vmatpush.msra.mxu0 0.0
        %1938 = vmatpush.msra.mxu0 0.0
        %1939 = vmatpush.msra.mxu0 0.0
        %1940 = vmatpush.msra.mxu0 0.0
        %1941 = vmatpush.msra.mxu0 0.0
        %1942 = vmatpush.msra.mxu0 0.0
        %1943 = vmatpush.msra.mxu0 0.0
        %1944 = vmatpush.msra.mxu0 0.0
        %1945 = vmatpush.msra.mxu0 %v884
        %1946 = vmatpush.msra.mxu0 %v883
        %1947 = vmatpush.msra.mxu0 %v882
        %1948 = vmatpush.msra.mxu0 %v881
        %1949 = vmatmul.f32.gmra.mxu0 %v1891
        %v1950 = vpop.f32.mrf.mxu0
        %v1951 = vadd.f32 %v1884, %v1950
        %1952 = vdwg.mxu0
        %1953 = vmatpush.msra.mxu0 0.0
        %1954 = vmatpush.msra.mxu0 0.0
        %1955 = vmatpush.msra.mxu0 0.0
        %1956 = vmatpush.msra.mxu0 0.0
        %1957 = vmatpush.msra.mxu0 0.0
        %1958 = vmatpush.msra.mxu0 0.0
        %1959 = vmatpush.msra.mxu0 0.0
        %1960 = vmatpush.msra.mxu0 0.0
        %1961 = vmatpush.msra.mxu0 0.0
        %1962 = vmatpush.msra.mxu0 0.0
        %1963 = vmatpush.msra.mxu0 0.0
        %1964 = vmatpush.msra.mxu0 0.0
        %1965 = vmatpush.msra.mxu0 %v888
        %1966 = vmatpush.msra.mxu0 %v887
        %1967 = vmatpush.msra.mxu0 %v886
        %1968 = vmatpush.msra.mxu0 %v885
        %1969 = vmatmul.f32.gmra.mxu0 %v1891
        %v1970 = vpop.f32.mrf.mxu0
        %v1971 = vadd.f32 %v1885, %v1970
        %1972 = vdwg.mxu0
        %v1974 = vperm.slane %v992, 0
        %v1977 = vsel %vm1503, %v1911, 0
        %v1980 = vsel %vm1503, %v1045, 0
        %1982 = vmatpush.xpose.msra.mxu0 0.0
        %1983 = vmatpush.xpose.msra.mxu0 0.0
        %1984 = vmatpush.xpose.msra.mxu0 0.0
        %1985 = vmatpush.xpose.msra.mxu0 0.0
        %1986 = vmatpush.xpose.msra.mxu0 0.0
        %1987 = vmatpush.xpose.msra.mxu0 0.0
        %1988 = vmatpush.xpose.msra.mxu0 0.0
        %1989 = vmatpush.xpose.msra.mxu0 0.0
        %1990 = vmatpush.xpose.msra.mxu0 0.0
        %1991 = vmatpush.xpose.msra.mxu0 0.0
        %1992 = vmatpush.xpose.msra.mxu0 0.0
        %1993 = vmatpush.xpose.msra.mxu0 0.0
        %1994 = vmatpush.xpose.msra.mxu0 0.0
        %1995 = vmatpush.xpose.msra.mxu0 0.0
        %1996 = vmatpush.xpose.msra.mxu0 0.0
        %1997 = vmatpush.xpose.msra.mxu0 %v1980
        %1998 = vmatmul.f32.gmra.mxu0 %v1977
        %v1999 = vpop.f32.mrf.mxu0
        %v2000 = vadd.f32 %v1974, %v1999
        %2001 = vdwg.mxu0
        %v2003 = vsel %vm1503, %v1931, 0
        %v2006 = vsel %vm1503, %v1065, 0
        %2008 = vmatpush.xpose.msra.mxu0 0.0
        %2009 = vmatpush.xpose.msra.mxu0 0.0
        %2010 = vmatpush.xpose.msra.mxu0 0.0
        %2011 = vmatpush.xpose.msra.mxu0 0.0
        %2012 = vmatpush.xpose.msra.mxu0 0.0
        %2013 = vmatpush.xpose.msra.mxu0 0.0
        %2014 = vmatpush.xpose.msra.mxu0 0.0
        %2015 = vmatpush.xpose.msra.mxu0 0.0
        %2016 = vmatpush.xpose.msra.mxu0 0.0
        %2017 = vmatpush.xpose.msra.mxu0 0.0
        %2018 = vmatpush.xpose.msra.mxu0 0.0
        %2019 = vmatpush.xpose.msra.mxu0 0.0
        %2020 = vmatpush.xpose.msra.mxu0 0.0
        %2021 = vmatpush.xpose.msra.mxu0 0.0
        %2022 = vmatpush.xpose.msra.mxu0 0.0
        %2023 = vmatpush.xpose.msra.mxu0 %v2006
        %2024 = vmatmul.f32.gmra.mxu0 %v2003
        %v2025 = vpop.f32.mrf.mxu0
        %v2026 = vadd.f32 %v1974, %v2025
        %2027 = vdwg.mxu0
        %v2029 = vsel %vm1503, %v1951, 0
        %v2032 = vsel %vm1503, %v1085, 0
        %2034 = vmatpush.xpose.msra.mxu0 0.0
        %2035 = vmatpush.xpose.msra.mxu0 0.0
        %2036 = vmatpush.xpose.msra.mxu0 0.0
        %2037 = vmatpush.xpose.msra.mxu0 0.0
        %2038 = vmatpush.xpose.msra.mxu0 0.0
        %2039 = vmatpush.xpose.msra.mxu0 0.0
        %2040 = vmatpush.xpose.msra.mxu0 0.0
        %2041 = vmatpush.xpose.msra.mxu0 0.0
        %2042 = vmatpush.xpose.msra.mxu0 0.0
        %2043 = vmatpush.xpose.msra.mxu0 0.0
        %2044 = vmatpush.xpose.msra.mxu0 0.0
        %2045 = vmatpush.xpose.msra.mxu0 0.0
        %2046 = vmatpush.xpose.msra.mxu0 0.0
        %2047 = vmatpush.xpose.msra.mxu0 0.0
        %2048 = vmatpush.xpose.msra.mxu0 0.0
        %2049 = vmatpush.xpose.msra.mxu0 %v2032
        %2050 = vmatmul.f32.gmra.mxu0 %v2029
        %v2051 = vpop.f32.mrf.mxu0
        %v2052 = vadd.f32 %v1974, %v2051
        %2053 = vdwg.mxu0
        %v2055 = vsel %vm1503, %v1971, 0
        %v2058 = vsel %vm1503, %v1105, 0
        %2060 = vmatpush.xpose.msra.mxu0 0.0
        %2061 = vmatpush.xpose.msra.mxu0 0.0
        %2062 = vmatpush.xpose.msra.mxu0 0.0
        %2063 = vmatpush.xpose.msra.mxu0 0.0
        %2064 = vmatpush.xpose.msra.mxu0 0.0
        %2065 = vmatpush.xpose.msra.mxu0 0.0
        %2066 = vmatpush.xpose.msra.mxu0 0.0
        %2067 = vmatpush.xpose.msra.mxu0 0.0
        %2068 = vmatpush.xpose.msra.mxu0 0.0
        %2069 = vmatpush.xpose.msra.mxu0 0.0
        %2070 = vmatpush.xpose.msra.mxu0 0.0
        %2071 = vmatpush.xpose.msra.mxu0 0.0
        %2072 = vmatpush.xpose.msra.mxu0 0.0
        %2073 = vmatpush.xpose.msra.mxu0 0.0
        %2074 = vmatpush.xpose.msra.mxu0 0.0
        %2075 = vmatpush.xpose.msra.mxu0 %v2058
        %2076 = vmatmul.f32.gmra.mxu0 %v2055
        %v2077 = vpop.f32.mrf.mxu0
        %v2078 = vadd.f32 %v1974, %v2077
        %2079 = vdwg.mxu0
        %v2080 = vsel %vm1503, %v2000, -inf
        %2081 = vmax.xlane.f32.xlu0 %v2080
        %v2082 = vpop.xlane.xlu0 %2081
        %v2083 = vsel %vm1503, %v2026, -inf
        %2084 = vmax.xlane.f32.xlu0 %v2083
        %v2085 = vpop.xlane.xlu0 %2084
        %v2086 = vsel %vm1503, %v2052, -inf
        %2087 = vmax.xlane.f32.xlu0 %v2086
        %v2088 = vpop.xlane.xlu0 %2087
        %v2089 = vsel %vm1503, %v2078, -inf
        %2090 = vmax.xlane.f32.xlu0 %v2089
        %v2091 = vpop.xlane.xlu0 %2090
        %v2092 = vsub.f32 %v2000, %v2082
        %v2093 = vsub.f32 %v2026, %v2085
        %v2094 = vsub.f32 %v2052, %v2088
        %v2095 = vsub.f32 %v2078, %v2091
        %v2096 = vmul.f32 %v2092, 1.442695
        %v2097 = vpow.pop %v2096
        %v2098 = vmul.f32 %v2093, 1.442695
        %v2099 = vpow.pop %v2098
        %v2100 = vmul.f32 %v2094, 1.442695
        %v2101 = vpow.pop %v2100
        %v2102 = vmul.f32 %v2095, 1.442695
        %v2103 = vpow.pop %v2102
        %v2104 = vsel %vm1503, %v2097, 0.0
        %2105 = vadd.xlane.f32.xlu0 %v2104
        %v2106 = vpop.xlane.xlu0 %2105
        %v2107 = vsel %vm1503, %v2099, 0.0
        %2108 = vadd.xlane.f32.xlu0 %v2107
        %v2109 = vpop.xlane.xlu0 %2108
        %v2110 = vsel %vm1503, %v2101, 0.0
        %2111 = vadd.xlane.f32.xlu0 %v2110
        %v2112 = vpop.xlane.xlu0 %2111
        %v2113 = vsel %vm1503, %v2103, 0.0
        %2114 = vadd.xlane.f32.xlu0 %v2113
        %v2115 = vpop.xlane.xlu0 %2114
        %v2116 = vrcp.pop %v2106
        %v2117 = vrcp.pop %v2109
        %v2118 = vrcp.pop %v2112
        %v2119 = vrcp.pop %v2115
        %v2120 = vmul.f32 %v2097, %v2116
        %v2121 = vmul.f32 %v2099, %v2117
        %v2122 = vmul.f32 %v2101, %v2118
        %v2123 = vmul.f32 %v2103, %v2119
        %v2125 = vsel %vm1503, %v2120, 0
        %2127 = vmatpush.msra.mxu0 0.0
        %2128 = vmatpush.msra.mxu0 0.0
        %2129 = vmatpush.msra.mxu0 0.0
        %2130 = vmatpush.msra.mxu0 0.0
        %2131 = vmatpush.msra.mxu0 0.0
        %2132 = vmatpush.msra.mxu0 0.0
        %2133 = vmatpush.msra.mxu0 0.0
        %2134 = vmatpush.msra.mxu0 0.0
        %2135 = vmatpush.msra.mxu0 0.0
        %2136 = vmatpush.msra.mxu0 0.0
        %2137 = vmatpush.msra.mxu0 0.0
        %2138 = vmatpush.msra.mxu0 0.0
        %2139 = vmatpush.msra.mxu0 0.0
        %2140 = vmatpush.msra.mxu0 0.0
        %2141 = vmatpush.msra.mxu0 0.0
        %2142 = vmatpush.msra.mxu0 %v1125
        %2143 = vmatmul.f32.gmra.mxu0 %v2125
        %v2144 = vpop.f32.mrf.mxu0
        %v2145 = vadd.f32 0.0, %v2144
        %2146 = vdwg.mxu0
        %v2148 = vsel %vm1503, %v2121, 0
        %2150 = vmatpush.msra.mxu0 0.0
        %2151 = vmatpush.msra.mxu0 0.0
        %2152 = vmatpush.msra.mxu0 0.0
        %2153 = vmatpush.msra.mxu0 0.0
        %2154 = vmatpush.msra.mxu0 0.0
        %2155 = vmatpush.msra.mxu0 0.0
        %2156 = vmatpush.msra.mxu0 0.0
        %2157 = vmatpush.msra.mxu0 0.0
        %2158 = vmatpush.msra.mxu0 0.0
        %2159 = vmatpush.msra.mxu0 0.0
        %2160 = vmatpush.msra.mxu0 0.0
        %2161 = vmatpush.msra.mxu0 0.0
        %2162 = vmatpush.msra.mxu0 0.0
        %2163 = vmatpush.msra.mxu0 0.0
        %2164 = vmatpush.msra.mxu0 0.0
        %2165 = vmatpush.msra.mxu0 %v1145
        %2166 = vmatmul.f32.gmra.mxu0 %v2148
        %v2167 = vpop.f32.mrf.mxu0
        %v2168 = vadd.f32 0.0, %v2167
        %2169 = vdwg.mxu0
        %v2171 = vsel %vm1503, %v2122, 0
        %2173 = vmatpush.msra.mxu0 0.0
        %2174 = vmatpush.msra.mxu0 0.0
        %2175 = vmatpush.msra.mxu0 0.0
        %2176 = vmatpush.msra.mxu0 0.0
        %2177 = vmatpush.msra.mxu0 0.0
        %2178 = vmatpush.msra.mxu0 0.0
        %2179 = vmatpush.msra.mxu0 0.0
        %2180 = vmatpush.msra.mxu0 0.0
        %2181 = vmatpush.msra.mxu0 0.0
        %2182 = vmatpush.msra.mxu0 0.0
        %2183 = vmatpush.msra.mxu0 0.0
        %2184 = vmatpush.msra.mxu0 0.0
        %2185 = vmatpush.msra.mxu0 0.0
        %2186 = vmatpush.msra.mxu0 0.0
        %2187 = vmatpush.msra.mxu0 0.0
        %2188 = vmatpush.msra.mxu0 %v1165
        %2189 = vmatmul.f32.gmra.mxu0 %v2171
        %v2190 = vpop.f32.mrf.mxu0
        %v2191 = vadd.f32 0.0, %v2190
        %2192 = vdwg.mxu0
        %v2194 = vsel %vm1503, %v2123, 0
        %2196 = vmatpush.msra.mxu0 0.0
        %2197 = vmatpush.msra.mxu0 0.0
        %2198 = vmatpush.msra.mxu0 0.0
        %2199 = vmatpush.msra.mxu0 0.0
        %2200 = vmatpush.msra.mxu0 0.0
        %2201 = vmatpush.msra.mxu0 0.0
        %2202 = vmatpush.msra.mxu0 0.0
        %2203 = vmatpush.msra.mxu0 0.0
        %2204 = vmatpush.msra.mxu0 0.0
        %2205 = vmatpush.msra.mxu0 0.0
        %2206 = vmatpush.msra.mxu0 0.0
        %2207 = vmatpush.msra.mxu0 0.0
        %2208 = vmatpush.msra.mxu0 0.0
        %2209 = vmatpush.msra.mxu0 0.0
        %2210 = vmatpush.msra.mxu0 0.0
        %2211 = vmatpush.msra.mxu0 %v1185
        %2212 = vmatmul.f32.gmra.mxu0 %v2194
        %v2213 = vpop.f32.mrf.mxu0
        %v2214 = vadd.f32 0.0, %v2213
        %2215 = vdwg.mxu0
        %v2217 = vsel %vm1503, %v2145, 0
        %2219 = vmatpush.msra.mxu0 0.0
        %2220 = vmatpush.msra.mxu0 0.0
        %2221 = vmatpush.msra.mxu0 0.0
        %2222 = vmatpush.msra.mxu0 0.0
        %2223 = vmatpush.msra.mxu0 0.0
        %2224 = vmatpush.msra.mxu0 0.0
        %2225 = vmatpush.msra.mxu0 0.0
        %2226 = vmatpush.msra.mxu0 0.0
        %2227 = vmatpush.msra.mxu0 0.0
        %2228 = vmatpush.msra.mxu0 0.0
        %2229 = vmatpush.msra.mxu0 0.0
        %2230 = vmatpush.msra.mxu0 0.0
        %2231 = vmatpush.msra.mxu0 0.0
        %2232 = vmatpush.msra.mxu0 0.0
        %2233 = vmatpush.msra.mxu0 0.0
        %2234 = vmatpush.msra.mxu0 %v933
        %2235 = vmatmul.f32.gmra.mxu0 %v2217
        %v2236 = vpop.f32.mrf.mxu0
        %v2237 = vadd.f32 0.0, %v2236
        %2238 = vdwg.mxu0
        %v2240 = vsel %vm1503, %v2168, 0
        %2242 = vmatpush.msra.mxu0 0.0
        %2243 = vmatpush.msra.mxu0 0.0
        %2244 = vmatpush.msra.mxu0 0.0
        %2245 = vmatpush.msra.mxu0 0.0
        %2246 = vmatpush.msra.mxu0 0.0
        %2247 = vmatpush.msra.mxu0 0.0
        %2248 = vmatpush.msra.mxu0 0.0
        %2249 = vmatpush.msra.mxu0 0.0
        %2250 = vmatpush.msra.mxu0 0.0
        %2251 = vmatpush.msra.mxu0 0.0
        %2252 = vmatpush.msra.mxu0 0.0
        %2253 = vmatpush.msra.mxu0 0.0
        %2254 = vmatpush.msra.mxu0 0.0
        %2255 = vmatpush.msra.mxu0 0.0
        %2256 = vmatpush.msra.mxu0 0.0
        %2257 = vmatpush.msra.mxu0 %v934
        %2258 = vmatmul.f32.gmra.mxu0 %v2240
        %v2259 = vpop.f32.mrf.mxu0
        %v2260 = vadd.f32 0.0, %v2259
        %2261 = vdwg.mxu0
        %v2263 = vsel %vm1503, %v2191, 0
        %2265 = vmatpush.msra.mxu0 0.0
        %2266 = vmatpush.msra.mxu0 0.0
        %2267 = vmatpush.msra.mxu0 0.0
        %2268 = vmatpush.msra.mxu0 0.0
        %2269 = vmatpush.msra.mxu0 0.0
        %2270 = vmatpush.msra.mxu0 0.0
        %2271 = vmatpush.msra.mxu0 0.0
        %2272 = vmatpush.msra.mxu0 0.0
        %2273 = vmatpush.msra.mxu0 0.0
        %2274 = vmatpush.msra.mxu0 0.0
        %2275 = vmatpush.msra.mxu0 0.0
        %2276 = vmatpush.msra.mxu0 0.0
        %2277 = vmatpush.msra.mxu0 0.0
        %2278 = vmatpush.msra.mxu0 0.0
        %2279 = vmatpush.msra.mxu0 0.0
        %2280 = vmatpush.msra.mxu0 %v935
        %2281 = vmatmul.f32.gmra.mxu0 %v2263
        %v2282 = vpop.f32.mrf.mxu0
        %v2283 = vadd.f32 0.0, %v2282
        %2284 = vdwg.mxu0
        %v2286 = vsel %vm1503, %v2214, 0
        %2288 = vmatpush.msra.mxu0 0.0
        %2289 = vmatpush.msra.mxu0 0.0
        %2290 = vmatpush.msra.mxu0 0.0
        %2291 = vmatpush.msra.mxu0 0.0
        %2292 = vmatpush.msra.mxu0 0.0
        %2293 = vmatpush.msra.mxu0 0.0
        %2294 = vmatpush.msra.mxu0 0.0
        %2295 = vmatpush.msra.mxu0 0.0
        %2296 = vmatpush.msra.mxu0 0.0
        %2297 = vmatpush.msra.mxu0 0.0
        %2298 = vmatpush.msra.mxu0 0.0
        %2299 = vmatpush.msra.mxu0 0.0
        %2300 = vmatpush.msra.mxu0 0.0
        %2301 = vmatpush.msra.mxu0 0.0
        %2302 = vmatpush.msra.mxu0 0.0
        %2303 = vmatpush.msra.mxu0 %v936
        %2304 = vmatmul.f32.gmra.mxu0 %v2286
        %v2305 = vpop.f32.mrf.mxu0
        %v2306 = vadd.f32 0.0, %v2305
        %2307 = vdwg.mxu0
        %v2308 = vsel %vm1023, %v2237, 0.0
        %v2309 = vsel %vm1023, %v2260, 0.0
        %v2310 = vadd.f32 %v2308, %v2309
        %v2311 = vsel %vm1023, %v2283, 0.0
        %v2312 = vadd.f32 %v2310, %v2311
        %v2313 = vsel %vm1023, %v2306, 0.0
        %v2314 = vadd.f32 %v2312, %v2313
        %v2316 = vperm.slane %v937, 0
        %v2318 = vadd.f32 %v2314, %v2316
        %v2319 = vadd.f32 %v1847, %v2318
        %v2320 = vsel %vm1023, %v2319, 0.0
        %2321 = vadd.xlane.f32.xlu0 %v2320
        %v2322 = vpop.xlane.xlu0 %2321
        %v2323 = vmul.f32 %v2322, %v1196
        %v2324 = vsub.f32 %v2319, %v2323
        %v2325 = vmul.f32 %v2324, %v2324
        %v2326 = vsel %vm1023, %v2325, 0.0
        %2327 = vadd.xlane.f32.xlu0 %v2326
        %v2328 = vpop.xlane.xlu0 %2327
        %v2329 = vmul.f32 %v2328, %v1196
        %v2330 = vadd.f32 %v2329, 1e-06
        %v2331 = vrsqrt.pop %v2330
        %v2332 = vmul.f32 %v2331, %v2330
        %v2333 = vmul.f32 %v2332, %v2331
        %v2334 = vmul.f32 0.5, %v2333
        %v2335 = vsub.f32 1.5, %v2334
        %v2336 = vmul.f32 %v2331, %v2335
        %vm2337 = vweird.f32 %v2330
        %vm2338 = vweird.f32 %v2331
        %vm2339 = vmor %vm2337, %vm2338
        %v2340 = vsel %vm2339, %v2331, %v2336
        %v2341 = vmul.f32 %v2324, %v2340
        %v2343 = vperm.slane %v806, 0
        %v2345 = vmul.f32 %v2341, %v2343
        %v2347 = vperm.slane %v807, 0
        %v2349 = vadd.f32 %v2345, %v2347
        %v2350 = vrot.slane %v2349, 7
        %v2351 = vmul.f32 %v2350, %v995
        %v2352 = vrot.slane %v2349, 1
        %v2353 = vmul.f32 %v2352, %v998
        %v2355 = vsel %vm1023, %v2349, 0
        %2357 = vmatpush.msra.mxu0 0.0
        %2358 = vmatpush.msra.mxu0 0.0
        %2359 = vmatpush.msra.mxu0 0.0
        %2360 = vmatpush.msra.mxu0 0.0
        %2361 = vmatpush.msra.mxu0 0.0
        %2362 = vmatpush.msra.mxu0 0.0
        %2363 = vmatpush.msra.mxu0 0.0
        %2364 = vmatpush.msra.mxu0 0.0
        %2365 = vmatpush.msra.mxu0 0.0
        %2366 = vmatpush.msra.mxu0 0.0
        %2367 = vmatpush.msra.mxu0 0.0
        %2368 = vmatpush.msra.mxu0 0.0
        %2369 = vmatpush.msra.mxu0 %v946
        %2370 = vmatpush.msra.mxu0 %v945
        %2371 = vmatpush.msra.mxu0 %v944
        %2372 = vmatpush.msra.mxu0 %v943
        %2373 = vmatmul.f32.gmra.mxu0 %v2355
        %v2374 = vpop.f32.mrf.mxu0
        %v2375 = vadd.f32 0.0, %v2374
        %2376 = vdwg.mxu0
        %v2378 = vsel %vm1023, %v2351, 0
        %2380 = vmatpush.msra.mxu0 0.0
        %2381 = vmatpush.msra.mxu0 0.0
        %2382 = vmatpush.msra.mxu0 0.0
        %2383 = vmatpush.msra.mxu0 0.0
        %2384 = vmatpush.msra.mxu0 0.0
        %2385 = vmatpush.msra.mxu0 0.0
        %2386 = vmatpush.msra.mxu0 0.0
        %2387 = vmatpush.msra.mxu0 0.0
        %2388 = vmatpush.msra.mxu0 0.0
        %2389 = vmatpush.msra.mxu0 0.0
        %2390 = vmatpush.msra.mxu0 0.0
        %2391 = vmatpush.msra.mxu0 0.0
        %2392 = vmatpush.msra.mxu0 %v941
        %2393 = vmatpush.msra.mxu0 %v940
        %2394 = vmatpush.msra.mxu0 %v939
        %2395 = vmatpush.msra.mxu0 %v938
        %2396 = vmatmul.f32.gmra.mxu0 %v2378
        %v2397 = vpop.f32.mrf.mxu0
        %v2398 = vadd.f32 %v2375, %v2397
        %2399 = vdwg.mxu0
        %v2401 = vsel %vm1023, %v2353, 0
        %2403 = vmatpush.msra.mxu0 0.0
        %2404 = vmatpush.msra.mxu0 0.0
        %2405 = vmatpush.msra.mxu0 0.0
        %2406 = vmatpush.msra.mxu0 0.0
        %2407 = vmatpush.msra.mxu0 0.0
        %2408 = vmatpush.msra.mxu0 0.0
        %2409 = vmatpush.msra.mxu0 0.0
        %2410 = vmatpush.msra.mxu0 0.0
        %2411 = vmatpush.msra.mxu0 0.0
        %2412 = vmatpush.msra.mxu0 0.0
        %2413 = vmatpush.msra.mxu0 0.0
        %2414 = vmatpush.msra.mxu0 0.0
        %2415 = vmatpush.msra.mxu0 %v951
        %2416 = vmatpush.msra.mxu0 %v950
        %2417 = vmatpush.msra.mxu0 %v949
        %2418 = vmatpush.msra.mxu0 %v948
        %2419 = vmatmul.f32.gmra.mxu0 %v2401
        %v2420 = vpop.f32.mrf.mxu0
        %v2421 = vadd.f32 0.0, %v2420
        %2422 = vdwg.mxu0
        %v2423 = vadd.f32 %v2398, %v2421
        %v2425 = vperm.slane %v978, 0
        %v2427 = vadd.f32 %v2423, %v2425
        %v2428 = vmax.f32 %v2427, 0.0
        %v2429 = vrot.slane %v2428, 7
        %v2430 = vmul.f32 %v2429, %v995
        %v2431 = vrot.slane %v2428, 1
        %v2432 = vmul.f32 %v2431, %v998
        %vm2433 = vcmask 523264
        %v2435 = vsel %vm2433, %v2428, 0
        %2437 = vmatpush.msra.mxu0 0.0
        %2438 = vmatpush.msra.mxu0 0.0
        %2439 = vmatpush.msra.mxu0 0.0
        %2440 = vmatpush.msra.mxu0 0.0
        %2441 = vmatpush.msra.mxu0 0.0
        %2442 = vmatpush.msra.mxu0 0.0
        %2443 = vmatpush.msra.mxu0 0.0
        %2444 = vmatpush.msra.mxu0 0.0
        %2445 = vmatpush.msra.mxu0 %v968
        %2446 = vmatpush.msra.mxu0 %v967
        %2447 = vmatpush.msra.mxu0 %v966
        %2448 = vmatpush.msra.mxu0 %v965
        %2449 = vmatpush.msra.mxu0 %v964
        %2450 = vmatpush.msra.mxu0 %v963
        %2451 = vmatpush.msra.mxu0 %v962
        %2452 = vmatpush.msra.mxu0 %v961
        %2453 = vmatmul.f32.gmra.mxu0 %v2435
        %v2454 = vpop.f32.mrf.mxu0
        %v2455 = vadd.f32 0.0, %v2454
        %2456 = vdwg.mxu0
        %v2458 = vsel %vm2433, %v2430, 0
        %2460 = vmatpush.msra.mxu0 0.0
        %2461 = vmatpush.msra.mxu0 0.0
        %2462 = vmatpush.msra.mxu0 0.0
        %2463 = vmatpush.msra.mxu0 0.0
        %2464 = vmatpush.msra.mxu0 0.0
        %2465 = vmatpush.msra.mxu0 0.0
        %2466 = vmatpush.msra.mxu0 0.0
        %2467 = vmatpush.msra.mxu0 0.0
        %2468 = vmatpush.msra.mxu0 %v959
        %2469 = vmatpush.msra.mxu0 %v958
        %2470 = vmatpush.msra.mxu0 %v957
        %2471 = vmatpush.msra.mxu0 %v956
        %2472 = vmatpush.msra.mxu0 %v955
        %2473 = vmatpush.msra.mxu0 %v954
        %2474 = vmatpush.msra.mxu0 %v953
        %2475 = vmatpush.msra.mxu0 %v952
        %2476 = vmatmul.f32.gmra.mxu0 %v2458
        %v2477 = vpop.f32.mrf.mxu0
        %v2478 = vadd.f32 %v2455, %v2477
        %2479 = vdwg.mxu0
        %v2481 = vsel %vm2433, %v2432, 0
        %2483 = vmatpush.msra.mxu0 0.0
        %2484 = vmatpush.msra.mxu0 0.0
        %2485 = vmatpush.msra.mxu0 0.0
        %2486 = vmatpush.msra.mxu0 0.0
        %2487 = vmatpush.msra.mxu0 0.0
        %2488 = vmatpush.msra.mxu0 0.0
        %2489 = vmatpush.msra.mxu0 0.0
        %2490 = vmatpush.msra.mxu0 0.0
        %2491 = vmatpush.msra.mxu0 %v977
        %2492 = vmatpush.msra.mxu0 %v976
        %2493 = vmatpush.msra.mxu0 %v975
        %2494 = vmatpush.msra.mxu0 %v974
        %2495 = vmatpush.msra.mxu0 %v973
        %2496 = vmatpush.msra.mxu0 %v972
        %2497 = vmatpush.msra.mxu0 %v971
        %2498 = vmatpush.msra.mxu0 %v970
        %2499 = vmatmul.f32.gmra.mxu0 %v2481
        %v2500 = vpop.f32.mrf.mxu0
        %v2501 = vadd.f32 0.0, %v2500
        %2502 = vdwg.mxu0
        %v2503 = vadd.f32 %v2478, %v2501
        %v2505 = vperm.slane %v979, 0
        %v2507 = vadd.f32 %v2503, %v2505
        %v2508 = vadd.f32 %v2319, %v2507
        %v2509 = vsel %vm1023, %v2508, 0.0
        %2510 = vadd.xlane.f32.xlu0 %v2509
        %v2511 = vpop.xlane.xlu0 %2510
        %v2512 = vmul.f32 %v2511, %v1196
        %v2513 = vsub.f32 %v2508, %v2512
        %v2514 = vmul.f32 %v2513, %v2513
        %v2515 = vsel %vm1023, %v2514, 0.0
        %2516 = vadd.xlane.f32.xlu0 %v2515
        %v2517 = vpop.xlane.xlu0 %2516
        %v2518 = vmul.f32 %v2517, %v1196
        %v2519 = vadd.f32 %v2518, 1e-06
        %v2520 = vrsqrt.pop %v2519
        %v2521 = vmul.f32 %v2520, %v2519
        %v2522 = vmul.f32 %v2521, %v2520
        %v2523 = vmul.f32 0.5, %v2522
        %v2524 = vsub.f32 1.5, %v2523
        %v2525 = vmul.f32 %v2520, %v2524
        %vm2526 = vweird.f32 %v2519
        %vm2527 = vweird.f32 %v2520
        %vm2528 = vmor %vm2526, %vm2527
        %v2529 = vsel %vm2528, %v2520, %v2525
        %v2530 = vmul.f32 %v2513, %v2529
        %v2531 = vmul.f32 %v2530, %v1217
        %v2532 = vadd.f32 %v2531, %v1221
        %v2534 = vsel %vm1023, %v2532, 0
        %2536 = vmatpush.msra.mxu0 0.0
        %2537 = vmatpush.msra.mxu0 0.0
        %2538 = vmatpush.msra.mxu0 0.0
        %2539 = vmatpush.msra.mxu0 0.0
        %2540 = vmatpush.msra.mxu0 0.0
        %2541 = vmatpush.msra.mxu0 0.0
        %2542 = vmatpush.msra.mxu0 0.0
        %2543 = vmatpush.msra.mxu0 0.0
        %2544 = vmatpush.msra.mxu0 0.0
        %2545 = vmatpush.msra.mxu0 0.0
        %2546 = vmatpush.msra.mxu0 0.0
        %2547 = vmatpush.msra.mxu0 0.0
        %2548 = vmatpush.msra.mxu0 %v811
        %2549 = vmatpush.msra.mxu0 %v810
        %2550 = vmatpush.msra.mxu0 %v809
        %2551 = vmatpush.msra.mxu0 %v808
        %2552 = vmatmul.f32.gmra.mxu0 %v2534
        %v2553 = vpop.f32.mrf.mxu0
        %v2554 = vadd.f32 %v1236, %v2553
        %2555 = vdwg.mxu0
        %2556 = vmatpush.msra.mxu0 0.0
        %2557 = vmatpush.msra.mxu0 0.0
        %2558 = vmatpush.msra.mxu0 0.0
        %2559 = vmatpush.msra.mxu0 0.0
        %2560 = vmatpush.msra.mxu0 0.0
        %2561 = vmatpush.msra.mxu0 0.0
        %2562 = vmatpush.msra.mxu0 0.0
        %2563 = vmatpush.msra.mxu0 0.0
        %2564 = vmatpush.msra.mxu0 0.0
        %2565 = vmatpush.msra.mxu0 0.0
        %2566 = vmatpush.msra.mxu0 0.0
        %2567 = vmatpush.msra.mxu0 0.0
        %2568 = vmatpush.msra.mxu0 %v815
        %2569 = vmatpush.msra.mxu0 %v814
        %2570 = vmatpush.msra.mxu0 %v813
        %2571 = vmatpush.msra.mxu0 %v812
        %2572 = vmatmul.f32.gmra.mxu0 %v2534
        %v2573 = vpop.f32.mrf.mxu0
        %v2574 = vadd.f32 %v1237, %v2573
        %2575 = vdwg.mxu0
        %2576 = vmatpush.msra.mxu0 0.0
        %2577 = vmatpush.msra.mxu0 0.0
        %2578 = vmatpush.msra.mxu0 0.0
        %2579 = vmatpush.msra.mxu0 0.0
        %2580 = vmatpush.msra.mxu0 0.0
        %2581 = vmatpush.msra.mxu0 0.0
        %2582 = vmatpush.msra.mxu0 0.0
        %2583 = vmatpush.msra.mxu0 0.0
        %2584 = vmatpush.msra.mxu0 0.0
        %2585 = vmatpush.msra.mxu0 0.0
        %2586 = vmatpush.msra.mxu0 0.0
        %2587 = vmatpush.msra.mxu0 0.0
        %2588 = vmatpush.msra.mxu0 %v819
        %2589 = vmatpush.msra.mxu0 %v818
        %2590 = vmatpush.msra.mxu0 %v817
        %2591 = vmatpush.msra.mxu0 %v816
        %2592 = vmatmul.f32.gmra.mxu0 %v2534
        %v2593 = vpop.f32.mrf.mxu0
        %v2594 = vadd.f32 %v1238, %v2593
        %2595 = vdwg.mxu0
        %2596 = vmatpush.msra.mxu0 0.0
        %2597 = vmatpush.msra.mxu0 0.0
        %2598 = vmatpush.msra.mxu0 0.0
        %2599 = vmatpush.msra.mxu0 0.0
        %2600 = vmatpush.msra.mxu0 0.0
        %2601 = vmatpush.msra.mxu0 0.0
        %2602 = vmatpush.msra.mxu0 0.0
        %2603 = vmatpush.msra.mxu0 0.0
        %2604 = vmatpush.msra.mxu0 0.0
        %2605 = vmatpush.msra.mxu0 0.0
        %2606 = vmatpush.msra.mxu0 0.0
        %2607 = vmatpush.msra.mxu0 0.0
        %2608 = vmatpush.msra.mxu0 %v823
        %2609 = vmatpush.msra.mxu0 %v822
        %2610 = vmatpush.msra.mxu0 %v821
        %2611 = vmatpush.msra.mxu0 %v820
        %2612 = vmatmul.f32.gmra.mxu0 %v2534
        %v2613 = vpop.f32.mrf.mxu0
        %v2614 = vadd.f32 %v1239, %v2613
        %2615 = vdwg.mxu0
        %2616 = vmatpush.msra.mxu0 0.0
        %2617 = vmatpush.msra.mxu0 0.0
        %2618 = vmatpush.msra.mxu0 0.0
        %2619 = vmatpush.msra.mxu0 0.0
        %2620 = vmatpush.msra.mxu0 0.0
        %2621 = vmatpush.msra.mxu0 0.0
        %2622 = vmatpush.msra.mxu0 0.0
        %2623 = vmatpush.msra.mxu0 0.0
        %2624 = vmatpush.msra.mxu0 0.0
        %2625 = vmatpush.msra.mxu0 0.0
        %2626 = vmatpush.msra.mxu0 0.0
        %2627 = vmatpush.msra.mxu0 0.0
        %2628 = vmatpush.msra.mxu0 %v827
        %2629 = vmatpush.msra.mxu0 %v826
        %2630 = vmatpush.msra.mxu0 %v825
        %2631 = vmatpush.msra.mxu0 %v824
        %2632 = vmatmul.f32.gmra.mxu0 %v2534
        %v2633 = vpop.f32.mrf.mxu0
        %v2634 = vadd.f32 %v1240, %v2633
        %2635 = vdwg.mxu0
        %2636 = vmatpush.msra.mxu0 0.0
        %2637 = vmatpush.msra.mxu0 0.0
        %2638 = vmatpush.msra.mxu0 0.0
        %2639 = vmatpush.msra.mxu0 0.0
        %2640 = vmatpush.msra.mxu0 0.0
        %2641 = vmatpush.msra.mxu0 0.0
        %2642 = vmatpush.msra.mxu0 0.0
        %2643 = vmatpush.msra.mxu0 0.0
        %2644 = vmatpush.msra.mxu0 0.0
        %2645 = vmatpush.msra.mxu0 0.0
        %2646 = vmatpush.msra.mxu0 0.0
        %2647 = vmatpush.msra.mxu0 0.0
        %2648 = vmatpush.msra.mxu0 %v831
        %2649 = vmatpush.msra.mxu0 %v830
        %2650 = vmatpush.msra.mxu0 %v829
        %2651 = vmatpush.msra.mxu0 %v828
        %2652 = vmatmul.f32.gmra.mxu0 %v2534
        %v2653 = vpop.f32.mrf.mxu0
        %v2654 = vadd.f32 %v1241, %v2653
        %2655 = vdwg.mxu0
        %2656 = vmatpush.msra.mxu0 0.0
        %2657 = vmatpush.msra.mxu0 0.0
        %2658 = vmatpush.msra.mxu0 0.0
        %2659 = vmatpush.msra.mxu0 0.0
        %2660 = vmatpush.msra.mxu0 0.0
        %2661 = vmatpush.msra.mxu0 0.0
        %2662 = vmatpush.msra.mxu0 0.0
        %2663 = vmatpush.msra.mxu0 0.0
        %2664 = vmatpush.msra.mxu0 0.0
        %2665 = vmatpush.msra.mxu0 0.0
        %2666 = vmatpush.msra.mxu0 0.0
        %2667 = vmatpush.msra.mxu0 0.0
        %2668 = vmatpush.msra.mxu0 %v835
        %2669 = vmatpush.msra.mxu0 %v834
        %2670 = vmatpush.msra.mxu0 %v833
        %2671 = vmatpush.msra.mxu0 %v832
        %2672 = vmatmul.f32.gmra.mxu0 %v2534
        %v2673 = vpop.f32.mrf.mxu0
        %v2674 = vadd.f32 %v1242, %v2673
        %2675 = vdwg.mxu0
        %2676 = vmatpush.msra.mxu0 0.0
        %2677 = vmatpush.msra.mxu0 0.0
        %2678 = vmatpush.msra.mxu0 0.0
        %2679 = vmatpush.msra.mxu0 0.0
        %2680 = vmatpush.msra.mxu0 0.0
        %2681 = vmatpush.msra.mxu0 0.0
        %2682 = vmatpush.msra.mxu0 0.0
        %2683 = vmatpush.msra.mxu0 0.0
        %2684 = vmatpush.msra.mxu0 0.0
        %2685 = vmatpush.msra.mxu0 0.0
        %2686 = vmatpush.msra.mxu0 0.0
        %2687 = vmatpush.msra.mxu0 0.0
        %2688 = vmatpush.msra.mxu0 %v839
        %2689 = vmatpush.msra.mxu0 %v838
        %2690 = vmatpush.msra.mxu0 %v837
        %2691 = vmatpush.msra.mxu0 %v836
        %2692 = vmatmul.f32.gmra.mxu0 %v2534
        %v2693 = vpop.f32.mrf.mxu0
        %v2694 = vadd.f32 %v1243, %v2693
        %2695 = vdwg.mxu0
        %2696 = vmatpush.msra.mxu0 0.0
        %2697 = vmatpush.msra.mxu0 0.0
        %2698 = vmatpush.msra.mxu0 0.0
        %2699 = vmatpush.msra.mxu0 0.0
        %2700 = vmatpush.msra.mxu0 0.0
        %2701 = vmatpush.msra.mxu0 0.0
        %2702 = vmatpush.msra.mxu0 0.0
        %2703 = vmatpush.msra.mxu0 0.0
        %2704 = vmatpush.msra.mxu0 0.0
        %2705 = vmatpush.msra.mxu0 0.0
        %2706 = vmatpush.msra.mxu0 0.0
        %2707 = vmatpush.msra.mxu0 0.0
        %2708 = vmatpush.msra.mxu0 %v843
        %2709 = vmatpush.msra.mxu0 %v842
        %2710 = vmatpush.msra.mxu0 %v841
        %2711 = vmatpush.msra.mxu0 %v840
        %2712 = vmatmul.f32.gmra.mxu0 %v2534
        %v2713 = vpop.f32.mrf.mxu0
        %v2714 = vadd.f32 %v1244, %v2713
        %2715 = vdwg.mxu0
        %2716 = vmatpush.msra.mxu0 0.0
        %2717 = vmatpush.msra.mxu0 0.0
        %2718 = vmatpush.msra.mxu0 0.0
        %2719 = vmatpush.msra.mxu0 0.0
        %2720 = vmatpush.msra.mxu0 0.0
        %2721 = vmatpush.msra.mxu0 0.0
        %2722 = vmatpush.msra.mxu0 0.0
        %2723 = vmatpush.msra.mxu0 0.0
        %2724 = vmatpush.msra.mxu0 0.0
        %2725 = vmatpush.msra.mxu0 0.0
        %2726 = vmatpush.msra.mxu0 0.0
        %2727 = vmatpush.msra.mxu0 0.0
        %2728 = vmatpush.msra.mxu0 %v847
        %2729 = vmatpush.msra.mxu0 %v846
        %2730 = vmatpush.msra.mxu0 %v845
        %2731 = vmatpush.msra.mxu0 %v844
        %2732 = vmatmul.f32.gmra.mxu0 %v2534
        %v2733 = vpop.f32.mrf.mxu0
        %v2734 = vadd.f32 %v1245, %v2733
        %2735 = vdwg.mxu0
        %2736 = vmatpush.msra.mxu0 0.0
        %2737 = vmatpush.msra.mxu0 0.0
        %2738 = vmatpush.msra.mxu0 0.0
        %2739 = vmatpush.msra.mxu0 0.0
        %2740 = vmatpush.msra.mxu0 0.0
        %2741 = vmatpush.msra.mxu0 0.0
        %2742 = vmatpush.msra.mxu0 0.0
        %2743 = vmatpush.msra.mxu0 0.0
        %2744 = vmatpush.msra.mxu0 0.0
        %2745 = vmatpush.msra.mxu0 0.0
        %2746 = vmatpush.msra.mxu0 0.0
        %2747 = vmatpush.msra.mxu0 0.0
        %2748 = vmatpush.msra.mxu0 %v851
        %2749 = vmatpush.msra.mxu0 %v850
        %2750 = vmatpush.msra.mxu0 %v849
        %2751 = vmatpush.msra.mxu0 %v848
        %2752 = vmatmul.f32.gmra.mxu0 %v2534
        %v2753 = vpop.f32.mrf.mxu0
        %v2754 = vadd.f32 %v1246, %v2753
        %2755 = vdwg.mxu0
        %2756 = vmatpush.msra.mxu0 0.0
        %2757 = vmatpush.msra.mxu0 0.0
        %2758 = vmatpush.msra.mxu0 0.0
        %2759 = vmatpush.msra.mxu0 0.0
        %2760 = vmatpush.msra.mxu0 0.0
        %2761 = vmatpush.msra.mxu0 0.0
        %2762 = vmatpush.msra.mxu0 0.0
        %2763 = vmatpush.msra.mxu0 0.0
        %2764 = vmatpush.msra.mxu0 0.0
        %2765 = vmatpush.msra.mxu0 0.0
        %2766 = vmatpush.msra.mxu0 0.0
        %2767 = vmatpush.msra.mxu0 0.0
        %2768 = vmatpush.msra.mxu0 %v855
        %2769 = vmatpush.msra.mxu0 %v854
        %2770 = vmatpush.msra.mxu0 %v853
        %2771 = vmatpush.msra.mxu0 %v852
        %2772 = vmatmul.f32.gmra.mxu0 %v2534
        %v2773 = vpop.f32.mrf.mxu0
        %v2774 = vadd.f32 %v1247, %v2773
        %2775 = vdwg.mxu0
        %v2777 = vsel %vm1503, %v2554, 0
        %v2780 = vsel %vm1503, %v2634, 0
        %2782 = vmatpush.xpose.msra.mxu0 0.0
        %2783 = vmatpush.xpose.msra.mxu0 0.0
        %2784 = vmatpush.xpose.msra.mxu0 0.0
        %2785 = vmatpush.xpose.msra.mxu0 0.0
        %2786 = vmatpush.xpose.msra.mxu0 0.0
        %2787 = vmatpush.xpose.msra.mxu0 0.0
        %2788 = vmatpush.xpose.msra.mxu0 0.0
        %2789 = vmatpush.xpose.msra.mxu0 0.0
        %2790 = vmatpush.xpose.msra.mxu0 0.0
        %2791 = vmatpush.xpose.msra.mxu0 0.0
        %2792 = vmatpush.xpose.msra.mxu0 0.0
        %2793 = vmatpush.xpose.msra.mxu0 0.0
        %2794 = vmatpush.xpose.msra.mxu0 0.0
        %2795 = vmatpush.xpose.msra.mxu0 0.0
        %2796 = vmatpush.xpose.msra.mxu0 0.0
        %2797 = vmatpush.xpose.msra.mxu0 %v2780
        %2798 = vmatmul.f32.gmra.mxu0 %v2777
        %v2799 = vpop.f32.mrf.mxu0
        %v2800 = vadd.f32 %v991, %v2799
        %2801 = vdwg.mxu0
        %v2803 = vsel %vm1503, %v2574, 0
        %v2806 = vsel %vm1503, %v2654, 0
        %2808 = vmatpush.xpose.msra.mxu0 0.0
        %2809 = vmatpush.xpose.msra.mxu0 0.0
        %2810 = vmatpush.xpose.msra.mxu0 0.0
        %2811 = vmatpush.xpose.msra.mxu0 0.0
        %2812 = vmatpush.xpose.msra.mxu0 0.0
        %2813 = vmatpush.xpose.msra.mxu0 0.0
        %2814 = vmatpush.xpose.msra.mxu0 0.0
        %2815 = vmatpush.xpose.msra.mxu0 0.0
        %2816 = vmatpush.xpose.msra.mxu0 0.0
        %2817 = vmatpush.xpose.msra.mxu0 0.0
        %2818 = vmatpush.xpose.msra.mxu0 0.0
        %2819 = vmatpush.xpose.msra.mxu0 0.0
        %2820 = vmatpush.xpose.msra.mxu0 0.0
        %2821 = vmatpush.xpose.msra.mxu0 0.0
        %2822 = vmatpush.xpose.msra.mxu0 0.0
        %2823 = vmatpush.xpose.msra.mxu0 %v2806
        %2824 = vmatmul.f32.gmra.mxu0 %v2803
        %v2825 = vpop.f32.mrf.mxu0
        %v2826 = vadd.f32 %v991, %v2825
        %2827 = vdwg.mxu0
        %v2829 = vsel %vm1503, %v2594, 0
        %v2832 = vsel %vm1503, %v2674, 0
        %2834 = vmatpush.xpose.msra.mxu0 0.0
        %2835 = vmatpush.xpose.msra.mxu0 0.0
        %2836 = vmatpush.xpose.msra.mxu0 0.0
        %2837 = vmatpush.xpose.msra.mxu0 0.0
        %2838 = vmatpush.xpose.msra.mxu0 0.0
        %2839 = vmatpush.xpose.msra.mxu0 0.0
        %2840 = vmatpush.xpose.msra.mxu0 0.0
        %2841 = vmatpush.xpose.msra.mxu0 0.0
        %2842 = vmatpush.xpose.msra.mxu0 0.0
        %2843 = vmatpush.xpose.msra.mxu0 0.0
        %2844 = vmatpush.xpose.msra.mxu0 0.0
        %2845 = vmatpush.xpose.msra.mxu0 0.0
        %2846 = vmatpush.xpose.msra.mxu0 0.0
        %2847 = vmatpush.xpose.msra.mxu0 0.0
        %2848 = vmatpush.xpose.msra.mxu0 0.0
        %2849 = vmatpush.xpose.msra.mxu0 %v2832
        %2850 = vmatmul.f32.gmra.mxu0 %v2829
        %v2851 = vpop.f32.mrf.mxu0
        %v2852 = vadd.f32 %v991, %v2851
        %2853 = vdwg.mxu0
        %v2855 = vsel %vm1503, %v2614, 0
        %v2858 = vsel %vm1503, %v2694, 0
        %2860 = vmatpush.xpose.msra.mxu0 0.0
        %2861 = vmatpush.xpose.msra.mxu0 0.0
        %2862 = vmatpush.xpose.msra.mxu0 0.0
        %2863 = vmatpush.xpose.msra.mxu0 0.0
        %2864 = vmatpush.xpose.msra.mxu0 0.0
        %2865 = vmatpush.xpose.msra.mxu0 0.0
        %2866 = vmatpush.xpose.msra.mxu0 0.0
        %2867 = vmatpush.xpose.msra.mxu0 0.0
        %2868 = vmatpush.xpose.msra.mxu0 0.0
        %2869 = vmatpush.xpose.msra.mxu0 0.0
        %2870 = vmatpush.xpose.msra.mxu0 0.0
        %2871 = vmatpush.xpose.msra.mxu0 0.0
        %2872 = vmatpush.xpose.msra.mxu0 0.0
        %2873 = vmatpush.xpose.msra.mxu0 0.0
        %2874 = vmatpush.xpose.msra.mxu0 0.0
        %2875 = vmatpush.xpose.msra.mxu0 %v2858
        %2876 = vmatmul.f32.gmra.mxu0 %v2855
        %v2877 = vpop.f32.mrf.mxu0
        %v2878 = vadd.f32 %v991, %v2877
        %2879 = vdwg.mxu0
        %v2880 = vsel %vm1503, %v2800, -inf
        %2881 = vmax.xlane.f32.xlu0 %v2880
        %v2882 = vpop.xlane.xlu0 %2881
        %v2883 = vsel %vm1503, %v2826, -inf
        %2884 = vmax.xlane.f32.xlu0 %v2883
        %v2885 = vpop.xlane.xlu0 %2884
        %v2886 = vsel %vm1503, %v2852, -inf
        %2887 = vmax.xlane.f32.xlu0 %v2886
        %v2888 = vpop.xlane.xlu0 %2887
        %v2889 = vsel %vm1503, %v2878, -inf
        %2890 = vmax.xlane.f32.xlu0 %v2889
        %v2891 = vpop.xlane.xlu0 %2890
        %v2892 = vsub.f32 %v2800, %v2882
        %v2893 = vsub.f32 %v2826, %v2885
        %v2894 = vsub.f32 %v2852, %v2888
        %v2895 = vsub.f32 %v2878, %v2891
        %v2896 = vmul.f32 %v2892, 1.442695
        %v2897 = vpow.pop %v2896
        %v2898 = vmul.f32 %v2893, 1.442695
        %v2899 = vpow.pop %v2898
        %v2900 = vmul.f32 %v2894, 1.442695
        %v2901 = vpow.pop %v2900
        %v2902 = vmul.f32 %v2895, 1.442695
        %v2903 = vpow.pop %v2902
        %v2904 = vsel %vm1503, %v2897, 0.0
        %2905 = vadd.xlane.f32.xlu0 %v2904
        %v2906 = vpop.xlane.xlu0 %2905
        %v2907 = vsel %vm1503, %v2899, 0.0
        %2908 = vadd.xlane.f32.xlu0 %v2907
        %v2909 = vpop.xlane.xlu0 %2908
        %v2910 = vsel %vm1503, %v2901, 0.0
        %2911 = vadd.xlane.f32.xlu0 %v2910
        %v2912 = vpop.xlane.xlu0 %2911
        %v2913 = vsel %vm1503, %v2903, 0.0
        %2914 = vadd.xlane.f32.xlu0 %v2913
        %v2915 = vpop.xlane.xlu0 %2914
        %v2916 = vrcp.pop %v2906
        %v2917 = vrcp.pop %v2909
        %v2918 = vrcp.pop %v2912
        %v2919 = vrcp.pop %v2915
        %v2920 = vmul.f32 %v2897, %v2916
        %v2921 = vmul.f32 %v2899, %v2917
        %v2922 = vmul.f32 %v2901, %v2918
        %v2923 = vmul.f32 %v2903, %v2919
        %v2925 = vsel %vm1503, %v2920, 0
        %2927 = vmatpush.msra.mxu0 0.0
        %2928 = vmatpush.msra.mxu0 0.0
        %2929 = vmatpush.msra.mxu0 0.0
        %2930 = vmatpush.msra.mxu0 0.0
        %2931 = vmatpush.msra.mxu0 0.0
        %2932 = vmatpush.msra.mxu0 0.0
        %2933 = vmatpush.msra.mxu0 0.0
        %2934 = vmatpush.msra.mxu0 0.0
        %2935 = vmatpush.msra.mxu0 0.0
        %2936 = vmatpush.msra.mxu0 0.0
        %2937 = vmatpush.msra.mxu0 0.0
        %2938 = vmatpush.msra.mxu0 0.0
        %2939 = vmatpush.msra.mxu0 0.0
        %2940 = vmatpush.msra.mxu0 0.0
        %2941 = vmatpush.msra.mxu0 0.0
        %2942 = vmatpush.msra.mxu0 %v2714
        %2943 = vmatmul.f32.gmra.mxu0 %v2925
        %v2944 = vpop.f32.mrf.mxu0
        %v2945 = vadd.f32 0.0, %v2944
        %2946 = vdwg.mxu0
        %v2948 = vsel %vm1503, %v2921, 0
        %2950 = vmatpush.msra.mxu0 0.0
        %2951 = vmatpush.msra.mxu0 0.0
        %2952 = vmatpush.msra.mxu0 0.0
        %2953 = vmatpush.msra.mxu0 0.0
        %2954 = vmatpush.msra.mxu0 0.0
        %2955 = vmatpush.msra.mxu0 0.0
        %2956 = vmatpush.msra.mxu0 0.0
        %2957 = vmatpush.msra.mxu0 0.0
        %2958 = vmatpush.msra.mxu0 0.0
        %2959 = vmatpush.msra.mxu0 0.0
        %2960 = vmatpush.msra.mxu0 0.0
        %2961 = vmatpush.msra.mxu0 0.0
        %2962 = vmatpush.msra.mxu0 0.0
        %2963 = vmatpush.msra.mxu0 0.0
        %2964 = vmatpush.msra.mxu0 0.0
        %2965 = vmatpush.msra.mxu0 %v2734
        %2966 = vmatmul.f32.gmra.mxu0 %v2948
        %v2967 = vpop.f32.mrf.mxu0
        %v2968 = vadd.f32 0.0, %v2967
        %2969 = vdwg.mxu0
        %v2971 = vsel %vm1503, %v2922, 0
        %2973 = vmatpush.msra.mxu0 0.0
        %2974 = vmatpush.msra.mxu0 0.0
        %2975 = vmatpush.msra.mxu0 0.0
        %2976 = vmatpush.msra.mxu0 0.0
        %2977 = vmatpush.msra.mxu0 0.0
        %2978 = vmatpush.msra.mxu0 0.0
        %2979 = vmatpush.msra.mxu0 0.0
        %2980 = vmatpush.msra.mxu0 0.0
        %2981 = vmatpush.msra.mxu0 0.0
        %2982 = vmatpush.msra.mxu0 0.0
        %2983 = vmatpush.msra.mxu0 0.0
        %2984 = vmatpush.msra.mxu0 0.0
        %2985 = vmatpush.msra.mxu0 0.0
        %2986 = vmatpush.msra.mxu0 0.0
        %2987 = vmatpush.msra.mxu0 0.0
        %2988 = vmatpush.msra.mxu0 %v2754
        %2989 = vmatmul.f32.gmra.mxu0 %v2971
        %v2990 = vpop.f32.mrf.mxu0
        %v2991 = vadd.f32 0.0, %v2990
        %2992 = vdwg.mxu0
        %v2994 = vsel %vm1503, %v2923, 0
        %2996 = vmatpush.msra.mxu0 0.0
        %2997 = vmatpush.msra.mxu0 0.0
        %2998 = vmatpush.msra.mxu0 0.0
        %2999 = vmatpush.msra.mxu0 0.0
        %3000 = vmatpush.msra.mxu0 0.0
        %3001 = vmatpush.msra.mxu0 0.0
        %3002 = vmatpush.msra.mxu0 0.0
        %3003 = vmatpush.msra.mxu0 0.0
        %3004 = vmatpush.msra.mxu0 0.0
        %3005 = vmatpush.msra.mxu0 0.0
        %3006 = vmatpush.msra.mxu0 0.0
        %3007 = vmatpush.msra.mxu0 0.0
        %3008 = vmatpush.msra.mxu0 0.0
        %3009 = vmatpush.msra.mxu0 0.0
        %3010 = vmatpush.msra.mxu0 0.0
        %3011 = vmatpush.msra.mxu0 %v2774
        %3012 = vmatmul.f32.gmra.mxu0 %v2994
        %v3013 = vpop.f32.mrf.mxu0
        %v3014 = vadd.f32 0.0, %v3013
        %3015 = vdwg.mxu0
        %v3017 = vsel %vm1503, %v2945, 0
        %3019 = vmatpush.msra.mxu0 0.0
        %3020 = vmatpush.msra.mxu0 0.0
        %3021 = vmatpush.msra.mxu0 0.0
        %3022 = vmatpush.msra.mxu0 0.0
        %3023 = vmatpush.msra.mxu0 0.0
        %3024 = vmatpush.msra.mxu0 0.0
        %3025 = vmatpush.msra.mxu0 0.0
        %3026 = vmatpush.msra.mxu0 0.0
        %3027 = vmatpush.msra.mxu0 0.0
        %3028 = vmatpush.msra.mxu0 0.0
        %3029 = vmatpush.msra.mxu0 0.0
        %3030 = vmatpush.msra.mxu0 0.0
        %3031 = vmatpush.msra.mxu0 0.0
        %3032 = vmatpush.msra.mxu0 0.0
        %3033 = vmatpush.msra.mxu0 0.0
        %3034 = vmatpush.msra.mxu0 %v868
        %3035 = vmatmul.f32.gmra.mxu0 %v3017
        %v3036 = vpop.f32.mrf.mxu0
        %v3037 = vadd.f32 0.0, %v3036
        %3038 = vdwg.mxu0
        %v3040 = vsel %vm1503, %v2968, 0
        %3042 = vmatpush.msra.mxu0 0.0
        %3043 = vmatpush.msra.mxu0 0.0
        %3044 = vmatpush.msra.mxu0 0.0
        %3045 = vmatpush.msra.mxu0 0.0
        %3046 = vmatpush.msra.mxu0 0.0
        %3047 = vmatpush.msra.mxu0 0.0
        %3048 = vmatpush.msra.mxu0 0.0
        %3049 = vmatpush.msra.mxu0 0.0
        %3050 = vmatpush.msra.mxu0 0.0
        %3051 = vmatpush.msra.mxu0 0.0
        %3052 = vmatpush.msra.mxu0 0.0
        %3053 = vmatpush.msra.mxu0 0.0
        %3054 = vmatpush.msra.mxu0 0.0
        %3055 = vmatpush.msra.mxu0 0.0
        %3056 = vmatpush.msra.mxu0 0.0
        %3057 = vmatpush.msra.mxu0 %v869
        %3058 = vmatmul.f32.gmra.mxu0 %v3040
        %v3059 = vpop.f32.mrf.mxu0
        %v3060 = vadd.f32 0.0, %v3059
        %3061 = vdwg.mxu0
        %v3063 = vsel %vm1503, %v2991, 0
        %3065 = vmatpush.msra.mxu0 0.0
        %3066 = vmatpush.msra.mxu0 0.0
        %3067 = vmatpush.msra.mxu0 0.0
        %3068 = vmatpush.msra.mxu0 0.0
        %3069 = vmatpush.msra.mxu0 0.0
        %3070 = vmatpush.msra.mxu0 0.0
        %3071 = vmatpush.msra.mxu0 0.0
        %3072 = vmatpush.msra.mxu0 0.0
        %3073 = vmatpush.msra.mxu0 0.0
        %3074 = vmatpush.msra.mxu0 0.0
        %3075 = vmatpush.msra.mxu0 0.0
        %3076 = vmatpush.msra.mxu0 0.0
        %3077 = vmatpush.msra.mxu0 0.0
        %3078 = vmatpush.msra.mxu0 0.0
        %3079 = vmatpush.msra.mxu0 0.0
        %3080 = vmatpush.msra.mxu0 %v870
        %3081 = vmatmul.f32.gmra.mxu0 %v3063
        %v3082 = vpop.f32.mrf.mxu0
        %v3083 = vadd.f32 0.0, %v3082
        %3084 = vdwg.mxu0
        %v3086 = vsel %vm1503, %v3014, 0
        %3088 = vmatpush.msra.mxu0 0.0
        %3089 = vmatpush.msra.mxu0 0.0
        %3090 = vmatpush.msra.mxu0 0.0
        %3091 = vmatpush.msra.mxu0 0.0
        %3092 = vmatpush.msra.mxu0 0.0
        %3093 = vmatpush.msra.mxu0 0.0
        %3094 = vmatpush.msra.mxu0 0.0
        %3095 = vmatpush.msra.mxu0 0.0
        %3096 = vmatpush.msra.mxu0 0.0
        %3097 = vmatpush.msra.mxu0 0.0
        %3098 = vmatpush.msra.mxu0 0.0
        %3099 = vmatpush.msra.mxu0 0.0
        %3100 = vmatpush.msra.mxu0 0.0
        %3101 = vmatpush.msra.mxu0 0.0
        %3102 = vmatpush.msra.mxu0 0.0
        %3103 = vmatpush.msra.mxu0 %v871
        %3104 = vmatmul.f32.gmra.mxu0 %v3086
        %v3105 = vpop.f32.mrf.mxu0
        %v3106 = vadd.f32 0.0, %v3105
        %3107 = vdwg.mxu0
        %v3108 = vsel %vm1023, %v3037, 0.0
        %v3109 = vsel %vm1023, %v3060, 0.0
        %v3110 = vadd.f32 %v3108, %v3109
        %v3111 = vsel %vm1023, %v3083, 0.0
        %v3112 = vadd.f32 %v3110, %v3111
        %v3113 = vsel %vm1023, %v3106, 0.0
        %v3114 = vadd.f32 %v3112, %v3113
        %v3115 = vadd.f32 %v3114, %v1844
        %v3116 = vadd.f32 %v2508, %v3115
        %v3117 = vsel %vm1023, %v3116, 0.0
        %3118 = vadd.xlane.f32.xlu0 %v3117
        %v3119 = vpop.xlane.xlu0 %3118
        %v3120 = vmul.f32 %v3119, %v1196
        %v3121 = vsub.f32 %v3116, %v3120
        %v3122 = vmul.f32 %v3121, %v3121
        %v3123 = vsel %vm1023, %v3122, 0.0
        %3124 = vadd.xlane.f32.xlu0 %v3123
        %v3125 = vpop.xlane.xlu0 %3124
        %v3126 = vmul.f32 %v3125, %v1196
        %v3127 = vadd.f32 %v3126, 1e-06
        %v3128 = vrsqrt.pop %v3127
        %v3129 = vmul.f32 %v3128, %v3127
        %v3130 = vmul.f32 %v3129, %v3128
        %v3131 = vmul.f32 0.5, %v3130
        %v3132 = vsub.f32 1.5, %v3131
        %v3133 = vmul.f32 %v3128, %v3132
        %vm3134 = vweird.f32 %v3127
        %vm3135 = vweird.f32 %v3128
        %vm3136 = vmor %vm3134, %vm3135
        %v3137 = vsel %vm3136, %v3128, %v3133
        %v3138 = vmul.f32 %v3121, %v3137
        %v3139 = vmul.f32 %v3138, %v1871
        %v3140 = vadd.f32 %v3139, %v1875
        %v3142 = vsel %vm1023, %v3140, 0
        %3144 = vmatpush.msra.mxu0 0.0
        %3145 = vmatpush.msra.mxu0 0.0
        %3146 = vmatpush.msra.mxu0 0.0
        %3147 = vmatpush.msra.mxu0 0.0
        %3148 = vmatpush.msra.mxu0 0.0
        %3149 = vmatpush.msra.mxu0 0.0
        %3150 = vmatpush.msra.mxu0 0.0
        %3151 = vmatpush.msra.mxu0 0.0
        %3152 = vmatpush.msra.mxu0 0.0
        %3153 = vmatpush.msra.mxu0 0.0
        %3154 = vmatpush.msra.mxu0 0.0
        %3155 = vmatpush.msra.mxu0 0.0
        %3156 = vmatpush.msra.mxu0 %v876
        %3157 = vmatpush.msra.mxu0 %v875
        %3158 = vmatpush.msra.mxu0 %v874
        %3159 = vmatpush.msra.mxu0 %v873
        %3160 = vmatmul.f32.gmra.mxu0 %v3142
        %v3161 = vpop.f32.mrf.mxu0
        %v3162 = vadd.f32 %v1882, %v3161
        %3163 = vdwg.mxu0
        %3164 = vmatpush.msra.mxu0 0.0
        %3165 = vmatpush.msra.mxu0 0.0
        %3166 = vmatpush.msra.mxu0 0.0
        %3167 = vmatpush.msra.mxu0 0.0
        %3168 = vmatpush.msra.mxu0 0.0
        %3169 = vmatpush.msra.mxu0 0.0
        %3170 = vmatpush.msra.mxu0 0.0
        %3171 = vmatpush.msra.mxu0 0.0
        %3172 = vmatpush.msra.mxu0 0.0
        %3173 = vmatpush.msra.mxu0 0.0
        %3174 = vmatpush.msra.mxu0 0.0
        %3175 = vmatpush.msra.mxu0 0.0
        %3176 = vmatpush.msra.mxu0 %v880
        %3177 = vmatpush.msra.mxu0 %v879
        %3178 = vmatpush.msra.mxu0 %v878
        %3179 = vmatpush.msra.mxu0 %v877
        %3180 = vmatmul.f32.gmra.mxu0 %v3142
        %v3181 = vpop.f32.mrf.mxu0
        %v3182 = vadd.f32 %v1883, %v3181
        %3183 = vdwg.mxu0
        %3184 = vmatpush.msra.mxu0 0.0
        %3185 = vmatpush.msra.mxu0 0.0
        %3186 = vmatpush.msra.mxu0 0.0
        %3187 = vmatpush.msra.mxu0 0.0
        %3188 = vmatpush.msra.mxu0 0.0
        %3189 = vmatpush.msra.mxu0 0.0
        %3190 = vmatpush.msra.mxu0 0.0
        %3191 = vmatpush.msra.mxu0 0.0
        %3192 = vmatpush.msra.mxu0 0.0
        %3193 = vmatpush.msra.mxu0 0.0
        %3194 = vmatpush.msra.mxu0 0.0
        %3195 = vmatpush.msra.mxu0 0.0
        %3196 = vmatpush.msra.mxu0 %v884
        %3197 = vmatpush.msra.mxu0 %v883
        %3198 = vmatpush.msra.mxu0 %v882
        %3199 = vmatpush.msra.mxu0 %v881
        %3200 = vmatmul.f32.gmra.mxu0 %v3142
        %v3201 = vpop.f32.mrf.mxu0
        %v3202 = vadd.f32 %v1884, %v3201
        %3203 = vdwg.mxu0
        %3204 = vmatpush.msra.mxu0 0.0
        %3205 = vmatpush.msra.mxu0 0.0
        %3206 = vmatpush.msra.mxu0 0.0
        %3207 = vmatpush.msra.mxu0 0.0
        %3208 = vmatpush.msra.mxu0 0.0
        %3209 = vmatpush.msra.mxu0 0.0
        %3210 = vmatpush.msra.mxu0 0.0
        %3211 = vmatpush.msra.mxu0 0.0
        %3212 = vmatpush.msra.mxu0 0.0
        %3213 = vmatpush.msra.mxu0 0.0
        %3214 = vmatpush.msra.mxu0 0.0
        %3215 = vmatpush.msra.mxu0 0.0
        %3216 = vmatpush.msra.mxu0 %v888
        %3217 = vmatpush.msra.mxu0 %v887
        %3218 = vmatpush.msra.mxu0 %v886
        %3219 = vmatpush.msra.mxu0 %v885
        %3220 = vmatmul.f32.gmra.mxu0 %v3142
        %v3221 = vpop.f32.mrf.mxu0
        %v3222 = vadd.f32 %v1885, %v3221
        %3223 = vdwg.mxu0
        %v3225 = vsel %vm1503, %v3162, 0
        %3227 = vmatpush.xpose.msra.mxu0 0.0
        %3228 = vmatpush.xpose.msra.mxu0 0.0
        %3229 = vmatpush.xpose.msra.mxu0 0.0
        %3230 = vmatpush.xpose.msra.mxu0 0.0
        %3231 = vmatpush.xpose.msra.mxu0 0.0
        %3232 = vmatpush.xpose.msra.mxu0 0.0
        %3233 = vmatpush.xpose.msra.mxu0 0.0
        %3234 = vmatpush.xpose.msra.mxu0 0.0
        %3235 = vmatpush.xpose.msra.mxu0 0.0
        %3236 = vmatpush.xpose.msra.mxu0 0.0
        %3237 = vmatpush.xpose.msra.mxu0 0.0
        %3238 = vmatpush.xpose.msra.mxu0 0.0
        %3239 = vmatpush.xpose.msra.mxu0 0.0
        %3240 = vmatpush.xpose.msra.mxu0 0.0
        %3241 = vmatpush.xpose.msra.mxu0 0.0
        %3242 = vmatpush.xpose.msra.mxu0 %v1980
        %3243 = vmatmul.f32.gmra.mxu0 %v3225
        %v3244 = vpop.f32.mrf.mxu0
        %v3245 = vadd.f32 %v1974, %v3244
        %3246 = vdwg.mxu0
        %v3248 = vsel %vm1503, %v3182, 0
        %3250 = vmatpush.xpose.msra.mxu0 0.0
        %3251 = vmatpush.xpose.msra.mxu0 0.0
        %3252 = vmatpush.xpose.msra.mxu0 0.0
        %3253 = vmatpush.xpose.msra.mxu0 0.0
        %3254 = vmatpush.xpose.msra.mxu0 0.0
        %3255 = vmatpush.xpose.msra.mxu0 0.0
        %3256 = vmatpush.xpose.msra.mxu0 0.0
        %3257 = vmatpush.xpose.msra.mxu0 0.0
        %3258 = vmatpush.xpose.msra.mxu0 0.0
        %3259 = vmatpush.xpose.msra.mxu0 0.0
        %3260 = vmatpush.xpose.msra.mxu0 0.0
        %3261 = vmatpush.xpose.msra.mxu0 0.0
        %3262 = vmatpush.xpose.msra.mxu0 0.0
        %3263 = vmatpush.xpose.msra.mxu0 0.0
        %3264 = vmatpush.xpose.msra.mxu0 0.0
        %3265 = vmatpush.xpose.msra.mxu0 %v2006
        %3266 = vmatmul.f32.gmra.mxu0 %v3248
        %v3267 = vpop.f32.mrf.mxu0
        %v3268 = vadd.f32 %v1974, %v3267
        %3269 = vdwg.mxu0
        %v3271 = vsel %vm1503, %v3202, 0
        %3273 = vmatpush.xpose.msra.mxu0 0.0
        %3274 = vmatpush.xpose.msra.mxu0 0.0
        %3275 = vmatpush.xpose.msra.mxu0 0.0
        %3276 = vmatpush.xpose.msra.mxu0 0.0
        %3277 = vmatpush.xpose.msra.mxu0 0.0
        %3278 = vmatpush.xpose.msra.mxu0 0.0
        %3279 = vmatpush.xpose.msra.mxu0 0.0
        %3280 = vmatpush.xpose.msra.mxu0 0.0
        %3281 = vmatpush.xpose.msra.mxu0 0.0
        %3282 = vmatpush.xpose.msra.mxu0 0.0
        %3283 = vmatpush.xpose.msra.mxu0 0.0
        %3284 = vmatpush.xpose.msra.mxu0 0.0
        %3285 = vmatpush.xpose.msra.mxu0 0.0
        %3286 = vmatpush.xpose.msra.mxu0 0.0
        %3287 = vmatpush.xpose.msra.mxu0 0.0
        %3288 = vmatpush.xpose.msra.mxu0 %v2032
        %3289 = vmatmul.f32.gmra.mxu0 %v3271
        %v3290 = vpop.f32.mrf.mxu0
        %v3291 = vadd.f32 %v1974, %v3290
        %3292 = vdwg.mxu0
        %v3294 = vsel %vm1503, %v3222, 0
        %3296 = vmatpush.xpose.msra.mxu0 0.0
        %3297 = vmatpush.xpose.msra.mxu0 0.0
        %3298 = vmatpush.xpose.msra.mxu0 0.0
        %3299 = vmatpush.xpose.msra.mxu0 0.0
        %3300 = vmatpush.xpose.msra.mxu0 0.0
        %3301 = vmatpush.xpose.msra.mxu0 0.0
        %3302 = vmatpush.xpose.msra.mxu0 0.0
        %3303 = vmatpush.xpose.msra.mxu0 0.0
        %3304 = vmatpush.xpose.msra.mxu0 0.0
        %3305 = vmatpush.xpose.msra.mxu0 0.0
        %3306 = vmatpush.xpose.msra.mxu0 0.0
        %3307 = vmatpush.xpose.msra.mxu0 0.0
        %3308 = vmatpush.xpose.msra.mxu0 0.0
        %3309 = vmatpush.xpose.msra.mxu0 0.0
        %3310 = vmatpush.xpose.msra.mxu0 0.0
        %3311 = vmatpush.xpose.msra.mxu0 %v2058
        %3312 = vmatmul.f32.gmra.mxu0 %v3294
        %v3313 = vpop.f32.mrf.mxu0
        %v3314 = vadd.f32 %v1974, %v3313
        %3315 = vdwg.mxu0
        %v3316 = vsel %vm1503, %v3245, -inf
        %3317 = vmax.xlane.f32.xlu0 %v3316
        %v3318 = vpop.xlane.xlu0 %3317
        %v3319 = vsel %vm1503, %v3268, -inf
        %3320 = vmax.xlane.f32.xlu0 %v3319
        %v3321 = vpop.xlane.xlu0 %3320
        %v3322 = vsel %vm1503, %v3291, -inf
        %3323 = vmax.xlane.f32.xlu0 %v3322
        %v3324 = vpop.xlane.xlu0 %3323
        %v3325 = vsel %vm1503, %v3314, -inf
        %3326 = vmax.xlane.f32.xlu0 %v3325
        %v3327 = vpop.xlane.xlu0 %3326
        %v3328 = vsub.f32 %v3245, %v3318
        %v3329 = vsub.f32 %v3268, %v3321
        %v3330 = vsub.f32 %v3291, %v3324
        %v3331 = vsub.f32 %v3314, %v3327
        %v3332 = vmul.f32 %v3328, 1.442695
        %v3333 = vpow.pop %v3332
        %v3334 = vmul.f32 %v3329, 1.442695
        %v3335 = vpow.pop %v3334
        %v3336 = vmul.f32 %v3330, 1.442695
        %v3337 = vpow.pop %v3336
        %v3338 = vmul.f32 %v3331, 1.442695
        %v3339 = vpow.pop %v3338
        %v3340 = vsel %vm1503, %v3333, 0.0
        %3341 = vadd.xlane.f32.xlu0 %v3340
        %v3342 = vpop.xlane.xlu0 %3341
        %v3343 = vsel %vm1503, %v3335, 0.0
        %3344 = vadd.xlane.f32.xlu0 %v3343
        %v3345 = vpop.xlane.xlu0 %3344
        %v3346 = vsel %vm1503, %v3337, 0.0
        %3347 = vadd.xlane.f32.xlu0 %v3346
        %v3348 = vpop.xlane.xlu0 %3347
        %v3349 = vsel %vm1503, %v3339, 0.0
        %3350 = vadd.xlane.f32.xlu0 %v3349
        %v3351 = vpop.xlane.xlu0 %3350
        %v3352 = vrcp.pop %v3342
        %v3353 = vrcp.pop %v3345
        %v3354 = vrcp.pop %v3348
        %v3355 = vrcp.pop %v3351
        %v3356 = vmul.f32 %v3333, %v3352
        %v3357 = vmul.f32 %v3335, %v3353
        %v3358 = vmul.f32 %v3337, %v3354
        %v3359 = vmul.f32 %v3339, %v3355
        %v3361 = vsel %vm1503, %v3356, 0
        %3363 = vmatpush.msra.mxu0 0.0
        %3364 = vmatpush.msra.mxu0 0.0
        %3365 = vmatpush.msra.mxu0 0.0
        %3366 = vmatpush.msra.mxu0 0.0
        %3367 = vmatpush.msra.mxu0 0.0
        %3368 = vmatpush.msra.mxu0 0.0
        %3369 = vmatpush.msra.mxu0 0.0
        %3370 = vmatpush.msra.mxu0 0.0
        %3371 = vmatpush.msra.mxu0 0.0
        %3372 = vmatpush.msra.mxu0 0.0
        %3373 = vmatpush.msra.mxu0 0.0
        %3374 = vmatpush.msra.mxu0 0.0
        %3375 = vmatpush.msra.mxu0 0.0
        %3376 = vmatpush.msra.mxu0 0.0
        %3377 = vmatpush.msra.mxu0 0.0
        %3378 = vmatpush.msra.mxu0 %v1125
        %3379 = vmatmul.f32.gmra.mxu0 %v3361
        %v3380 = vpop.f32.mrf.mxu0
        %v3381 = vadd.f32 0.0, %v3380
        %3382 = vdwg.mxu0
        %v3384 = vsel %vm1503, %v3357, 0
        %3386 = vmatpush.msra.mxu0 0.0
        %3387 = vmatpush.msra.mxu0 0.0
        %3388 = vmatpush.msra.mxu0 0.0
        %3389 = vmatpush.msra.mxu0 0.0
        %3390 = vmatpush.msra.mxu0 0.0
        %3391 = vmatpush.msra.mxu0 0.0
        %3392 = vmatpush.msra.mxu0 0.0
        %3393 = vmatpush.msra.mxu0 0.0
        %3394 = vmatpush.msra.mxu0 0.0
        %3395 = vmatpush.msra.mxu0 0.0
        %3396 = vmatpush.msra.mxu0 0.0
        %3397 = vmatpush.msra.mxu0 0.0
        %3398 = vmatpush.msra.mxu0 0.0
        %3399 = vmatpush.msra.mxu0 0.0
        %3400 = vmatpush.msra.mxu0 0.0
        %3401 = vmatpush.msra.mxu0 %v1145
        %3402 = vmatmul.f32.gmra.mxu0 %v3384
        %v3403 = vpop.f32.mrf.mxu0
        %v3404 = vadd.f32 0.0, %v3403
        %3405 = vdwg.mxu0
        %v3407 = vsel %vm1503, %v3358, 0
        %3409 = vmatpush.msra.mxu0 0.0
        %3410 = vmatpush.msra.mxu0 0.0
        %3411 = vmatpush.msra.mxu0 0.0
        %3412 = vmatpush.msra.mxu0 0.0
        %3413 = vmatpush.msra.mxu0 0.0
        %3414 = vmatpush.msra.mxu0 0.0
        %3415 = vmatpush.msra.mxu0 0.0
        %3416 = vmatpush.msra.mxu0 0.0
        %3417 = vmatpush.msra.mxu0 0.0
        %3418 = vmatpush.msra.mxu0 0.0
        %3419 = vmatpush.msra.mxu0 0.0
        %3420 = vmatpush.msra.mxu0 0.0
        %3421 = vmatpush.msra.mxu0 0.0
        %3422 = vmatpush.msra.mxu0 0.0
        %3423 = vmatpush.msra.mxu0 0.0
        %3424 = vmatpush.msra.mxu0 %v1165
        %3425 = vmatmul.f32.gmra.mxu0 %v3407
        %v3426 = vpop.f32.mrf.mxu0
        %v3427 = vadd.f32 0.0, %v3426
        %3428 = vdwg.mxu0
        %v3430 = vsel %vm1503, %v3359, 0
        %3432 = vmatpush.msra.mxu0 0.0
        %3433 = vmatpush.msra.mxu0 0.0
        %3434 = vmatpush.msra.mxu0 0.0
        %3435 = vmatpush.msra.mxu0 0.0
        %3436 = vmatpush.msra.mxu0 0.0
        %3437 = vmatpush.msra.mxu0 0.0
        %3438 = vmatpush.msra.mxu0 0.0
        %3439 = vmatpush.msra.mxu0 0.0
        %3440 = vmatpush.msra.mxu0 0.0
        %3441 = vmatpush.msra.mxu0 0.0
        %3442 = vmatpush.msra.mxu0 0.0
        %3443 = vmatpush.msra.mxu0 0.0
        %3444 = vmatpush.msra.mxu0 0.0
        %3445 = vmatpush.msra.mxu0 0.0
        %3446 = vmatpush.msra.mxu0 0.0
        %3447 = vmatpush.msra.mxu0 %v1185
        %3448 = vmatmul.f32.gmra.mxu0 %v3430
        %v3449 = vpop.f32.mrf.mxu0
        %v3450 = vadd.f32 0.0, %v3449
        %3451 = vdwg.mxu0
        %v3453 = vsel %vm1503, %v3381, 0
        %3455 = vmatpush.msra.mxu0 0.0
        %3456 = vmatpush.msra.mxu0 0.0
        %3457 = vmatpush.msra.mxu0 0.0
        %3458 = vmatpush.msra.mxu0 0.0
        %3459 = vmatpush.msra.mxu0 0.0
        %3460 = vmatpush.msra.mxu0 0.0
        %3461 = vmatpush.msra.mxu0 0.0
        %3462 = vmatpush.msra.mxu0 0.0
        %3463 = vmatpush.msra.mxu0 0.0
        %3464 = vmatpush.msra.mxu0 0.0
        %3465 = vmatpush.msra.mxu0 0.0
        %3466 = vmatpush.msra.mxu0 0.0
        %3467 = vmatpush.msra.mxu0 0.0
        %3468 = vmatpush.msra.mxu0 0.0
        %3469 = vmatpush.msra.mxu0 0.0
        %3470 = vmatpush.msra.mxu0 %v933
        %3471 = vmatmul.f32.gmra.mxu0 %v3453
        %v3472 = vpop.f32.mrf.mxu0
        %v3473 = vadd.f32 0.0, %v3472
        %3474 = vdwg.mxu0
        %v3476 = vsel %vm1503, %v3404, 0
        %3478 = vmatpush.msra.mxu0 0.0
        %3479 = vmatpush.msra.mxu0 0.0
        %3480 = vmatpush.msra.mxu0 0.0
        %3481 = vmatpush.msra.mxu0 0.0
        %3482 = vmatpush.msra.mxu0 0.0
        %3483 = vmatpush.msra.mxu0 0.0
        %3484 = vmatpush.msra.mxu0 0.0
        %3485 = vmatpush.msra.mxu0 0.0
        %3486 = vmatpush.msra.mxu0 0.0
        %3487 = vmatpush.msra.mxu0 0.0
        %3488 = vmatpush.msra.mxu0 0.0
        %3489 = vmatpush.msra.mxu0 0.0
        %3490 = vmatpush.msra.mxu0 0.0
        %3491 = vmatpush.msra.mxu0 0.0
        %3492 = vmatpush.msra.mxu0 0.0
        %3493 = vmatpush.msra.mxu0 %v934
        %3494 = vmatmul.f32.gmra.mxu0 %v3476
        %v3495 = vpop.f32.mrf.mxu0
        %v3496 = vadd.f32 0.0, %v3495
        %3497 = vdwg.mxu0
        %v3499 = vsel %vm1503, %v3427, 0
        %3501 = vmatpush.msra.mxu0 0.0
        %3502 = vmatpush.msra.mxu0 0.0
        %3503 = vmatpush.msra.mxu0 0.0
        %3504 = vmatpush.msra.mxu0 0.0
        %3505 = vmatpush.msra.mxu0 0.0
        %3506 = vmatpush.msra.mxu0 0.0
        %3507 = vmatpush.msra.mxu0 0.0
        %3508 = vmatpush.msra.mxu0 0.0
        %3509 = vmatpush.msra.mxu0 0.0
        %3510 = vmatpush.msra.mxu0 0.0
        %3511 = vmatpush.msra.mxu0 0.0
        %3512 = vmatpush.msra.mxu0 0.0
        %3513 = vmatpush.msra.mxu0 0.0
        %3514 = vmatpush.msra.mxu0 0.0
        %3515 = vmatpush.msra.mxu0 0.0
        %3516 = vmatpush.msra.mxu0 %v935
        %3517 = vmatmul.f32.gmra.mxu0 %v3499
        %v3518 = vpop.f32.mrf.mxu0
        %v3519 = vadd.f32 0.0, %v3518
        %3520 = vdwg.mxu0
        %v3522 = vsel %vm1503, %v3450, 0
        %3524 = vmatpush.msra.mxu0 0.0
        %3525 = vmatpush.msra.mxu0 0.0
        %3526 = vmatpush.msra.mxu0 0.0
        %3527 = vmatpush.msra.mxu0 0.0
        %3528 = vmatpush.msra.mxu0 0.0
        %3529 = vmatpush.msra.mxu0 0.0
        %3530 = vmatpush.msra.mxu0 0.0
        %3531 = vmatpush.msra.mxu0 0.0
        %3532 = vmatpush.msra.mxu0 0.0
        %3533 = vmatpush.msra.mxu0 0.0
        %3534 = vmatpush.msra.mxu0 0.0
        %3535 = vmatpush.msra.mxu0 0.0
        %3536 = vmatpush.msra.mxu0 0.0
        %3537 = vmatpush.msra.mxu0 0.0
        %3538 = vmatpush.msra.mxu0 0.0
        %3539 = vmatpush.msra.mxu0 %v936
        %3540 = vmatmul.f32.gmra.mxu0 %v3522
        %v3541 = vpop.f32.mrf.mxu0
        %v3542 = vadd.f32 0.0, %v3541
        %3543 = vdwg.mxu0
        %v3544 = vsel %vm1023, %v3473, 0.0
        %v3545 = vsel %vm1023, %v3496, 0.0
        %v3546 = vadd.f32 %v3544, %v3545
        %v3547 = vsel %vm1023, %v3519, 0.0
        %v3548 = vadd.f32 %v3546, %v3547
        %v3549 = vsel %vm1023, %v3542, 0.0
        %v3550 = vadd.f32 %v3548, %v3549
        %v3551 = vadd.f32 %v3550, %v2316
        %v3552 = vadd.f32 %v3116, %v3551
        %v3553 = vsel %vm1023, %v3552, 0.0
        %3554 = vadd.xlane.f32.xlu0 %v3553
        %v3555 = vpop.xlane.xlu0 %3554
        %v3556 = vmul.f32 %v3555, %v1196
        %v3557 = vsub.f32 %v3552, %v3556
        %v3558 = vmul.f32 %v3557, %v3557
        %v3559 = vsel %vm1023, %v3558, 0.0
        %3560 = vadd.xlane.f32.xlu0 %v3559
        %v3561 = vpop.xlane.xlu0 %3560
        %v3562 = vmul.f32 %v3561, %v1196
        %v3563 = vadd.f32 %v3562, 1e-06
        %v3564 = vrsqrt.pop %v3563
        %v3565 = vmul.f32 %v3564, %v3563
        %v3566 = vmul.f32 %v3565, %v3564
        %v3567 = vmul.f32 0.5, %v3566
        %v3568 = vsub.f32 1.5, %v3567
        %v3569 = vmul.f32 %v3564, %v3568
        %vm3570 = vweird.f32 %v3563
        %vm3571 = vweird.f32 %v3564
        %vm3572 = vmor %vm3570, %vm3571
        %v3573 = vsel %vm3572, %v3564, %v3569
        %v3574 = vmul.f32 %v3557, %v3573
        %v3575 = vmul.f32 %v3574, %v2343
        %v3576 = vadd.f32 %v3575, %v2347
        %v3577 = vrot.slane %v3576, 7
        %v3578 = vmul.f32 %v3577, %v995
        %v3579 = vrot.slane %v3576, 1
        %v3580 = vmul.f32 %v3579, %v998
        %v3582 = vsel %vm1023, %v3576, 0
        %3584 = vmatpush.msra.mxu0 0.0
        %3585 = vmatpush.msra.mxu0 0.0
        %3586 = vmatpush.msra.mxu0 0.0
        %3587 = vmatpush.msra.mxu0 0.0
        %3588 = vmatpush.msra.mxu0 0.0
        %3589 = vmatpush.msra.mxu0 0.0
        %3590 = vmatpush.msra.mxu0 0.0
        %3591 = vmatpush.msra.mxu0 0.0
        %3592 = vmatpush.msra.mxu0 0.0
        %3593 = vmatpush.msra.mxu0 0.0
        %3594 = vmatpush.msra.mxu0 0.0
        %3595 = vmatpush.msra.mxu0 0.0
        %3596 = vmatpush.msra.mxu0 %v946
        %3597 = vmatpush.msra.mxu0 %v945
        %3598 = vmatpush.msra.mxu0 %v944
        %3599 = vmatpush.msra.mxu0 %v943
        %3600 = vmatmul.f32.gmra.mxu0 %v3582
        %v3601 = vpop.f32.mrf.mxu0
        %v3602 = vadd.f32 0.0, %v3601
        %3603 = vdwg.mxu0
        %v3605 = vsel %vm1023, %v3578, 0
        %3607 = vmatpush.msra.mxu0 0.0
        %3608 = vmatpush.msra.mxu0 0.0
        %3609 = vmatpush.msra.mxu0 0.0
        %3610 = vmatpush.msra.mxu0 0.0
        %3611 = vmatpush.msra.mxu0 0.0
        %3612 = vmatpush.msra.mxu0 0.0
        %3613 = vmatpush.msra.mxu0 0.0
        %3614 = vmatpush.msra.mxu0 0.0
        %3615 = vmatpush.msra.mxu0 0.0
        %3616 = vmatpush.msra.mxu0 0.0
        %3617 = vmatpush.msra.mxu0 0.0
        %3618 = vmatpush.msra.mxu0 0.0
        %3619 = vmatpush.msra.mxu0 %v941
        %3620 = vmatpush.msra.mxu0 %v940
        %3621 = vmatpush.msra.mxu0 %v939
        %3622 = vmatpush.msra.mxu0 %v938
        %3623 = vmatmul.f32.gmra.mxu0 %v3605
        %v3624 = vpop.f32.mrf.mxu0
        %v3625 = vadd.f32 %v3602, %v3624
        %3626 = vdwg.mxu0
        %v3628 = vsel %vm1023, %v3580, 0
        %3630 = vmatpush.msra.mxu0 0.0
        %3631 = vmatpush.msra.mxu0 0.0
        %3632 = vmatpush.msra.mxu0 0.0
        %3633 = vmatpush.msra.mxu0 0.0
        %3634 = vmatpush.msra.mxu0 0.0
        %3635 = vmatpush.msra.mxu0 0.0
        %3636 = vmatpush.msra.mxu0 0.0
        %3637 = vmatpush.msra.mxu0 0.0
        %3638 = vmatpush.msra.mxu0 0.0
        %3639 = vmatpush.msra.mxu0 0.0
        %3640 = vmatpush.msra.mxu0 0.0
        %3641 = vmatpush.msra.mxu0 0.0
        %3642 = vmatpush.msra.mxu0 %v951
        %3643 = vmatpush.msra.mxu0 %v950
        %3644 = vmatpush.msra.mxu0 %v949
        %3645 = vmatpush.msra.mxu0 %v948
        %3646 = vmatmul.f32.gmra.mxu0 %v3628
        %v3647 = vpop.f32.mrf.mxu0
        %v3648 = vadd.f32 0.0, %v3647
        %3649 = vdwg.mxu0
        %v3650 = vadd.f32 %v3625, %v3648
        %v3651 = vadd.f32 %v3650, %v2425
        %v3652 = vmax.f32 %v3651, 0.0
        %v3653 = vrot.slane %v3652, 7
        %v3654 = vmul.f32 %v3653, %v995
        %v3655 = vrot.slane %v3652, 1
        %v3656 = vmul.f32 %v3655, %v998
        %v3658 = vsel %vm2433, %v3652, 0
        %3660 = vmatpush.msra.mxu0 0.0
        %3661 = vmatpush.msra.mxu0 0.0
        %3662 = vmatpush.msra.mxu0 0.0
        %3663 = vmatpush.msra.mxu0 0.0
        %3664 = vmatpush.msra.mxu0 0.0
        %3665 = vmatpush.msra.mxu0 0.0
        %3666 = vmatpush.msra.mxu0 0.0
        %3667 = vmatpush.msra.mxu0 0.0
        %3668 = vmatpush.msra.mxu0 %v968
        %3669 = vmatpush.msra.mxu0 %v967
        %3670 = vmatpush.msra.mxu0 %v966
        %3671 = vmatpush.msra.mxu0 %v965
        %3672 = vmatpush.msra.mxu0 %v964
        %3673 = vmatpush.msra.mxu0 %v963
        %3674 = vmatpush.msra.mxu0 %v962
        %3675 = vmatpush.msra.mxu0 %v961
        %3676 = vmatmul.f32.gmra.mxu0 %v3658
        %v3677 = vpop.f32.mrf.mxu0
        %v3678 = vadd.f32 0.0, %v3677
        %3679 = vdwg.mxu0
        %v3681 = vsel %vm2433, %v3654, 0
        %3683 = vmatpush.msra.mxu0 0.0
        %3684 = vmatpush.msra.mxu0 0.0
        %3685 = vmatpush.msra.mxu0 0.0
        %3686 = vmatpush.msra.mxu0 0.0
        %3687 = vmatpush.msra.mxu0 0.0
        %3688 = vmatpush.msra.mxu0 0.0
        %3689 = vmatpush.msra.mxu0 0.0
        %3690 = vmatpush.msra.mxu0 0.0
        %3691 = vmatpush.msra.mxu0 %v959
        %3692 = vmatpush.msra.mxu0 %v958
        %3693 = vmatpush.msra.mxu0 %v957
        %3694 = vmatpush.msra.mxu0 %v956
        %3695 = vmatpush.msra.mxu0 %v955
        %3696 = vmatpush.msra.mxu0 %v954
        %3697 = vmatpush.msra.mxu0 %v953
        %3698 = vmatpush.msra.mxu0 %v952
        %3699 = vmatmul.f32.gmra.mxu0 %v3681
        %v3700 = vpop.f32.mrf.mxu0
        %v3701 = vadd.f32 %v3678, %v3700
        %3702 = vdwg.mxu0
        %v3704 = vsel %vm2433, %v3656, 0
        %3706 = vmatpush.msra.mxu0 0.0
        %3707 = vmatpush.msra.mxu0 0.0
        %3708 = vmatpush.msra.mxu0 0.0
        %3709 = vmatpush.msra.mxu0 0.0
        %3710 = vmatpush.msra.mxu0 0.0
        %3711 = vmatpush.msra.mxu0 0.0
        %3712 = vmatpush.msra.mxu0 0.0
        %3713 = vmatpush.msra.mxu0 0.0
        %3714 = vmatpush.msra.mxu0 %v977
        %3715 = vmatpush.msra.mxu0 %v976
        %3716 = vmatpush.msra.mxu0 %v975
        %3717 = vmatpush.msra.mxu0 %v974
        %3718 = vmatpush.msra.mxu0 %v973
        %3719 = vmatpush.msra.mxu0 %v972
        %3720 = vmatpush.msra.mxu0 %v971
        %3721 = vmatpush.msra.mxu0 %v970
        %3722 = vmatmul.f32.gmra.mxu0 %v3704
        %v3723 = vpop.f32.mrf.mxu0
        %v3724 = vadd.f32 0.0, %v3723
        %3725 = vdwg.mxu0
        %v3726 = vadd.f32 %v3701, %v3724
        %v3727 = vadd.f32 %v3726, %v2505
        %v3728 = vadd.f32 %v3552, %v3727
        %v3729 = vsel %vm1023, %v3728, 0.0
        %3730 = vadd.xlane.f32.xlu0 %v3729
        %v3731 = vpop.xlane.xlu0 %3730
        %v3732 = vmul.f32 %v3731, %v1196
        %v3733 = vsub.f32 %v3728, %v3732
        %v3734 = vmul.f32 %v3733, %v3733
        %v3735 = vsel %vm1023, %v3734, 0.0
        %3736 = vadd.xlane.f32.xlu0 %v3735
        %v3737 = vpop.xlane.xlu0 %3736
        %v3738 = vmul.f32 %v3737, %v1196
        %v3739 = vadd.f32 %v3738, 1e-06
        %v3740 = vrsqrt.pop %v3739
        %v3741 = vmul.f32 %v3740, %v3739
        %v3742 = vmul.f32 %v3741, %v3740
        %v3743 = vmul.f32 0.5, %v3742
        %v3744 = vsub.f32 1.5, %v3743
        %v3745 = vmul.f32 %v3740, %v3744
        %vm3746 = vweird.f32 %v3739
        %vm3747 = vweird.f32 %v3740
        %vm3748 = vmor %vm3746, %vm3747
        %v3749 = vsel %vm3748, %v3740, %v3745
        %v3750 = vmul.f32 %v3733, %v3749
        %v3752 = vperm.slane %v980, 0
        %v3754 = vmul.f32 %v3750, %v3752
        %v3756 = vperm.slane %v981, 0
        %v3758 = vadd.f32 %v3754, %v3756
        %3759 = vst.msk [vmem:[%s788] sm:$0xff] %vm1023, %v3758
        %s3760 = sand.u32 %s596, 1
        %s3761 = scalar_lea.sflag [#allocation5], %s3760
        %s3762 = sand.u32 %s596, 1
        %s3763 = smul.addr %s3762, 8
        %s3764 = scalar_lea.vmem [#allocation4], %s3763
        // Predicated region
        $region121: #{decoder_forward.1} parent=119 // pred_check
          %p3765 = pneg %p606
        $region122: #{decoder_forward.1} parent=119 // pred_check_branch
          %3767 = sbr.rel (%p3765) target = $region124
        $region123: #{decoder_forward.1} parent=119 // pred_region
          %3769 = vsyncadd %s3761, 0
          %s3770 = smul.addr %s48, 8
          %s3771 = scalar_lea.hbm %s26, %s3770
          %s3773 = sshll.u32 %s3764, 4
          %s3774 = int_to_ptr.vmem [resolvable:$true] %s3773
          %s3775 = sshll.u32 %s3771, 4
          %s3776 = int_to_ptr.hbm [resolvable:$true] %s3775
          %3778 = dma.vmem_to_hbm [thread:$0]  %s3774, 128, %s3776, %s3761
        $region124: #{decoder_forward.1} parent=119 // pred_fallthru
          _
      $region120: #{decoder_forward.1} parent=5 // pred_fallthru
        _
      %p3779 = scmp.le.s32.totalorder 2, %s43
      // Predicated region
      $region125: #{decoder_forward.1} parent=5 // pred_check
        %p3780 = pneg %p3779
      $region126: #{decoder_forward.1} parent=5 // pred_check_branch
        %3782 = sbr.rel (%p3780) target = $region128
      $region127: #{decoder_forward.1} parent=5 // pred_region
        %s3783 = ssub.s32 %s43, 2
        // Predicated region
        $region129: #{decoder_forward.1} parent=127 // pred_check
          %p3784 = pneg %p612
        $region130: #{decoder_forward.1} parent=127 // pred_check_branch
          %3786 = sbr.rel (%p3784) target = $region132
        $region131: #{decoder_forward.1} parent=127 // pred_region
          %s3787 = sand.u32 %s597, 1
          %s3788 = scalar_lea.sflag [#allocation5], %s3787
          %s3789 = sand.u32 %s597, 1
          %s3790 = smul.addr %s3789, 8
          %s3791 = scalar_lea.vmem [#allocation4], %s3790
          %3793 = dma.done %s3788, 128
        $region132: #{decoder_forward.1} parent=127 // pred_fallthru
          _
      $region128: #{decoder_forward.1} parent=5 // pred_fallthru
        _
    $region6: #{decoder_forward.1} parent=1 // loop_footer
      %s47 = sadd.s32 1, %s43
    $region7: #{decoder_forward.1} parent=1 // loop_footer_branch
      %42 = sbr.rel target = $region3
    $region8: #{decoder_forward.1} parent=1 // loop_exit
      _
    %3794 = vsyncpa [#allocation5], 1
    %s3795 = scalar_lea.sflag [#allocation5], 1
    %3796 = vsyncpa %s3795, 1

</llo_original>
